<compile_context>
chip_gen: v7x
topology: tpu7x:2x2x1
jax: 0.10.0
libtpu: 0.0.40
codegen_flags: <defaults>
</compile_context>

<pallas_src>
import numpy as np

import jax
import jax.numpy as jnp
from jax.experimental import pallas as pl
from jax.experimental.pallas import tpu as pltpu


def _ceil_to(x, m):
    return -(-int(x) // m) * m


# ---------------------------------------------------------------------------
# Kernel builder (everything static is closed over)
# ---------------------------------------------------------------------------
def _build_kernel(w_off, sel_off, b_cols, inv_l4):
    BF, F32 = jnp.bfloat16, jnp.float32

    def kernel(x_ref, r_ref, w_ref, b_ref, s_ref, out_ref):
        def dot(a, b):
            return jnp.dot(a, b, preferred_element_type=F32)

        def W(name):                       # tile-aligned weight-slab slice
            r0, ph, pw = w_off[name]
            return w_ref[r0:r0 + ph, 0:pw]

        def S(name):                       # tile-aligned selection-slab slice
            r0, ph, pw = sel_off[name]
            return s_ref[r0:r0 + ph, 0:pw]

        def bias(i):                       # 128-lane-aligned bias row
            return b_ref[i:i + 1, 0:b_cols[i]]

        def conv_relu(h_bf, lvl, wname, b_idx):
            # Conv1d(kernel=3, padding=1) + ReLU over stacked sequences.
            # Precomputed shift matrices give the +/-1 taps with sequence
            # boundary zero padding already folded in.
            h_m1 = dot(S("d" + lvl), h_bf).astype(BF)   # row t <- h[t-1]
            h_p1 = dot(S("u" + lvl), h_bf).astype(BF)   # row t <- h[t+1]
            y = (dot(h_m1, W(wname + "0"))
                 + dot(h_bf, W(wname + "1"))
                 + dot(h_p1, W(wname + "2"))
                 + bias(b_idx))
            return jnp.maximum(y, 0.0)                  # f32

        def maxpool(h_f32, lvl):
            # MaxPool1d(2): precomputed even/odd compaction + elementwise max.
            h_bf = h_f32.astype(BF)
            return jnp.maximum(dot(S("e" + lvl), h_bf),
                               dot(S("o" + lvl), h_bf))

        # ---- conv tower ---------------------------------------------------
        x = x_ref[...]                                  # (P1, Cgp) bf16
        h = conv_relu(x, "1", "c1", 0)                  # (P1, 128)
        h = maxpool(h, "1")                             # (P2, 128)
        h = conv_relu(h.astype(BF), "2", "c2", 1)       # (P2, 128)
        h = maxpool(h, "2")                             # (P4, 128)
        h = conv_relu(h.astype(BF), "3", "c3", 2)       # (P4, 256)

        # AdaptiveAvgPool1d(1): exact 0/1 per-sequence block sum, f32 scale.
        conv_feat = dot(S("avg"), h.astype(BF)) * inv_l4     # (Bp, 256) f32

        # ---- regional MLP ---------------------------------------------------
        r = r_ref[...]                                  # (Bp, Crp) bf16
        r = jnp.maximum(dot(r, W("r1")) + bias(3), 0.0)
        r = jnp.maximum(dot(r.astype(BF), W("r2")) + bias(4), 0.0)

        # ---- output head ----------------------------------------------------
        # concat([conv_feat, r]) @ W1 == conv_feat @ W1a + r @ W1b.
        z = (dot(conv_feat.astype(BF), W("o1a"))
             + dot(r.astype(BF), W("o1b")) + bias(5))
        z = jnp.maximum(z, 0.0)
        # TODO(synk): nn.Dropout(0.2) layers are eval-mode identities; no RNG.
        z = jnp.maximum(dot(z.astype(BF), W("o2")) + bias(6), 0.0)
        z = dot(z.astype(BF), W("o3")) + bias(7)
        out_ref[...] = jax.nn.sigmoid(z)                # (Bp, out_lanes) f32

    return kernel


# ---------------------------------------------------------------------------
# One-time parameter packing: PyTorch layouts -> two tile-aligned slabs
# ---------------------------------------------------------------------------
def pack_params(params):
    out_dim = int(params["o3_w"].shape[0])
    Cg = int(params["c1_w"].shape[1])
    Cr = int(params["r1_w"].shape[1])
    Cgp, Crp = _ceil_to(Cg, 16), _ceil_to(Cr, 16)
    out_lanes = _ceil_to(out_dim, 128)

    c1o = int(params["c1_w"].shape[0])
    c2o = int(params["c2_w"].shape[0])
    c3o = int(params["c3_w"].shape[0])          # conv feature channels (256)
    r1o = int(params["r1_w"].shape[0])
    r2o = int(params["r2_w"].shape[0])
    o1o = int(params["o1_w"].shape[0])
    o2o = int(params["o2_w"].shape[0])
    P = lambda n: _ceil_to(n, 128)

    def tap(w, k):                              # (Cout, Cin, 3) -> (Cin, Cout)
        return np.asarray(w)[:, :, k].T

    def lin(w):                                 # (out, in) -> (in, out)
        return np.asarray(w).T

    o1 = np.asarray(params["o1_w"])             # (128, c3o + r2o)

    # (name, matrix, padded_rows, padded_cols).  Padded rows always equal the
    # (padded) lane width of the activation that feeds the matmul, so every
    # in-kernel slice is full-tile.
    mats = [
        ("c10", tap(params["c1_w"], 0), Cgp, P(c1o)),
        ("c11", tap(params["c1_w"], 1), Cgp, P(c1o)),
        ("c12", tap(params["c1_w"], 2), Cgp, P(c1o)),
        ("c20", tap(params["c2_w"], 0), P(c1o), P(c2o)),
        ("c21", tap(params["c2_w"], 1), P(c1o), P(c2o)),
        ("c22", tap(params["c2_w"], 2), P(c1o), P(c2o)),
        ("c30", tap(params["c3_w"], 0), P(c2o), P(c3o)),
        ("c31", tap(params["c3_w"], 1), P(c2o), P(c3o)),
        ("c32", tap(params["c3_w"], 2), P(c2o), P(c3o)),
        ("r1", lin(params["r1_w"]), Crp, P(r1o)),
        ("r2", lin(params["r2_w"]), P(r1o), P(r2o)),
        ("o1a", o1[:, :c3o].T, P(c3o), P(o1o)),
        ("o1b", o1[:, c3o:].T, P(r2o), P(o1o)),
        ("o2", lin(params["o2_w"]), P(o1o), P(o2o)),
        ("o3", lin(params["o3_w"]), P(o2o), out_lanes),
    ]
    lane_w = max(pw for _, _, _, pw in mats)
    total_rows = sum(ph for _, _, ph, _ in mats)
    slab = np.zeros((total_rows, lane_w), np.float32)
    offsets, row = {}, 0
    for name, m, ph, pw in mats:
        h, w = m.shape
        assert h <= ph and w <= pw
        slab[row:row + h, :w] = m
        offsets[name] = (row, ph, pw)
        row += ph
    w_slab = jnp.asarray(slab, jnp.bfloat16)          # single bf16 weight slab

    bias_names = ["c1_b", "c2_b", "c3_b", "r1_b", "r2_b", "o1_b", "o2_b", "o3_b"]
    b_np = np.zeros((8, lane_w), np.float32)
    for i, nm in enumerate(bias_names):
        v = np.asarray(params[nm], np.float32)
        b_np[i, :v.shape[0]] = v
    b_slab = jnp.asarray(b_np)                         # one f32 row per bias

    b_cols = [P(c1o), P(c2o), P(c3o), P(r1o), P(r2o), P(o1o), P(o2o), out_lanes]
    meta = dict(w_offsets=offsets, b_cols=b_cols, out_dim=out_dim,
                out_lanes=out_lanes, Cg=Cg, Cr=Cr, Cgp=Cgp, Crp=Crp)
    return {"w_slab": w_slab, "b_slab": b_slab, "meta": meta}


# ---------------------------------------------------------------------------
# Host-precomputed 0/1 selection matrices (shift / pool / avg) for one tile
# ---------------------------------------------------------------------------
def _build_sel_slab(L, B_tile, P1, P2, P4, Bp):
    M = B_tile * L
    M2, M4 = M // 2, M // 4
    L4 = L // 4

    def shift_mats(m, ln):
        d = np.zeros((m, m), np.float32)
        u = np.zeros((m, m), np.float32)
        for i in range(m):
            if i % ln != 0:
                d[i, i - 1] = 1.0          # row i <- row i-1 (same sequence)
            if i % ln != ln - 1:
                u[i, i + 1] = 1.0          # row i <- row i+1 (same sequence)
        return d, u

    def pool_mats(m):
        e = np.zeros((m // 2, m), np.float32)
        o = np.zeros((m // 2, m), np.float32)
        for k in range(m // 2):
            e[k, 2 * k] = 1.0
            o[k, 2 * k + 1] = 1.0
        return e, o

    d1, u1 = shift_mats(M, L)
    e1, o1 = pool_mats(M)
    d2, u2 = shift_mats(M2, L // 2)
    e2, o2 = pool_mats(M2)
    d3, u3 = shift_mats(M4, L4)
    avg = np.zeros((B_tile, M4), np.float32)
    for b in range(B_tile):
        avg[b, b * L4:(b + 1) * L4] = 1.0

    blocks = [("d1", d1, P1, P1), ("u1", u1, P1, P1),
              ("e1", e1, P2, P1), ("o1", o1, P2, P1),
              ("d2", d2, P2, P2), ("u2", u2, P2, P2),
              ("e2", e2, P4, P2), ("o2", o2, P4, P2),
              ("d3", d3, P4, P4), ("u3", u3, P4, P4),
              ("avg", avg, Bp, P4)]
    lane_w = P1
    total = sum(ph for _, _, ph, _ in blocks)
    slab = np.zeros((total, lane_w), np.float32)
    off, row = {}, 0
    for name, m, ph, pw in blocks:
        h, w = m.shape
        assert h <= ph and w <= pw
        slab[row:row + h, :w] = m
        off[name] = (row, ph, pw)
        row += ph
    return jnp.asarray(slab, jnp.bfloat16), off


# ---------------------------------------------------------------------------
# Generation-aware batch tile selection
# ---------------------------------------------------------------------------
def _pick_batch_tile(B):
    """v5e (128x128 MXU): ~8 sequences/step; v6e/v7x (256-row MXU): ~20.
    On v7x, split small batches into >= 2 grid steps so the "parallel" grid
    axis can shard across both TensorCores."""
    kind = ""
    try:
        kind = jax.devices()[0].device_kind.lower()
    except Exception:
        pass
    if "v5" in kind:
        cap, two_core = 8, False
    elif "v6" in kind:
        cap, two_core = 20, False
    else:                                   # v7x / unknown future chips
        cap, two_core = 20, ("7" in kind)
    if two_core and B >= 2:
        return max(1, min(cap, -(-B // 2)))
    return max(1, min(cap, B))


# ---------------------------------------------------------------------------
# Advisory cost estimate (per-step padded matmul shapes)
# ---------------------------------------------------------------------------
def _cost_estimate(n_blocks, P1, P2, P4, Bp, Cgp, Crp, out_lanes,
                   arrays, out_bytes):
    shapes = ([(P1, P1, Cgp)] * 2 + [(P1, Cgp, 128)] * 3
              + [(P2, P1, 128)] * 2 + [(P2, P2, 128)] * 2 + [(P2, 128, 128)] * 3
              + [(P4, P2, 128)] * 2 + [(P4, P4, 128)] * 2 + [(P4, 128, 256)] * 3
              + [(Bp, P4, 256), (Bp, Crp, 128), (Bp, 128, 128),
                 (Bp, 256, 128), (Bp, 128, 128), (Bp, 128, 128),
                 (Bp, 128, out_lanes)])
    flops = 2 * sum(m * k * n for m, k, n in shapes) * n_blocks
    bytes_accessed = sum(int(a.size) * a.dtype.itemsize for a in arrays) + out_bytes
    return pl.CostEstimate(flops=int(flops),
                           transcendentals=int(n_blocks * Bp * out_lanes),
                           bytes_accessed=int(bytes_accessed))


# ---------------------------------------------------------------------------
# Forward wrapper
# ---------------------------------------------------------------------------
def cnn_climate_predictor(packed, global_sequence, regional_features):
    meta = packed["meta"]
    w_slab, b_slab = packed["w_slab"], packed["b_slab"]
    Cg, Cr = meta["Cg"], meta["Cr"]
    Cgp, Crp = meta["Cgp"], meta["Crp"]
    out_dim, out_lanes = meta["out_dim"], meta["out_lanes"]

    x = jnp.asarray(global_sequence, jnp.float32)
    r = jnp.asarray(regional_features, jnp.float32)
    B, L, _ = x.shape
    # Two MaxPool1d(2) stages; the stacked-row pooling assumes L % 4 == 0
    # (true for the module default sequence_length=12).
    assert L % 4 == 0, "kernel assumes sequence_length % 4 == 0"

    B_tile = _pick_batch_tile(B)
    n_blocks = -(-B // B_tile)
    B_pad = n_blocks * B_tile
    if B_pad != B:
        x = jnp.concatenate([x, jnp.zeros((B_pad - B, L, Cg), x.dtype)], axis=0)
        r = jnp.concatenate([r, jnp.zeros((B_pad - B, Cr), r.dtype)], axis=0)

    # Padded per-level row counts (multiples of 128 so every selection-slab
    # slice is tile aligned); Bp = padded head-row count (multiple of 16).
    M = B_tile * L
    P1 = _ceil_to(M, 128)
    P2 = _ceil_to(M // 2, 128)
    P4 = _ceil_to(M // 4, 128)
    Bp = _ceil_to(B_tile, 16)

    # Stacked, zero-padded, bf16 inputs (all host/trace-time work).
    xb = x.reshape(n_blocks, M, Cg).astype(jnp.bfloat16)
    x_stk = jnp.zeros((n_blocks, P1, Cgp), jnp.bfloat16).at[:, :M, :Cg].set(xb)
    x_stk = x_stk.reshape(n_blocks * P1, Cgp)

    rb = r.reshape(n_blocks, B_tile, Cr).astype(jnp.bfloat16)
    r_p = jnp.zeros((n_blocks, Bp, Crp), jnp.bfloat16).at[:, :B_tile, :Cr].set(rb)

    sel_slab, sel_off = _build_sel_slab(L, B_tile, P1, P2, P4, Bp)

    kernel = _build_kernel(meta["w_offsets"], sel_off, meta["b_cols"],
                           1.0 / (L // 4))
    cost = _cost_estimate(n_blocks, P1, P2, P4, Bp, Cgp, Crp, out_lanes,
                          (x_stk, r_p, w_slab, b_slab, sel_slab),
                          4 * n_blocks * Bp * out_lanes)

    out = pl.pallas_call(
        kernel,
        out_shape=jax.ShapeDtypeStruct((n_blocks, Bp, out_lanes), jnp.float32),
        grid=(n_blocks,),
        in_specs=[
            pl.BlockSpec((P1, Cgp), lambda i: (i, 0)),
            pl.BlockSpec((None, Bp, Crp), lambda i: (i, 0, 0)),
            pl.BlockSpec(w_slab.shape, lambda i: (0, 0)),     # invariant slab
            pl.BlockSpec(b_slab.shape, lambda i: (0, 0)),     # invariant slab
            pl.BlockSpec(sel_slab.shape, lambda i: (0, 0)),   # invariant slab
        ],
        out_specs=pl.BlockSpec((None, Bp, out_lanes), lambda i: (i, 0, 0)),
        compiler_params=pltpu.CompilerParams(
            dimension_semantics=("parallel",)),
        cost_estimate=cost,
    )(x_stk, r_p, w_slab, b_slab, sel_slab)

    # Padded tile rows (>= B_tile) and padded batch rows (>= B) hold
    # sigmoid(bias) garbage by construction -- slice them off here.
    out = out[:, :B_tile, :].reshape(B_pad, out_lanes)
    return out[:B, :out_dim]


# ---------------------------------------------------------------------------
# Deterministic parameter init (PyTorch-style layouts / fan-in scaling)
# ---------------------------------------------------------------------------
def init_params(key, global_feature_dim=10, regional_feature_dim=10,
                output_dim=10):
    keys = jax.random.split(key, 16)

    def lin(k, out_d, in_d):
        s = 1.0 / jnp.sqrt(in_d)
        return jax.random.uniform(k, (out_d, in_d), jnp.float32, -s, s)

    def conv(k, out_c, in_c, ksz=3):
        s = 1.0 / jnp.sqrt(in_c * ksz)
        return jax.random.uniform(k, (out_c, in_c, ksz), jnp.float32, -s, s)

    def bias(k, n, fan_in):
        s = 1.0 / jnp.sqrt(fan_in)
        return jax.random.uniform(k, (n,), jnp.float32, -s, s)

    return {
        "c1_w": conv(keys[0], 64, global_feature_dim),
        "c1_b": bias(keys[1], 64, global_feature_dim * 3),
        "c2_w": conv(keys[2], 128, 64), "c2_b": bias(keys[3], 128, 64 * 3),
        "c3_w": conv(keys[4], 256, 128), "c3_b": bias(keys[5], 256, 128 * 3),
        "r1_w": lin(keys[6], 64, regional_feature_dim),
        "r1_b": bias(keys[7], 64, regional_feature_dim),
        "r2_w": lin(keys[8], 32, 64), "r2_b": bias(keys[9], 32, 64),
        "o1_w": lin(keys[10], 128, 256 + 32), "o1_b": bias(keys[11], 128, 288),
        "o2_w": lin(keys[12], 64, 128), "o2_b": bias(keys[13], 64, 128),
        "o3_w": lin(keys[14], output_dim, 64),
        "o3_b": bias(keys[15], output_dim, 64),
    }


# ---------------------------------------------------------------------------
# Pure-JAX f32 reference (mirrors the PyTorch forward, eval mode)
# ---------------------------------------------------------------------------
def reference_forward(params, global_sequence, regional_features):
    x = jnp.transpose(global_sequence, (0, 2, 1))             # (B, C, L) NCL

    def conv1d_relu(x, w, b):
        y = jax.lax.conv_general_dilated(
            x, w, window_strides=(1,), padding=((1, 1),),
            dimension_numbers=("NCH", "OIH", "NCH"),
            precision=jax.lax.Precision.HIGHEST)
        return jax.nn.relu(y + b[None, :, None])

    def maxpool(x):
        B, C, L = x.shape
        L2 = (L // 2) * 2
        return jnp.max(x[..., :L2].reshape(B, C, L // 2, 2), axis=-1)

    h = maxpool(conv1d_relu(x, params["c1_w"], params["c1_b"]))
    h = maxpool(conv1d_relu(h, params["c2_w"], params["c2_b"]))
    h = conv1d_relu(h, params["c3_w"], params["c3_b"])
    conv_feat = jnp.mean(h, axis=-1)                          # AdaptiveAvgPool1d(1)

    r = jax.nn.relu(regional_features @ params["r1_w"].T + params["r1_b"])
    r = jax.nn.relu(r @ params["r2_w"].T + params["r2_b"])

    comb = jnp.concatenate([conv_feat, r], axis=1)
    z = jax.nn.relu(comb @ params["o1_w"].T + params["o1_b"])
    z = jax.nn.relu(z @ params["o2_w"].T + params["o2_b"])
    return jax.nn.sigmoid(z @ params["o3_w"].T + params["o3_b"])


# ---------------------------------------------------------------------------
if __name__ == "__main__":
    key = jax.random.PRNGKey(0)
    pkey, xkey, rkey = jax.random.split(key, 3)

    B, L = 2, 12                       # sequence_length default = 12
    Cg, Cr, out_dim = 10, 10, 10       # module defaults

    params = init_params(pkey, Cg, Cr, out_dim)
    global_sequence = jax.random.normal(xkey, (B, L, Cg), jnp.float32)
    regional_features = jax.random.normal(rkey, (B, Cr), jnp.float32)

    packed = pack_params(params)                  # one-time weight re-layout
    forward = jax.jit(lambda g, r: cnn_climate_predictor(packed, g, r))

    out = jax.block_until_ready(forward(global_sequence, regional_features))

    ref = reference_forward(params, global_sequence, regional_features)
    assert out.shape == (B, out_dim), out.shape
    # Kernel feeds the MXU bf16 operands (f32 accumulate), so compare against
    # the f32 reference with a correspondingly loosened tolerance.
    assert jnp.allclose(out, ref, atol=2e-2, rtol=2e-2), (
        float(jnp.max(jnp.abs(out - ref))))
    print("KERNEL_OK")
</pallas_src>

<mosaic_0001>
module attributes {stable_mosaic.version = 11 : i64} {
  func.func @kernel(%arg0: i32, %arg1: memref<128x16xbf16, #tpu.memory_space<vmem>>, %arg2: memref<1x16x16xbf16, #tpu.memory_space<vmem>>, %arg3: memref<1600x256xbf16, #tpu.memory_space<vmem>>, %arg4: memref<8x256xf32, #tpu.memory_space<vmem>>, %arg5: memref<1296x128xbf16, #tpu.memory_space<vmem>>, %arg6: memref<1x16x128xf32, #tpu.memory_space<vmem>>) attributes {dimension_semantics = [#tpu.dimension_semantics<parallel>], iteration_bounds = array<i64: 1>, scalar_prefetch = 0 : i64, scratch_operands = 0 : i64, tpu.core_type = #tpu.core_type<tc>, window_params = [{transform_indices = @transform_0, window_bounds = array<i64: 128, 16>}, {transform_indices = @transform_1, window_bounds = array<i64: 1, 16, 16>}, {pipeline_mode = #tpu.pipeline_mode<synchronous>, transform_indices = @transform_2, window_bounds = array<i64: 1600, 256>}, {pipeline_mode = #tpu.pipeline_mode<synchronous>, transform_indices = @transform_3, window_bounds = array<i64: 8, 256>}, {pipeline_mode = #tpu.pipeline_mode<synchronous>, transform_indices = @transform_4, window_bounds = array<i64: 1296, 128>}, {transform_indices = @transform_5, window_bounds = array<i64: 1, 16, 128>}]} {
    %c0 = arith.constant 0 : index
    %c0_0 = arith.constant 0 : index
    %0 = vector.load %arg1[%c0, %c0_0] : memref<128x16xbf16, #tpu.memory_space<vmem>>, vector<128x16xbf16>
    %c0_1 = arith.constant 0 : index
    %c0_2 = arith.constant 0 : index
    %1 = vector.load %arg5[%c0_1, %c0_2] : memref<1296x128xbf16, #tpu.memory_space<vmem>>, vector<128x128xbf16>
    %cst = arith.constant dense<0.000000e+00> : vector<128x16xf32>
    %2 = tpu.matmul %1, %0, %cst {dimension_numbers = #tpu.dot_dimension_numbers<[1], [0], [0], [1], [0, 0, 1, 1], [], []>} : vector<128x128xbf16>, vector<128x16xbf16>, vector<128x16xf32> -> vector<128x16xf32>
    %3 = arith.truncf %2 : vector<128x16xf32> to vector<128x16xbf16>
    %c128 = arith.constant 128 : index
    %c0_3 = arith.constant 0 : index
    %4 = vector.load %arg5[%c128, %c0_3] : memref<1296x128xbf16, #tpu.memory_space<vmem>>, vector<128x128xbf16>
    %cst_4 = arith.constant dense<0.000000e+00> : vector<128x16xf32>
    %5 = tpu.matmul %4, %0, %cst_4 {dimension_numbers = #tpu.dot_dimension_numbers<[1], [0], [0], [1], [0, 0, 1, 1], [], []>} : vector<128x128xbf16>, vector<128x16xbf16>, vector<128x16xf32> -> vector<128x16xf32>
    %6 = arith.truncf %5 : vector<128x16xf32> to vector<128x16xbf16>
    %c0_5 = arith.constant 0 : index
    %c0_6 = arith.constant 0 : index
    %7 = vector.load %arg3[%c0_5, %c0_6] : memref<1600x256xbf16, #tpu.memory_space<vmem>>, vector<16x128xbf16>
    %cst_7 = arith.constant dense<0.000000e+00> : vector<128x128xf32>
    %8 = tpu.matmul %3, %7, %cst_7 {dimension_numbers = #tpu.dot_dimension_numbers<[1], [0], [0], [1], [0, 0, 1, 1], [], []>} : vector<128x16xbf16>, vector<16x128xbf16>, vector<128x128xf32> -> vector<128x128xf32>
    %c16 = arith.constant 16 : index
    %c0_8 = arith.constant 0 : index
    %9 = vector.load %arg3[%c16, %c0_8] : memref<1600x256xbf16, #tpu.memory_space<vmem>>, vector<16x128xbf16>
    %cst_9 = arith.constant dense<0.000000e+00> : vector<128x128xf32>
    %10 = tpu.matmul %0, %9, %cst_9 {dimension_numbers = #tpu.dot_dimension_numbers<[1], [0], [0], [1], [0, 0, 1, 1], [], []>} : vector<128x16xbf16>, vector<16x128xbf16>, vector<128x128xf32> -> vector<128x128xf32>
    %11 = arith.addf %8, %10 : vector<128x128xf32>
    %c32 = arith.constant 32 : index
    %c0_10 = arith.constant 0 : index
    %12 = vector.load %arg3[%c32, %c0_10] : memref<1600x256xbf16, #tpu.memory_space<vmem>>, vector<16x128xbf16>
    %cst_11 = arith.constant dense<0.000000e+00> : vector<128x128xf32>
    %13 = tpu.matmul %6, %12, %cst_11 {dimension_numbers = #tpu.dot_dimension_numbers<[1], [0], [0], [1], [0, 0, 1, 1], [], []>} : vector<128x16xbf16>, vector<16x128xbf16>, vector<128x128xf32> -> vector<128x128xf32>
    %14 = arith.addf %11, %13 : vector<128x128xf32>
    %c0_12 = arith.constant 0 : index
    %c0_13 = arith.constant 0 : index
    %15 = vector.load %arg4[%c0_12, %c0_13] : memref<8x256xf32, #tpu.memory_space<vmem>>, vector<1x128xf32>
    %16 = vector.broadcast %15 : vector<1x128xf32> to vector<128x128xf32>
    %17 = arith.addf %14, %16 : vector<128x128xf32>
    %cst_14 = arith.constant 0.000000e+00 : f32
    %18 = vector.broadcast %cst_14 : f32 to vector<128x128xf32>
    %19 = arith.maximumf %17, %18 : vector<128x128xf32>
    %20 = arith.truncf %19 : vector<128x128xf32> to vector<128x128xbf16>
    %c256 = arith.constant 256 : index
    %c0_15 = arith.constant 0 : index
    %21 = vector.load %arg5[%c256, %c0_15] : memref<1296x128xbf16, #tpu.memory_space<vmem>>, vector<128x128xbf16>
    %cst_16 = arith.constant dense<0.000000e+00> : vector<128x128xf32>
    %22 = tpu.matmul %21, %20, %cst_16 {dimension_numbers = #tpu.dot_dimension_numbers<[1], [0], [0], [1], [0, 0, 1, 1], [], []>} : vector<128x128xbf16>, vector<128x128xbf16>, vector<128x128xf32> -> vector<128x128xf32>
    %c384 = arith.constant 384 : index
    %c0_17 = arith.constant 0 : index
    %23 = vector.load %arg5[%c384, %c0_17] : memref<1296x128xbf16, #tpu.memory_space<vmem>>, vector<128x128xbf16>
    %cst_18 = arith.constant dense<0.000000e+00> : vector<128x128xf32>
    %24 = tpu.matmul %23, %20, %cst_18 {dimension_numbers = #tpu.dot_dimension_numbers<[1], [0], [0], [1], [0, 0, 1, 1], [], []>} : vector<128x128xbf16>, vector<128x128xbf16>, vector<128x128xf32> -> vector<128x128xf32>
    %25 = arith.maximumf %22, %24 : vector<128x128xf32>
    %26 = arith.truncf %25 : vector<128x128xf32> to vector<128x128xbf16>
    %c512 = arith.constant 512 : index
    %c0_19 = arith.constant 0 : index
    %27 = vector.load %arg5[%c512, %c0_19] : memref<1296x128xbf16, #tpu.memory_space<vmem>>, vector<128x128xbf16>
    %cst_20 = arith.constant dense<0.000000e+00> : vector<128x128xf32>
    %28 = tpu.matmul %27, %26, %cst_20 {dimension_numbers = #tpu.dot_dimension_numbers<[1], [0], [0], [1], [0, 0, 1, 1], [], []>} : vector<128x128xbf16>, vector<128x128xbf16>, vector<128x128xf32> -> vector<128x128xf32>
    %29 = arith.truncf %28 : vector<128x128xf32> to vector<128x128xbf16>
    %c640 = arith.constant 640 : index
    %c0_21 = arith.constant 0 : index
    %30 = vector.load %arg5[%c640, %c0_21] : memref<1296x128xbf16, #tpu.memory_space<vmem>>, vector<128x128xbf16>
    %cst_22 = arith.constant dense<0.000000e+00> : vector<128x128xf32>
    %31 = tpu.matmul %30, %26, %cst_22 {dimension_numbers = #tpu.dot_dimension_numbers<[1], [0], [0], [1], [0, 0, 1, 1], [], []>} : vector<128x128xbf16>, vector<128x128xbf16>, vector<128x128xf32> -> vector<128x128xf32>
    %32 = arith.truncf %31 : vector<128x128xf32> to vector<128x128xbf16>
    %c48 = arith.constant 48 : index
    %c0_23 = arith.constant 0 : index
    %33 = vector.load %arg3[%c48, %c0_23] : memref<1600x256xbf16, #tpu.memory_space<vmem>>, vector<128x128xbf16>
    %cst_24 = arith.constant dense<0.000000e+00> : vector<128x128xf32>
    %34 = tpu.matmul %29, %33, %cst_24 {dimension_numbers = #tpu.dot_dimension_numbers<[1], [0], [0], [1], [0, 0, 1, 1], [], []>} : vector<128x128xbf16>, vector<128x128xbf16>, vector<128x128xf32> -> vector<128x128xf32>
    %c176 = arith.constant 176 : index
    %c0_25 = arith.constant 0 : index
    %35 = vector.load %arg3[%c176, %c0_25] : memref<1600x256xbf16, #tpu.memory_space<vmem>>, vector<128x128xbf16>
    %cst_26 = arith.constant dense<0.000000e+00> : vector<128x128xf32>
    %36 = tpu.matmul %26, %35, %cst_26 {dimension_numbers = #tpu.dot_dimension_numbers<[1], [0], [0], [1], [0, 0, 1, 1], [], []>} : vector<128x128xbf16>, vector<128x128xbf16>, vector<128x128xf32> -> vector<128x128xf32>
    %37 = arith.addf %34, %36 : vector<128x128xf32>
    %c304 = arith.constant 304 : index
    %c0_27 = arith.constant 0 : index
    %38 = vector.load %arg3[%c304, %c0_27] : memref<1600x256xbf16, #tpu.memory_space<vmem>>, vector<128x128xbf16>
    %cst_28 = arith.constant dense<0.000000e+00> : vector<128x128xf32>
    %39 = tpu.matmul %32, %38, %cst_28 {dimension_numbers = #tpu.dot_dimension_numbers<[1], [0], [0], [1], [0, 0, 1, 1], [], []>} : vector<128x128xbf16>, vector<128x128xbf16>, vector<128x128xf32> -> vector<128x128xf32>
    %40 = arith.addf %37, %39 : vector<128x128xf32>
    %c1 = arith.constant 1 : index
    %c0_29 = arith.constant 0 : index
    %41 = vector.load %arg4[%c1, %c0_29] : memref<8x256xf32, #tpu.memory_space<vmem>>, vector<1x128xf32>
    %42 = vector.broadcast %41 : vector<1x128xf32> to vector<128x128xf32>
    %43 = arith.addf %40, %42 : vector<128x128xf32>
    %cst_30 = arith.constant 0.000000e+00 : f32
    %44 = vector.broadcast %cst_30 : f32 to vector<128x128xf32>
    %45 = arith.maximumf %43, %44 : vector<128x128xf32>
    %46 = arith.truncf %45 : vector<128x128xf32> to vector<128x128xbf16>
    %c768 = arith.constant 768 : index
    %c0_31 = arith.constant 0 : index
    %47 = vector.load %arg5[%c768, %c0_31] : memref<1296x128xbf16, #tpu.memory_space<vmem>>, vector<128x128xbf16>
    %cst_32 = arith.constant dense<0.000000e+00> : vector<128x128xf32>
    %48 = tpu.matmul %47, %46, %cst_32 {dimension_numbers = #tpu.dot_dimension_numbers<[1], [0], [0], [1], [0, 0, 1, 1], [], []>} : vector<128x128xbf16>, vector<128x128xbf16>, vector<128x128xf32> -> vector<128x128xf32>
    %c896 = arith.constant 896 : index
    %c0_33 = arith.constant 0 : index
    %49 = vector.load %arg5[%c896, %c0_33] : memref<1296x128xbf16, #tpu.memory_space<vmem>>, vector<128x128xbf16>
    %cst_34 = arith.constant dense<0.000000e+00> : vector<128x128xf32>
    %50 = tpu.matmul %49, %46, %cst_34 {dimension_numbers = #tpu.dot_dimension_numbers<[1], [0], [0], [1], [0, 0, 1, 1], [], []>} : vector<128x128xbf16>, vector<128x128xbf16>, vector<128x128xf32> -> vector<128x128xf32>
    %51 = arith.maximumf %48, %50 : vector<128x128xf32>
    %52 = arith.truncf %51 : vector<128x128xf32> to vector<128x128xbf16>
    %c1024 = arith.constant 1024 : index
    %c0_35 = arith.constant 0 : index
    %53 = vector.load %arg5[%c1024, %c0_35] : memref<1296x128xbf16, #tpu.memory_space<vmem>>, vector<128x128xbf16>
    %cst_36 = arith.constant dense<0.000000e+00> : vector<128x128xf32>
    %54 = tpu.matmul %53, %52, %cst_36 {dimension_numbers = #tpu.dot_dimension_numbers<[1], [0], [0], [1], [0, 0, 1, 1], [], []>} : vector<128x128xbf16>, vector<128x128xbf16>, vector<128x128xf32> -> vector<128x128xf32>
    %55 = arith.truncf %54 : vector<128x128xf32> to vector<128x128xbf16>
    %c1152 = arith.constant 1152 : index
    %c0_37 = arith.constant 0 : index
    %56 = vector.load %arg5[%c1152, %c0_37] : memref<1296x128xbf16, #tpu.memory_space<vmem>>, vector<128x128xbf16>
    %cst_38 = arith.constant dense<0.000000e+00> : vector<128x128xf32>
    %57 = tpu.matmul %56, %52, %cst_38 {dimension_numbers = #tpu.dot_dimension_numbers<[1], [0], [0], [1], [0, 0, 1, 1], [], []>} : vector<128x128xbf16>, vector<128x128xbf16>, vector<128x128xf32> -> vector<128x128xf32>
    %58 = arith.truncf %57 : vector<128x128xf32> to vector<128x128xbf16>
    %c432 = arith.constant 432 : index
    %c0_39 = arith.constant 0 : index
    %59 = vector.load %arg3[%c432, %c0_39] : memref<1600x256xbf16, #tpu.memory_space<vmem>>, vector<128x256xbf16>
    %cst_40 = arith.constant dense<0.000000e+00> : vector<128x256xf32>
    %60 = tpu.matmul %55, %59, %cst_40 {dimension_numbers = #tpu.dot_dimension_numbers<[1], [0], [0], [1], [0, 0, 1, 1], [], []>} : vector<128x128xbf16>, vector<128x256xbf16>, vector<128x256xf32> -> vector<128x256xf32>
    %c560 = arith.constant 560 : index
    %c0_41 = arith.constant 0 : index
    %61 = vector.load %arg3[%c560, %c0_41] : memref<1600x256xbf16, #tpu.memory_space<vmem>>, vector<128x256xbf16>
    %cst_42 = arith.constant dense<0.000000e+00> : vector<128x256xf32>
    %62 = tpu.matmul %52, %61, %cst_42 {dimension_numbers = #tpu.dot_dimension_numbers<[1], [0], [0], [1], [0, 0, 1, 1], [], []>} : vector<128x128xbf16>, vector<128x256xbf16>, vector<128x256xf32> -> vector<128x256xf32>
    %63 = arith.addf %60, %62 : vector<128x256xf32>
    %c688 = arith.constant 688 : index
    %c0_43 = arith.constant 0 : index
    %64 = vector.load %arg3[%c688, %c0_43] : memref<1600x256xbf16, #tpu.memory_space<vmem>>, vector<128x256xbf16>
    %cst_44 = arith.constant dense<0.000000e+00> : vector<128x256xf32>
    %65 = tpu.matmul %58, %64, %cst_44 {dimension_numbers = #tpu.dot_dimension_numbers<[1], [0], [0], [1], [0, 0, 1, 1], [], []>} : vector<128x128xbf16>, vector<128x256xbf16>, vector<128x256xf32> -> vector<128x256xf32>
    %66 = arith.addf %63, %65 : vector<128x256xf32>
    %c2 = arith.constant 2 : index
    %c0_45 = arith.constant 0 : index
    %67 = vector.load %arg4[%c2, %c0_45] : memref<8x256xf32, #tpu.memory_space<vmem>>, vector<1x256xf32>
    %68 = vector.broadcast %67 : vector<1x256xf32> to vector<128x256xf32>
    %69 = arith.addf %66, %68 : vector<128x256xf32>
    %cst_46 = arith.constant 0.000000e+00 : f32
    %70 = vector.broadcast %cst_46 : f32 to vector<128x256xf32>
    %71 = arith.maximumf %69, %70 : vector<128x256xf32>
    %c1280 = arith.constant 1280 : index
    %c0_47 = arith.constant 0 : index
    %72 = vector.load %arg5[%c1280, %c0_47] : memref<1296x128xbf16, #tpu.memory_space<vmem>>, vector<16x128xbf16>
    %73 = arith.truncf %71 : vector<128x256xf32> to vector<128x256xbf16>
    %cst_48 = arith.constant dense<0.000000e+00> : vector<16x256xf32>
    %74 = tpu.matmul %72, %73, %cst_48 {dimension_numbers = #tpu.dot_dimension_numbers<[1], [0], [0], [1], [0, 0, 1, 1], [], []>} : vector<16x128xbf16>, vector<128x256xbf16>, vector<16x256xf32> -> vector<16x256xf32>
    %cst_49 = arith.constant 0.333333343 : f32
    %75 = vector.broadcast %cst_49 : f32 to vector<16x256xf32>
    %76 = arith.mulf %74, %75 : vector<16x256xf32>
    %c0_50 = arith.constant 0 : index
    %c0_51 = arith.constant 0 : index
    %c0_52 = arith.constant 0 : index
    %77 = vector.load %arg2[%c0_50, %c0_51, %c0_52] : memref<1x16x16xbf16, #tpu.memory_space<vmem>>, vector<1x16x16xbf16>
    %78 = vector.shape_cast %77 : vector<1x16x16xbf16> to vector<16x16xbf16>
    %c816 = arith.constant 816 : index
    %c0_53 = arith.constant 0 : index
    %79 = vector.load %arg3[%c816, %c0_53] : memref<1600x256xbf16, #tpu.memory_space<vmem>>, vector<16x128xbf16>
    %cst_54 = arith.constant dense<0.000000e+00> : vector<16x128xf32>
    %80 = tpu.matmul %78, %79, %cst_54 {dimension_numbers = #tpu.dot_dimension_numbers<[1], [0], [0], [1], [0, 0, 1, 1], [], []>} : vector<16x16xbf16>, vector<16x128xbf16>, vector<16x128xf32> -> vector<16x128xf32>
    %c3 = arith.constant 3 : index
    %c0_55 = arith.constant 0 : index
    %81 = vector.load %arg4[%c3, %c0_55] : memref<8x256xf32, #tpu.memory_space<vmem>>, vector<1x128xf32>
    %82 = vector.broadcast %81 : vector<1x128xf32> to vector<16x128xf32>
    %83 = arith.addf %80, %82 : vector<16x128xf32>
    %cst_56 = arith.constant 0.000000e+00 : f32
    %84 = vector.broadcast %cst_56 : f32 to vector<16x128xf32>
    %85 = arith.maximumf %83, %84 : vector<16x128xf32>
    %86 = arith.truncf %85 : vector<16x128xf32> to vector<16x128xbf16>
    %c832 = arith.constant 832 : index
    %c0_57 = arith.constant 0 : index
    %87 = vector.load %arg3[%c832, %c0_57] : memref<1600x256xbf16, #tpu.memory_space<vmem>>, vector<128x128xbf16>
    %cst_58 = arith.constant dense<0.000000e+00> : vector<16x128xf32>
    %88 = tpu.matmul %86, %87, %cst_58 {dimension_numbers = #tpu.dot_dimension_numbers<[1], [0], [0], [1], [0, 0, 1, 1], [], []>} : vector<16x128xbf16>, vector<128x128xbf16>, vector<16x128xf32> -> vector<16x128xf32>
    %c4 = arith.constant 4 : index
    %c0_59 = arith.constant 0 : index
    %89 = vector.load %arg4[%c4, %c0_59] : memref<8x256xf32, #tpu.memory_space<vmem>>, vector<1x128xf32>
    %90 = vector.broadcast %89 : vector<1x128xf32> to vector<16x128xf32>
    %91 = arith.addf %88, %90 : vector<16x128xf32>
    %cst_60 = arith.constant 0.000000e+00 : f32
    %92 = vector.broadcast %cst_60 : f32 to vector<16x128xf32>
    %93 = arith.maximumf %91, %92 : vector<16x128xf32>
    %94 = arith.truncf %76 : vector<16x256xf32> to vector<16x256xbf16>
    %c960 = arith.constant 960 : index
    %c0_61 = arith.constant 0 : index
    %95 = vector.load %arg3[%c960, %c0_61] : memref<1600x256xbf16, #tpu.memory_space<vmem>>, vector<256x128xbf16>
    %cst_62 = arith.constant dense<0.000000e+00> : vector<16x128xf32>
    %96 = tpu.matmul %94, %95, %cst_62 {dimension_numbers = #tpu.dot_dimension_numbers<[1], [0], [0], [1], [0, 0, 1, 1], [], []>} : vector<16x256xbf16>, vector<256x128xbf16>, vector<16x128xf32> -> vector<16x128xf32>
    %97 = arith.truncf %93 : vector<16x128xf32> to vector<16x128xbf16>
    %c1216 = arith.constant 1216 : index
    %c0_63 = arith.constant 0 : index
    %98 = vector.load %arg3[%c1216, %c0_63] : memref<1600x256xbf16, #tpu.memory_space<vmem>>, vector<128x128xbf16>
    %cst_64 = arith.constant dense<0.000000e+00> : vector<16x128xf32>
    %99 = tpu.matmul %97, %98, %cst_64 {dimension_numbers = #tpu.dot_dimension_numbers<[1], [0], [0], [1], [0, 0, 1, 1], [], []>} : vector<16x128xbf16>, vector<128x128xbf16>, vector<16x128xf32> -> vector<16x128xf32>
    %100 = arith.addf %96, %99 : vector<16x128xf32>
    %c5 = arith.constant 5 : index
    %c0_65 = arith.constant 0 : index
    %101 = vector.load %arg4[%c5, %c0_65] : memref<8x256xf32, #tpu.memory_space<vmem>>, vector<1x128xf32>
    %102 = vector.broadcast %101 : vector<1x128xf32> to vector<16x128xf32>
    %103 = arith.addf %100, %102 : vector<16x128xf32>
    %cst_66 = arith.constant 0.000000e+00 : f32
    %104 = vector.broadcast %cst_66 : f32 to vector<16x128xf32>
    %105 = arith.maximumf %103, %104 : vector<16x128xf32>
    %106 = arith.truncf %105 : vector<16x128xf32> to vector<16x128xbf16>
    %c1344 = arith.constant 1344 : index
    %c0_67 = arith.constant 0 : index
    %107 = vector.load %arg3[%c1344, %c0_67] : memref<1600x256xbf16, #tpu.memory_space<vmem>>, vector<128x128xbf16>
    %cst_68 = arith.constant dense<0.000000e+00> : vector<16x128xf32>
    %108 = tpu.matmul %106, %107, %cst_68 {dimension_numbers = #tpu.dot_dimension_numbers<[1], [0], [0], [1], [0, 0, 1, 1], [], []>} : vector<16x128xbf16>, vector<128x128xbf16>, vector<16x128xf32> -> vector<16x128xf32>
    %c6 = arith.constant 6 : index
    %c0_69 = arith.constant 0 : index
    %109 = vector.load %arg4[%c6, %c0_69] : memref<8x256xf32, #tpu.memory_space<vmem>>, vector<1x128xf32>
    %110 = vector.broadcast %109 : vector<1x128xf32> to vector<16x128xf32>
    %111 = arith.addf %108, %110 : vector<16x128xf32>
    %cst_70 = arith.constant 0.000000e+00 : f32
    %112 = vector.broadcast %cst_70 : f32 to vector<16x128xf32>
    %113 = arith.maximumf %111, %112 : vector<16x128xf32>
    %114 = arith.truncf %113 : vector<16x128xf32> to vector<16x128xbf16>
    %c1472 = arith.constant 1472 : index
    %c0_71 = arith.constant 0 : index
    %115 = vector.load %arg3[%c1472, %c0_71] : memref<1600x256xbf16, #tpu.memory_space<vmem>>, vector<128x128xbf16>
    %cst_72 = arith.constant dense<0.000000e+00> : vector<16x128xf32>
    %116 = tpu.matmul %114, %115, %cst_72 {dimension_numbers = #tpu.dot_dimension_numbers<[1], [0], [0], [1], [0, 0, 1, 1], [], []>} : vector<16x128xbf16>, vector<128x128xbf16>, vector<16x128xf32> -> vector<16x128xf32>
    %c7 = arith.constant 7 : index
    %c0_73 = arith.constant 0 : index
    %117 = vector.load %arg4[%c7, %c0_73] : memref<8x256xf32, #tpu.memory_space<vmem>>, vector<1x128xf32>
    %118 = vector.broadcast %117 : vector<1x128xf32> to vector<16x128xf32>
    %119 = arith.addf %116, %118 : vector<16x128xf32>
    %120 = arith.negf %119 : vector<16x128xf32>
    %121 = math.exp %120 : vector<16x128xf32>
    %cst_74 = arith.constant 1.000000e+00 : f32
    %122 = vector.broadcast %cst_74 : f32 to vector<16x128xf32>
    %123 = arith.addf %122, %121 : vector<16x128xf32>
    %124 = arith.divf %122, %123 : vector<16x128xf32>
    %c0_75 = arith.constant 0 : index
    %c0_76 = arith.constant 0 : index
    %c0_77 = arith.constant 0 : index
    %125 = vector.load %arg6[%c0_75, %c0_76, %c0_77] : memref<1x16x128xf32, #tpu.memory_space<vmem>>, vector<1x16x128xf32>
    %126 = vector.shape_cast %125 : vector<1x16x128xf32> to vector<16x128xf32>
    %127 = vector.shape_cast %124 : vector<16x128xf32> to vector<1x16x128xf32>
    tpu.vector_store %arg6[%c0_75, %c0_76, %c0_77], %127 {strides = array<i32>} : memref<1x16x128xf32, #tpu.memory_space<vmem>>, vector<1x16x128xf32>,
    return
  }
  func.func @transform_0(%arg0: i32) -> (i32, i32) {
    %c0_i32 = arith.constant 0 : i32
    %c0_i32_0 = arith.constant 0 : i32
    return %arg0, %c0_i32 : i32, i32
  }
  func.func @transform_1(%arg0: i32) -> (i32, i32, i32) {
    %c0_i32 = arith.constant 0 : i32
    %c0_i32_0 = arith.constant 0 : i32
    %c0_i32_1 = arith.constant 0 : i32
    return %arg0, %c0_i32, %c0_i32_0 : i32, i32, i32
  }
  func.func @transform_2(%arg0: i32) -> (i32, i32) {
    %c0_i32 = arith.constant 0 : i32
    %c0_i32_0 = arith.constant 0 : i32
    %c0_i32_1 = arith.constant 0 : i32
    return %c0_i32, %c0_i32_0 : i32, i32
  }
  func.func @transform_3(%arg0: i32) -> (i32, i32) {
    %c0_i32 = arith.constant 0 : i32
    %c0_i32_0 = arith.constant 0 : i32
    %c0_i32_1 = arith.constant 0 : i32
    return %c0_i32, %c0_i32_0 : i32, i32
  }
  func.func @transform_4(%arg0: i32) -> (i32, i32) {
    %c0_i32 = arith.constant 0 : i32
    %c0_i32_0 = arith.constant 0 : i32
    %c0_i32_1 = arith.constant 0 : i32
    return %c0_i32, %c0_i32_0 : i32, i32
  }
  func.func @transform_5(%arg0: i32) -> (i32, i32, i32) {
    %c0_i32 = arith.constant 0 : i32
    %c0_i32_0 = arith.constant 0 : i32
    %c0_i32_1 = arith.constant 0 : i32
    return %arg0, %c0_i32, %c0_i32_0 : i32, i32, i32
  }
}

</mosaic_0001>

<llo_original>
// kernel: _lambda_.1
$region0: #{_lambda_.1}
  #allocation0 [shape = 'u32[]', space=smem, size = 0x4, offset = 0x4, fixed_abs, tag = 'smem constant byte address 0x4 - core index']
  #allocation1 [shape = 'u32[144,128]{1,0:T(1,128)}', space=vmem, size = 0x12000, scoped, tag = 'internal scratch']
  %s0 = inlined_call_operand.vmem [shape: bf16[128,16], index: 0, kind: input, shape index: {}]
  %s1 = inlined_call_operand.vmem [shape: bf16[1,16,16], index: 1, kind: input, shape index: {}]
  %s2 = inlined_call_operand.vmem [shape: bf16[1600,256], index: 2, kind: input, shape index: {}]
  %s3 = inlined_call_operand.vmem [shape: f32[8,256], index: 3, kind: input, shape index: {}]
  %s4 = inlined_call_operand.vmem [shape: bf16[1296,128], index: 4, kind: input, shape index: {}]
  %s5 = inlined_call_operand.vmem [shape: f32[1,16,128], index: 5, kind: output, shape index: {}]
  %s6 = sld [smem:[#allocation0]]
  $region30: #{_lambda_.1} parent=0
    _
  %s8 = ssub.s32 1, %s6
  %s9 = scalar_select 0, %s8, %s6
  // Predicated region
  $region2: #{_lambda_.1} parent=0 // pred_check
    _
  $region3: #{_lambda_.1} parent=0 // pred_check_branch
    %11 = sbr.rel (0) target = $region5
  $region4: #{_lambda_.1} parent=0 // pred_region
    _
  $region5: #{_lambda_.1} parent=0 // pred_fallthru
    _
  // Predicated region
  $region6: #{_lambda_.1} parent=0 // pred_check
    _
  $region7: #{_lambda_.1} parent=0 // pred_check_branch
    %13 = sbr.rel (0) target = $region9
  $region8: #{_lambda_.1} parent=0 // pred_region
    _
  $region9: #{_lambda_.1} parent=0 // pred_fallthru
    _
  // Predicated region
  $region10: #{_lambda_.1} parent=0 // pred_check
    _
  $region11: #{_lambda_.1} parent=0 // pred_check_branch
    %15 = sbr.rel (0) target = $region13
  $region12: #{_lambda_.1} parent=0 // pred_region
    _
  $region13: #{_lambda_.1} parent=0 // pred_fallthru
    _
  // Predicated region
  $region14: #{_lambda_.1} parent=0 // pred_check
    _
  $region15: #{_lambda_.1} parent=0 // pred_check_branch
    %17 = sbr.rel (0) target = $region17
  $region16: #{_lambda_.1} parent=0 // pred_region
    _
  $region17: #{_lambda_.1} parent=0 // pred_fallthru
    _
  // Predicated region
  $region18: #{_lambda_.1} parent=0 // pred_check
    _
  $region19: #{_lambda_.1} parent=0 // pred_check_branch
    %19 = sbr.rel (0) target = $region21
  $region20: #{_lambda_.1} parent=0 // pred_region
    _
  $region21: #{_lambda_.1} parent=0 // pred_fallthru
    _
  %v21 = vld [vmem:[%s0] sm:$0xf]
  %v22 = vld [vmem:[%s0 + $0x4] sm:$0xf]
  %v23 = vld [vmem:[%s0 + $0x8] sm:$0xf]
  %v24 = vld [vmem:[%s0 + $0xc] sm:$0xf]
  %v25 = vld [vmem:[%s0 + $0x10] sm:$0xf]
  %v26 = vld [vmem:[%s0 + $0x14] sm:$0xf]
  %v27 = vld [vmem:[%s0 + $0x18] sm:$0xf]
  %v28 = vld [vmem:[%s0 + $0x1c] sm:$0xf]
  %v29 = vld [vmem:[%s0 + $0x20] sm:$0xf]
  %v30 = vld [vmem:[%s0 + $0x24] sm:$0xf]
  %v31 = vld [vmem:[%s0 + $0x28] sm:$0xf]
  %v32 = vld [vmem:[%s0 + $0x2c] sm:$0xf]
  %v33 = vld [vmem:[%s0 + $0x30] sm:$0xf]
  %v34 = vld [vmem:[%s0 + $0x34] sm:$0xf]
  %v35 = vld [vmem:[%s0 + $0x38] sm:$0xf]
  %v36 = vld [vmem:[%s0 + $0x3c] sm:$0xf]
  %v37 = vld [vmem:[%s4] sm:$0xf]
  %v38 = vld [vmem:[%s4 + $0x4] sm:$0xf]
  %v39 = vld [vmem:[%s4 + $0x8] sm:$0xf]
  %v40 = vld [vmem:[%s4 + $0xc] sm:$0xf]
  %v41 = vld [vmem:[%s4 + $0x10] sm:$0xf]
  %v42 = vld [vmem:[%s4 + $0x14] sm:$0xf]
  %v43 = vld [vmem:[%s4 + $0x18] sm:$0xf]
  %v44 = vld [vmem:[%s4 + $0x1c] sm:$0xf]
  %v45 = vld [vmem:[%s4 + $0x20] sm:$0xf]
  %v46 = vld [vmem:[%s4 + $0x24] sm:$0xf]
  %v47 = vld [vmem:[%s4 + $0x28] sm:$0xf]
  %v48 = vld [vmem:[%s4 + $0x2c] sm:$0xf]
  %v49 = vld [vmem:[%s4 + $0x30] sm:$0xf]
  %v50 = vld [vmem:[%s4 + $0x34] sm:$0xf]
  %v51 = vld [vmem:[%s4 + $0x38] sm:$0xf]
  %v52 = vld [vmem:[%s4 + $0x3c] sm:$0xf]
  %v69 = vunpack.c.l.b16 %v37
  %v70 = vunpack.c.l.b16 %v38
  %v71 = vunpack.c.l.b16 %v39
  %v72 = vunpack.c.l.b16 %v40
  %v73 = vunpack.c.l.b16 %v41
  %v74 = vunpack.c.l.b16 %v42
  %v75 = vunpack.c.l.b16 %v43
  %v76 = vunpack.c.l.b16 %v44
  %v77 = vunpack.c.l.b16 %v45
  %v78 = vunpack.c.l.b16 %v46
  %v79 = vunpack.c.l.b16 %v47
  %v80 = vunpack.c.l.b16 %v48
  %v81 = vunpack.c.l.b16 %v49
  %v82 = vunpack.c.l.b16 %v50
  %v83 = vunpack.c.l.b16 %v51
  %v84 = vunpack.c.l.b16 %v52
  %v85 = vpack.c.b16 %v70, %v69
  %v86 = vpack.c.b16 %v72, %v71
  %v87 = vpack.c.b16 %v74, %v73
  %v88 = vpack.c.b16 %v76, %v75
  %v89 = vpack.c.b16 %v78, %v77
  %v90 = vpack.c.b16 %v80, %v79
  %v91 = vpack.c.b16 %v82, %v81
  %v92 = vpack.c.b16 %v84, %v83
  %v117 = vunpack.c.l.b16 %v21
  %v118 = vunpack.c.l.b16 %v22
  %v119 = vunpack.c.l.b16 %v23
  %v120 = vunpack.c.l.b16 %v24
  %v121 = vunpack.c.l.b16 %v25
  %v122 = vunpack.c.l.b16 %v26
  %v123 = vunpack.c.l.b16 %v27
  %v124 = vunpack.c.l.b16 %v28
  %v125 = vunpack.c.l.b16 %v29
  %v126 = vunpack.c.l.b16 %v30
  %v127 = vunpack.c.l.b16 %v31
  %v128 = vunpack.c.l.b16 %v32
  %v129 = vunpack.c.l.b16 %v33
  %v130 = vunpack.c.l.b16 %v34
  %v131 = vunpack.c.l.b16 %v35
  %v132 = vunpack.c.l.b16 %v36
  %v133 = vpack.c.b16 %v118, %v117
  %v134 = vpack.c.b16 %v120, %v119
  %v135 = vpack.c.b16 %v122, %v121
  %v136 = vpack.c.b16 %v124, %v123
  %v137 = vpack.c.b16 %v126, %v125
  %v138 = vpack.c.b16 %v128, %v127
  %v139 = vpack.c.b16 %v130, %v129
  %v140 = vpack.c.b16 %v132, %v131
  %149 = vmatprep.subr.bf16.mxu0 0
  %150 = vmatpush1.bf16.msra.mxu0 %v133
  %151 = vmatprep.subr.bf16.mxu0 0
  %152 = vmatpush1.bf16.msra.mxu0 %v134
  %153 = vmatprep.subr.bf16.mxu0 0
  %154 = vmatpush1.bf16.msra.mxu0 %v135
  %155 = vmatprep.subr.bf16.mxu0 0
  %156 = vmatpush1.bf16.msra.mxu0 %v136
  %157 = vmatprep.subr.bf16.mxu0 0
  %158 = vmatpush1.bf16.msra.mxu0 %v137
  %159 = vmatprep.subr.bf16.mxu0 0
  %160 = vmatpush1.bf16.msra.mxu0 %v138
  %161 = vmatprep.subr.bf16.mxu0 0
  %162 = vmatpush1.bf16.msra.mxu0 %v139
  %163 = vmatprep.subr.bf16.mxu0 0
  %164 = vmatpush1.bf16.msra.mxu0 %v140
  %165 = vmatprep.subr.bf16.mxu0 0
  %166 = vmatpush1.bf16.msra.mxu0 0
  %167 = vmatprep.subr.bf16.mxu0 0
  %168 = vmatpush1.bf16.msra.mxu0 0
  %169 = vmatprep.subr.bf16.mxu0 0
  %170 = vmatpush1.bf16.msra.mxu0 0
  %171 = vmatprep.subr.bf16.mxu0 0
  %172 = vmatpush1.bf16.msra.mxu0 0
  %173 = vmatprep.subr.bf16.mxu0 0
  %174 = vmatpush1.bf16.msra.mxu0 0
  %175 = vmatprep.subr.bf16.mxu0 0
  %176 = vmatpush1.bf16.msra.mxu0 0
  %177 = vmatprep.subr.bf16.mxu0 0
  %178 = vmatpush1.bf16.msra.mxu0 0
  %179 = vmatprep.subr.bf16.mxu0 0
  %180 = vmatpush1.bf16.msra.mxu0 0
  %181 = vmatprep.mubr.bf16.mxu0 0
  %182 = vmatmul.mubr.bf16.gmra.mrb[0].mxu0 %v85
  %v183 = vpop.f32.mrb[0].mxu0
  %v184 = vadd.f32 0.0, %v183
  %v185 = vpop.f32.mrb[0].mxu0
  %v186 = vpop.f32.mrb[0].mxu0
  %v187 = vadd.f32 0.0, %v186
  %v188 = vpop.f32.mrb[0].mxu0
  %189 = vmatprep.mubr.bf16.mxu0 0
  %190 = vmatmul.mubr.bf16.gmra.mrb[0].mxu0 %v86
  %v191 = vpop.f32.mrb[0].mxu0
  %v192 = vadd.f32 0.0, %v191
  %v193 = vpop.f32.mrb[0].mxu0
  %v194 = vpop.f32.mrb[0].mxu0
  %v195 = vadd.f32 0.0, %v194
  %v196 = vpop.f32.mrb[0].mxu0
  %197 = vmatprep.mubr.bf16.mxu0 0
  %198 = vmatmul.mubr.bf16.gmra.mrb[0].mxu0 %v87
  %v199 = vpop.f32.mrb[0].mxu0
  %v200 = vadd.f32 0.0, %v199
  %v201 = vpop.f32.mrb[0].mxu0
  %v202 = vpop.f32.mrb[0].mxu0
  %v203 = vadd.f32 0.0, %v202
  %v204 = vpop.f32.mrb[0].mxu0
  %205 = vmatprep.mubr.bf16.mxu0 0
  %206 = vmatmul.mubr.bf16.gmra.mrb[0].mxu0 %v88
  %v207 = vpop.f32.mrb[0].mxu0
  %v208 = vadd.f32 0.0, %v207
  %v209 = vpop.f32.mrb[0].mxu0
  %v210 = vpop.f32.mrb[0].mxu0
  %v211 = vadd.f32 0.0, %v210
  %v212 = vpop.f32.mrb[0].mxu0
  %213 = vmatprep.mubr.bf16.mxu0 0
  %214 = vmatmul.mubr.bf16.gmra.mrb[0].mxu0 %v89
  %v215 = vpop.f32.mrb[0].mxu0
  %v216 = vadd.f32 0.0, %v215
  %v217 = vpop.f32.mrb[0].mxu0
  %v218 = vpop.f32.mrb[0].mxu0
  %v219 = vadd.f32 0.0, %v218
  %v220 = vpop.f32.mrb[0].mxu0
  %221 = vmatprep.mubr.bf16.mxu0 0
  %222 = vmatmul.mubr.bf16.gmra.mrb[0].mxu0 %v90
  %v223 = vpop.f32.mrb[0].mxu0
  %v224 = vadd.f32 0.0, %v223
  %v225 = vpop.f32.mrb[0].mxu0
  %v226 = vpop.f32.mrb[0].mxu0
  %v227 = vadd.f32 0.0, %v226
  %v228 = vpop.f32.mrb[0].mxu0
  %229 = vmatprep.mubr.bf16.mxu0 0
  %230 = vmatmul.mubr.bf16.gmra.mrb[0].mxu0 %v91
  %v231 = vpop.f32.mrb[0].mxu0
  %v232 = vadd.f32 0.0, %v231
  %v233 = vpop.f32.mrb[0].mxu0
  %v234 = vpop.f32.mrb[0].mxu0
  %v235 = vadd.f32 0.0, %v234
  %v236 = vpop.f32.mrb[0].mxu0
  %237 = vmatprep.mubr.bf16.mxu0 0
  %238 = vmatmul.mubr.bf16.gmra.mrb[0].mxu0 %v92
  %v239 = vpop.f32.mrb[0].mxu0
  %v240 = vadd.f32 0.0, %v239
  %v241 = vpop.f32.mrb[0].mxu0
  %v242 = vpop.f32.mrb[0].mxu0
  %v243 = vadd.f32 0.0, %v242
  %v244 = vpop.f32.mrb[0].mxu0
  %245 = vdwg.mxu0
  %v246 = vpack.c.bf16 %v187, %v184
  %v247 = vpack.c.bf16 %v195, %v192
  %v248 = vpack.c.bf16 %v203, %v200
  %v249 = vpack.c.bf16 %v211, %v208
  %v250 = vpack.c.bf16 %v219, %v216
  %v251 = vpack.c.bf16 %v227, %v224
  %v252 = vpack.c.bf16 %v235, %v232
  %v253 = vpack.c.bf16 %v243, %v240
  %v254 = vld [vmem:[%s4 + $0x40] sm:$0xf]
  %v255 = vld [vmem:[%s4 + $0x44] sm:$0xf]
  %v256 = vld [vmem:[%s4 + $0x48] sm:$0xf]
  %v257 = vld [vmem:[%s4 + $0x4c] sm:$0xf]
  %v258 = vld [vmem:[%s4 + $0x50] sm:$0xf]
  %v259 = vld [vmem:[%s4 + $0x54] sm:$0xf]
  %v260 = vld [vmem:[%s4 + $0x58] sm:$0xf]
  %v261 = vld [vmem:[%s4 + $0x5c] sm:$0xf]
  %v262 = vld [vmem:[%s4 + $0x60] sm:$0xf]
  %v263 = vld [vmem:[%s4 + $0x64] sm:$0xf]
  %v264 = vld [vmem:[%s4 + $0x68] sm:$0xf]
  %v265 = vld [vmem:[%s4 + $0x6c] sm:$0xf]
  %v266 = vld [vmem:[%s4 + $0x70] sm:$0xf]
  %v267 = vld [vmem:[%s4 + $0x74] sm:$0xf]
  %v268 = vld [vmem:[%s4 + $0x78] sm:$0xf]
  %v269 = vld [vmem:[%s4 + $0x7c] sm:$0xf]
  %v286 = vunpack.c.l.b16 %v254
  %v287 = vunpack.c.l.b16 %v255
  %v288 = vunpack.c.l.b16 %v256
  %v289 = vunpack.c.l.b16 %v257
  %v290 = vunpack.c.l.b16 %v258
  %v291 = vunpack.c.l.b16 %v259
  %v292 = vunpack.c.l.b16 %v260
  %v293 = vunpack.c.l.b16 %v261
  %v294 = vunpack.c.l.b16 %v262
  %v295 = vunpack.c.l.b16 %v263
  %v296 = vunpack.c.l.b16 %v264
  %v297 = vunpack.c.l.b16 %v265
  %v298 = vunpack.c.l.b16 %v266
  %v299 = vunpack.c.l.b16 %v267
  %v300 = vunpack.c.l.b16 %v268
  %v301 = vunpack.c.l.b16 %v269
  %v302 = vpack.c.b16 %v287, %v286
  %v303 = vpack.c.b16 %v289, %v288
  %v304 = vpack.c.b16 %v291, %v290
  %v305 = vpack.c.b16 %v293, %v292
  %v306 = vpack.c.b16 %v295, %v294
  %v307 = vpack.c.b16 %v297, %v296
  %v308 = vpack.c.b16 %v299, %v298
  %v309 = vpack.c.b16 %v301, %v300
  %318 = vmatprep.subr.bf16.mxu0 0
  %319 = vmatpush1.bf16.msra.mxu0 %v133
  %320 = vmatprep.subr.bf16.mxu0 0
  %321 = vmatpush1.bf16.msra.mxu0 %v134
  %322 = vmatprep.subr.bf16.mxu0 0
  %323 = vmatpush1.bf16.msra.mxu0 %v135
  %324 = vmatprep.subr.bf16.mxu0 0
  %325 = vmatpush1.bf16.msra.mxu0 %v136
  %326 = vmatprep.subr.bf16.mxu0 0
  %327 = vmatpush1.bf16.msra.mxu0 %v137
  %328 = vmatprep.subr.bf16.mxu0 0
  %329 = vmatpush1.bf16.msra.mxu0 %v138
  %330 = vmatprep.subr.bf16.mxu0 0
  %331 = vmatpush1.bf16.msra.mxu0 %v139
  %332 = vmatprep.subr.bf16.mxu0 0
  %333 = vmatpush1.bf16.msra.mxu0 %v140
  %334 = vmatprep.subr.bf16.mxu0 0
  %335 = vmatpush1.bf16.msra.mxu0 0
  %336 = vmatprep.subr.bf16.mxu0 0
  %337 = vmatpush1.bf16.msra.mxu0 0
  %338 = vmatprep.subr.bf16.mxu0 0
  %339 = vmatpush1.bf16.msra.mxu0 0
  %340 = vmatprep.subr.bf16.mxu0 0
  %341 = vmatpush1.bf16.msra.mxu0 0
  %342 = vmatprep.subr.bf16.mxu0 0
  %343 = vmatpush1.bf16.msra.mxu0 0
  %344 = vmatprep.subr.bf16.mxu0 0
  %345 = vmatpush1.bf16.msra.mxu0 0
  %346 = vmatprep.subr.bf16.mxu0 0
  %347 = vmatpush1.bf16.msra.mxu0 0
  %348 = vmatprep.subr.bf16.mxu0 0
  %349 = vmatpush1.bf16.msra.mxu0 0
  %350 = vmatprep.mubr.bf16.mxu0 0
  %351 = vmatmul.mubr.bf16.gmra.mrb[0].mxu0 %v302
  %v352 = vpop.f32.mrb[0].mxu0
  %v353 = vadd.f32 0.0, %v352
  %v354 = vpop.f32.mrb[0].mxu0
  %v355 = vpop.f32.mrb[0].mxu0
  %v356 = vadd.f32 0.0, %v355
  %v357 = vpop.f32.mrb[0].mxu0
  %358 = vmatprep.mubr.bf16.mxu0 0
  %359 = vmatmul.mubr.bf16.gmra.mrb[0].mxu0 %v303
  %v360 = vpop.f32.mrb[0].mxu0
  %v361 = vadd.f32 0.0, %v360
  %v362 = vpop.f32.mrb[0].mxu0
  %v363 = vpop.f32.mrb[0].mxu0
  %v364 = vadd.f32 0.0, %v363
  %v365 = vpop.f32.mrb[0].mxu0
  %366 = vmatprep.mubr.bf16.mxu0 0
  %367 = vmatmul.mubr.bf16.gmra.mrb[0].mxu0 %v304
  %v368 = vpop.f32.mrb[0].mxu0
  %v369 = vadd.f32 0.0, %v368
  %v370 = vpop.f32.mrb[0].mxu0
  %v371 = vpop.f32.mrb[0].mxu0
  %v372 = vadd.f32 0.0, %v371
  %v373 = vpop.f32.mrb[0].mxu0
  %374 = vmatprep.mubr.bf16.mxu0 0
  %375 = vmatmul.mubr.bf16.gmra.mrb[0].mxu0 %v305
  %v376 = vpop.f32.mrb[0].mxu0
  %v377 = vadd.f32 0.0, %v376
  %v378 = vpop.f32.mrb[0].mxu0
  %v379 = vpop.f32.mrb[0].mxu0
  %v380 = vadd.f32 0.0, %v379
  %v381 = vpop.f32.mrb[0].mxu0
  %382 = vmatprep.mubr.bf16.mxu0 0
  %383 = vmatmul.mubr.bf16.gmra.mrb[0].mxu0 %v306
  %v384 = vpop.f32.mrb[0].mxu0
  %v385 = vadd.f32 0.0, %v384
  %v386 = vpop.f32.mrb[0].mxu0
  %v387 = vpop.f32.mrb[0].mxu0
  %v388 = vadd.f32 0.0, %v387
  %v389 = vpop.f32.mrb[0].mxu0
  %390 = vmatprep.mubr.bf16.mxu0 0
  %391 = vmatmul.mubr.bf16.gmra.mrb[0].mxu0 %v307
  %v392 = vpop.f32.mrb[0].mxu0
  %v393 = vadd.f32 0.0, %v392
  %v394 = vpop.f32.mrb[0].mxu0
  %v395 = vpop.f32.mrb[0].mxu0
  %v396 = vadd.f32 0.0, %v395
  %v397 = vpop.f32.mrb[0].mxu0
  %398 = vmatprep.mubr.bf16.mxu0 0
  %399 = vmatmul.mubr.bf16.gmra.mrb[0].mxu0 %v308
  %v400 = vpop.f32.mrb[0].mxu0
  %v401 = vadd.f32 0.0, %v400
  %v402 = vpop.f32.mrb[0].mxu0
  %v403 = vpop.f32.mrb[0].mxu0
  %v404 = vadd.f32 0.0, %v403
  %v405 = vpop.f32.mrb[0].mxu0
  %406 = vmatprep.mubr.bf16.mxu0 0
  %407 = vmatmul.mubr.bf16.gmra.mrb[0].mxu0 %v309
  %v408 = vpop.f32.mrb[0].mxu0
  %v409 = vadd.f32 0.0, %v408
  %v410 = vpop.f32.mrb[0].mxu0
  %v411 = vpop.f32.mrb[0].mxu0
  %v412 = vadd.f32 0.0, %v411
  %v413 = vpop.f32.mrb[0].mxu0
  %414 = vdwg.mxu0
  %v415 = vpack.c.bf16 %v356, %v353
  %v416 = vpack.c.bf16 %v364, %v361
  %v417 = vpack.c.bf16 %v372, %v369
  %v418 = vpack.c.bf16 %v380, %v377
  %v419 = vpack.c.bf16 %v388, %v385
  %v420 = vpack.c.bf16 %v396, %v393
  %v421 = vpack.c.bf16 %v404, %v401
  %v422 = vpack.c.bf16 %v412, %v409
  %v423 = vld [vmem:[%s2] sm:$0xf]
  %v424 = vld [vmem:[%s2 + $0x8] sm:$0xf]
  %v425 = vld [vmem:[%s2 + $0x10] sm:$0xf]
  %v426 = vld [vmem:[%s2 + $0x18] sm:$0xf]
  %v429 = vunpack.c.l.b16 %v425
  %v430 = vunpack.c.l.b16 %v426
  %v431 = vpack.c.b16 %v430, %v429
  %vm433 = vcmask 130048
  %v435 = vsel %vm433, %v133, 0
  %v438 = vsel %vm433, %v134, 0
  %v441 = vsel %vm433, %v135, 0
  %v444 = vsel %vm433, %v136, 0
  %v447 = vsel %vm433, %v137, 0
  %v450 = vsel %vm433, %v138, 0
  %v453 = vsel %vm433, %v139, 0
  %v456 = vsel %vm433, %v140, 0
  %458 = vmatprep.subr.bf16.mxu0 0
  %459 = vmatpush1.bf16.msra.mxu0 %v431
  %460 = vmatprep.subr.bf16.mxu0 0
  %461 = vmatpush1.bf16.msra.mxu0 0
  %462 = vmatprep.subr.bf16.mxu0 0
  %463 = vmatpush1.bf16.msra.mxu0 0
  %464 = vmatprep.subr.bf16.mxu0 0
  %465 = vmatpush1.bf16.msra.mxu0 0
  %466 = vmatprep.subr.bf16.mxu0 0
  %467 = vmatpush1.bf16.msra.mxu0 0
  %468 = vmatprep.subr.bf16.mxu0 0
  %469 = vmatpush1.bf16.msra.mxu0 0
  %470 = vmatprep.subr.bf16.mxu0 0
  %471 = vmatpush1.bf16.msra.mxu0 0
  %472 = vmatprep.subr.bf16.mxu0 0
  %473 = vmatpush1.bf16.msra.mxu0 0
  %474 = vmatprep.subr.bf16.mxu0 0
  %475 = vmatpush1.bf16.msra.mxu0 0
  %476 = vmatprep.subr.bf16.mxu0 0
  %477 = vmatpush1.bf16.msra.mxu0 0
  %478 = vmatprep.subr.bf16.mxu0 0
  %479 = vmatpush1.bf16.msra.mxu0 0
  %480 = vmatprep.subr.bf16.mxu0 0
  %481 = vmatpush1.bf16.msra.mxu0 0
  %482 = vmatprep.subr.bf16.mxu0 0
  %483 = vmatpush1.bf16.msra.mxu0 0
  %484 = vmatprep.subr.bf16.mxu0 0
  %485 = vmatpush1.bf16.msra.mxu0 0
  %486 = vmatprep.subr.bf16.mxu0 0
  %487 = vmatpush1.bf16.msra.mxu0 0
  %488 = vmatprep.subr.bf16.mxu0 0
  %489 = vmatpush1.bf16.msra.mxu0 0
  %490 = vmatprep.mubr.bf16.mxu0 0
  %491 = vmatmul.mubr.bf16.gmra.mrb[0].mxu0 %v435
  %v492 = vpop.f32.mrb[0].mxu0
  %v493 = vadd.f32 0.0, %v492
  %v494 = vpop.f32.mrb[0].mxu0
  %v495 = vpop.f32.mrb[0].mxu0
  %v496 = vadd.f32 0.0, %v495
  %v497 = vpop.f32.mrb[0].mxu0
  %498 = vmatprep.mubr.bf16.mxu0 0
  %499 = vmatmul.mubr.bf16.gmra.mrb[0].mxu0 %v438
  %v500 = vpop.f32.mrb[0].mxu0
  %v501 = vadd.f32 0.0, %v500
  %v502 = vpop.f32.mrb[0].mxu0
  %v503 = vpop.f32.mrb[0].mxu0
  %v504 = vadd.f32 0.0, %v503
  %v505 = vpop.f32.mrb[0].mxu0
  %506 = vmatprep.mubr.bf16.mxu0 0
  %507 = vmatmul.mubr.bf16.gmra.mrb[0].mxu0 %v441
  %v508 = vpop.f32.mrb[0].mxu0
  %v509 = vadd.f32 0.0, %v508
  %v510 = vpop.f32.mrb[0].mxu0
  %v511 = vpop.f32.mrb[0].mxu0
  %v512 = vadd.f32 0.0, %v511
  %v513 = vpop.f32.mrb[0].mxu0
  %514 = vmatprep.mubr.bf16.mxu0 0
  %515 = vmatmul.mubr.bf16.gmra.mrb[0].mxu0 %v444
  %v516 = vpop.f32.mrb[0].mxu0
  %v517 = vadd.f32 0.0, %v516
  %v518 = vpop.f32.mrb[0].mxu0
  %v519 = vpop.f32.mrb[0].mxu0
  %v520 = vadd.f32 0.0, %v519
  %v521 = vpop.f32.mrb[0].mxu0
  %522 = vmatprep.mubr.bf16.mxu0 0
  %523 = vmatmul.mubr.bf16.gmra.mrb[0].mxu0 %v447
  %v524 = vpop.f32.mrb[0].mxu0
  %v525 = vadd.f32 0.0, %v524
  %v526 = vpop.f32.mrb[0].mxu0
  %v527 = vpop.f32.mrb[0].mxu0
  %v528 = vadd.f32 0.0, %v527
  %v529 = vpop.f32.mrb[0].mxu0
  %530 = vmatprep.mubr.bf16.mxu0 0
  %531 = vmatmul.mubr.bf16.gmra.mrb[0].mxu0 %v450
  %v532 = vpop.f32.mrb[0].mxu0
  %v533 = vadd.f32 0.0, %v532
  %v534 = vpop.f32.mrb[0].mxu0
  %v535 = vpop.f32.mrb[0].mxu0
  %v536 = vadd.f32 0.0, %v535
  %v537 = vpop.f32.mrb[0].mxu0
  %538 = vmatprep.mubr.bf16.mxu0 0
  %539 = vmatmul.mubr.bf16.gmra.mrb[0].mxu0 %v453
  %v540 = vpop.f32.mrb[0].mxu0
  %v541 = vadd.f32 0.0, %v540
  %v542 = vpop.f32.mrb[0].mxu0
  %v543 = vpop.f32.mrb[0].mxu0
  %v544 = vadd.f32 0.0, %v543
  %v545 = vpop.f32.mrb[0].mxu0
  %546 = vmatprep.mubr.bf16.mxu0 0
  %547 = vmatmul.mubr.bf16.gmra.mrb[0].mxu0 %v456
  %v548 = vpop.f32.mrb[0].mxu0
  %v549 = vadd.f32 0.0, %v548
  %v550 = vpop.f32.mrb[0].mxu0
  %v551 = vpop.f32.mrb[0].mxu0
  %v552 = vadd.f32 0.0, %v551
  %v553 = vpop.f32.mrb[0].mxu0
  %554 = vdwg.mxu0
  %v557 = vunpack.c.l.b16 %v423
  %v558 = vunpack.c.l.b16 %v424
  %v559 = vpack.c.b16 %v558, %v557
  %v562 = vsel %vm433, %v246, 0
  %v565 = vsel %vm433, %v247, 0
  %v568 = vsel %vm433, %v248, 0
  %v571 = vsel %vm433, %v249, 0
  %v574 = vsel %vm433, %v250, 0
  %v577 = vsel %vm433, %v251, 0
  %v580 = vsel %vm433, %v252, 0
  %v583 = vsel %vm433, %v253, 0
  %585 = vmatprep.subr.bf16.mxu0 0
  %586 = vmatpush1.bf16.msra.mxu0 %v559
  %587 = vmatprep.subr.bf16.mxu0 0
  %588 = vmatpush1.bf16.msra.mxu0 0
  %589 = vmatprep.subr.bf16.mxu0 0
  %590 = vmatpush1.bf16.msra.mxu0 0
  %591 = vmatprep.subr.bf16.mxu0 0
  %592 = vmatpush1.bf16.msra.mxu0 0
  %593 = vmatprep.subr.bf16.mxu0 0
  %594 = vmatpush1.bf16.msra.mxu0 0
  %595 = vmatprep.subr.bf16.mxu0 0
  %596 = vmatpush1.bf16.msra.mxu0 0
  %597 = vmatprep.subr.bf16.mxu0 0
  %598 = vmatpush1.bf16.msra.mxu0 0
  %599 = vmatprep.subr.bf16.mxu0 0
  %600 = vmatpush1.bf16.msra.mxu0 0
  %601 = vmatprep.subr.bf16.mxu0 0
  %602 = vmatpush1.bf16.msra.mxu0 0
  %603 = vmatprep.subr.bf16.mxu0 0
  %604 = vmatpush1.bf16.msra.mxu0 0
  %605 = vmatprep.subr.bf16.mxu0 0
  %606 = vmatpush1.bf16.msra.mxu0 0
  %607 = vmatprep.subr.bf16.mxu0 0
  %608 = vmatpush1.bf16.msra.mxu0 0
  %609 = vmatprep.subr.bf16.mxu0 0
  %610 = vmatpush1.bf16.msra.mxu0 0
  %611 = vmatprep.subr.bf16.mxu0 0
  %612 = vmatpush1.bf16.msra.mxu0 0
  %613 = vmatprep.subr.bf16.mxu0 0
  %614 = vmatpush1.bf16.msra.mxu0 0
  %615 = vmatprep.subr.bf16.mxu0 0
  %616 = vmatpush1.bf16.msra.mxu0 0
  %617 = vmatprep.mubr.bf16.mxu0 0
  %618 = vmatmul.mubr.bf16.gmra.mrb[0].mxu0 %v562
  %v619 = vpop.f32.mrb[0].mxu0
  %v620 = vadd.f32 %v493, %v619
  %v621 = vpop.f32.mrb[0].mxu0
  %v622 = vpop.f32.mrb[0].mxu0
  %v623 = vadd.f32 %v496, %v622
  %v624 = vpop.f32.mrb[0].mxu0
  %625 = vmatprep.mubr.bf16.mxu0 0
  %626 = vmatmul.mubr.bf16.gmra.mrb[0].mxu0 %v565
  %v627 = vpop.f32.mrb[0].mxu0
  %v628 = vadd.f32 %v501, %v627
  %v629 = vpop.f32.mrb[0].mxu0
  %v630 = vpop.f32.mrb[0].mxu0
  %v631 = vadd.f32 %v504, %v630
  %v632 = vpop.f32.mrb[0].mxu0
  %633 = vmatprep.mubr.bf16.mxu0 0
  %634 = vmatmul.mubr.bf16.gmra.mrb[0].mxu0 %v568
  %v635 = vpop.f32.mrb[0].mxu0
  %v636 = vadd.f32 %v509, %v635
  %v637 = vpop.f32.mrb[0].mxu0
  %v638 = vpop.f32.mrb[0].mxu0
  %v639 = vadd.f32 %v512, %v638
  %v640 = vpop.f32.mrb[0].mxu0
  %641 = vmatprep.mubr.bf16.mxu0 0
  %642 = vmatmul.mubr.bf16.gmra.mrb[0].mxu0 %v571
  %v643 = vpop.f32.mrb[0].mxu0
  %v644 = vadd.f32 %v517, %v643
  %v645 = vpop.f32.mrb[0].mxu0
  %v646 = vpop.f32.mrb[0].mxu0
  %v647 = vadd.f32 %v520, %v646
  %v648 = vpop.f32.mrb[0].mxu0
  %649 = vmatprep.mubr.bf16.mxu0 0
  %650 = vmatmul.mubr.bf16.gmra.mrb[0].mxu0 %v574
  %v651 = vpop.f32.mrb[0].mxu0
  %v652 = vadd.f32 %v525, %v651
  %v653 = vpop.f32.mrb[0].mxu0
  %v654 = vpop.f32.mrb[0].mxu0
  %v655 = vadd.f32 %v528, %v654
  %v656 = vpop.f32.mrb[0].mxu0
  %657 = vmatprep.mubr.bf16.mxu0 0
  %658 = vmatmul.mubr.bf16.gmra.mrb[0].mxu0 %v577
  %v659 = vpop.f32.mrb[0].mxu0
  %v660 = vadd.f32 %v533, %v659
  %v661 = vpop.f32.mrb[0].mxu0
  %v662 = vpop.f32.mrb[0].mxu0
  %v663 = vadd.f32 %v536, %v662
  %v664 = vpop.f32.mrb[0].mxu0
  %665 = vmatprep.mubr.bf16.mxu0 0
  %666 = vmatmul.mubr.bf16.gmra.mrb[0].mxu0 %v580
  %v667 = vpop.f32.mrb[0].mxu0
  %v668 = vadd.f32 %v541, %v667
  %v669 = vpop.f32.mrb[0].mxu0
  %v670 = vpop.f32.mrb[0].mxu0
  %v671 = vadd.f32 %v544, %v670
  %v672 = vpop.f32.mrb[0].mxu0
  %673 = vmatprep.mubr.bf16.mxu0 0
  %674 = vmatmul.mubr.bf16.gmra.mrb[0].mxu0 %v583
  %v675 = vpop.f32.mrb[0].mxu0
  %v676 = vadd.f32 %v549, %v675
  %v677 = vpop.f32.mrb[0].mxu0
  %v678 = vpop.f32.mrb[0].mxu0
  %v679 = vadd.f32 %v552, %v678
  %v680 = vpop.f32.mrb[0].mxu0
  %681 = vdwg.mxu0
  %v682 = vld [vmem:[%s2 + $0x20] sm:$0xf]
  %v683 = vld [vmem:[%s2 + $0x28] sm:$0xf]
  %v686 = vunpack.c.l.b16 %v682
  %v687 = vunpack.c.l.b16 %v683
  %v688 = vpack.c.b16 %v687, %v686
  %v691 = vsel %vm433, %v415, 0
  %v694 = vsel %vm433, %v416, 0
  %v697 = vsel %vm433, %v417, 0
  %v700 = vsel %vm433, %v418, 0
  %v703 = vsel %vm433, %v419, 0
  %v706 = vsel %vm433, %v420, 0
  %v709 = vsel %vm433, %v421, 0
  %v712 = vsel %vm433, %v422, 0
  %714 = vmatprep.subr.bf16.mxu0 0
  %715 = vmatpush1.bf16.msra.mxu0 %v688
  %716 = vmatprep.subr.bf16.mxu0 0
  %717 = vmatpush1.bf16.msra.mxu0 0
  %718 = vmatprep.subr.bf16.mxu0 0
  %719 = vmatpush1.bf16.msra.mxu0 0
  %720 = vmatprep.subr.bf16.mxu0 0
  %721 = vmatpush1.bf16.msra.mxu0 0
  %722 = vmatprep.subr.bf16.mxu0 0
  %723 = vmatpush1.bf16.msra.mxu0 0
  %724 = vmatprep.subr.bf16.mxu0 0
  %725 = vmatpush1.bf16.msra.mxu0 0
  %726 = vmatprep.subr.bf16.mxu0 0
  %727 = vmatpush1.bf16.msra.mxu0 0
  %728 = vmatprep.subr.bf16.mxu0 0
  %729 = vmatpush1.bf16.msra.mxu0 0
  %730 = vmatprep.subr.bf16.mxu0 0
  %731 = vmatpush1.bf16.msra.mxu0 0
  %732 = vmatprep.subr.bf16.mxu0 0
  %733 = vmatpush1.bf16.msra.mxu0 0
  %734 = vmatprep.subr.bf16.mxu0 0
  %735 = vmatpush1.bf16.msra.mxu0 0
  %736 = vmatprep.subr.bf16.mxu0 0
  %737 = vmatpush1.bf16.msra.mxu0 0
  %738 = vmatprep.subr.bf16.mxu0 0
  %739 = vmatpush1.bf16.msra.mxu0 0
  %740 = vmatprep.subr.bf16.mxu0 0
  %741 = vmatpush1.bf16.msra.mxu0 0
  %742 = vmatprep.subr.bf16.mxu0 0
  %743 = vmatpush1.bf16.msra.mxu0 0
  %744 = vmatprep.subr.bf16.mxu0 0
  %745 = vmatpush1.bf16.msra.mxu0 0
  %746 = vmatprep.mubr.bf16.mxu0 0
  %747 = vmatmul.mubr.bf16.gmra.mrb[0].mxu0 %v691
  %v748 = vpop.f32.mrb[0].mxu0
  %v749 = vadd.f32 0.0, %v748
  %v750 = vpop.f32.mrb[0].mxu0
  %v751 = vpop.f32.mrb[0].mxu0
  %v752 = vadd.f32 0.0, %v751
  %v753 = vpop.f32.mrb[0].mxu0
  %754 = vmatprep.mubr.bf16.mxu0 0
  %755 = vmatmul.mubr.bf16.gmra.mrb[0].mxu0 %v694
  %v756 = vpop.f32.mrb[0].mxu0
  %v757 = vadd.f32 0.0, %v756
  %v758 = vpop.f32.mrb[0].mxu0
  %v759 = vpop.f32.mrb[0].mxu0
  %v760 = vadd.f32 0.0, %v759
  %v761 = vpop.f32.mrb[0].mxu0
  %762 = vmatprep.mubr.bf16.mxu0 0
  %763 = vmatmul.mubr.bf16.gmra.mrb[0].mxu0 %v697
  %v764 = vpop.f32.mrb[0].mxu0
  %v765 = vadd.f32 0.0, %v764
  %v766 = vpop.f32.mrb[0].mxu0
  %v767 = vpop.f32.mrb[0].mxu0
  %v768 = vadd.f32 0.0, %v767
  %v769 = vpop.f32.mrb[0].mxu0
  %770 = vmatprep.mubr.bf16.mxu0 0
  %771 = vmatmul.mubr.bf16.gmra.mrb[0].mxu0 %v700
  %v772 = vpop.f32.mrb[0].mxu0
  %v773 = vadd.f32 0.0, %v772
  %v774 = vpop.f32.mrb[0].mxu0
  %v775 = vpop.f32.mrb[0].mxu0
  %v776 = vadd.f32 0.0, %v775
  %v777 = vpop.f32.mrb[0].mxu0
  %778 = vmatprep.mubr.bf16.mxu0 0
  %779 = vmatmul.mubr.bf16.gmra.mrb[0].mxu0 %v703
  %v780 = vpop.f32.mrb[0].mxu0
  %v781 = vadd.f32 0.0, %v780
  %v782 = vpop.f32.mrb[0].mxu0
  %v783 = vpop.f32.mrb[0].mxu0
  %v784 = vadd.f32 0.0, %v783
  %v785 = vpop.f32.mrb[0].mxu0
  %786 = vmatprep.mubr.bf16.mxu0 0
  %787 = vmatmul.mubr.bf16.gmra.mrb[0].mxu0 %v706
  %v788 = vpop.f32.mrb[0].mxu0
  %v789 = vadd.f32 0.0, %v788
  %v790 = vpop.f32.mrb[0].mxu0
  %v791 = vpop.f32.mrb[0].mxu0
  %v792 = vadd.f32 0.0, %v791
  %v793 = vpop.f32.mrb[0].mxu0
  %794 = vmatprep.mubr.bf16.mxu0 0
  %795 = vmatmul.mubr.bf16.gmra.mrb[0].mxu0 %v709
  %v796 = vpop.f32.mrb[0].mxu0
  %v797 = vadd.f32 0.0, %v796
  %v798 = vpop.f32.mrb[0].mxu0
  %v799 = vpop.f32.mrb[0].mxu0
  %v800 = vadd.f32 0.0, %v799
  %v801 = vpop.f32.mrb[0].mxu0
  %802 = vmatprep.mubr.bf16.mxu0 0
  %803 = vmatmul.mubr.bf16.gmra.mrb[0].mxu0 %v712
  %v804 = vpop.f32.mrb[0].mxu0
  %v805 = vadd.f32 0.0, %v804
  %v806 = vpop.f32.mrb[0].mxu0
  %v807 = vpop.f32.mrb[0].mxu0
  %v808 = vadd.f32 0.0, %v807
  %v809 = vpop.f32.mrb[0].mxu0
  %810 = vdwg.mxu0
  %v811 = vadd.f32 %v620, %v749
  %v812 = vadd.f32 %v623, %v752
  %v813 = vadd.f32 %v628, %v757
  %v814 = vadd.f32 %v631, %v760
  %v815 = vadd.f32 %v636, %v765
  %v816 = vadd.f32 %v639, %v768
  %v817 = vadd.f32 %v644, %v773
  %v818 = vadd.f32 %v647, %v776
  %v819 = vadd.f32 %v652, %v781
  %v820 = vadd.f32 %v655, %v784
  %v821 = vadd.f32 %v660, %v789
  %v822 = vadd.f32 %v663, %v792
  %v823 = vadd.f32 %v668, %v797
  %v824 = vadd.f32 %v671, %v800
  %v825 = vadd.f32 %v676, %v805
  %v826 = vadd.f32 %v679, %v808
  %v827 = vld [vmem:[%s3] ss:$0 sm:$0xff]
  %v828 = vadd.f32 %v811, %v827
  %v829 = vadd.f32 %v812, %v827
  %v830 = vadd.f32 %v813, %v827
  %v831 = vadd.f32 %v814, %v827
  %v832 = vadd.f32 %v815, %v827
  %v833 = vadd.f32 %v816, %v827
  %v834 = vadd.f32 %v817, %v827
  %v835 = vadd.f32 %v818, %v827
  %v836 = vadd.f32 %v819, %v827
  %v837 = vadd.f32 %v820, %v827
  %v838 = vadd.f32 %v821, %v827
  %v839 = vadd.f32 %v822, %v827
  %v840 = vadd.f32 %v823, %v827
  %v841 = vadd.f32 %v824, %v827
  %v842 = vadd.f32 %v825, %v827
  %v843 = vadd.f32 %v826, %v827
  %v844 = vmax.f32 %v828, 0.0
  %v845 = vmax.f32 %v829, 0.0
  %v846 = vmax.f32 %v830, 0.0
  %v847 = vmax.f32 %v831, 0.0
  %v848 = vmax.f32 %v832, 0.0
  %v849 = vmax.f32 %v833, 0.0
  %v850 = vmax.f32 %v834, 0.0
  %v851 = vmax.f32 %v835, 0.0
  %v852 = vmax.f32 %v836, 0.0
  %v853 = vmax.f32 %v837, 0.0
  %v854 = vmax.f32 %v838, 0.0
  %v855 = vmax.f32 %v839, 0.0
  %v856 = vmax.f32 %v840, 0.0
  %v857 = vmax.f32 %v841, 0.0
  %v858 = vmax.f32 %v842, 0.0
  %v859 = vmax.f32 %v843, 0.0
  %v860 = vpack.c.bf16 %v845, %v844
  %v861 = vpack.c.bf16 %v847, %v846
  %v862 = vpack.c.bf16 %v849, %v848
  %v863 = vpack.c.bf16 %v851, %v850
  %v864 = vpack.c.bf16 %v853, %v852
  %v865 = vpack.c.bf16 %v855, %v854
  %v866 = vpack.c.bf16 %v857, %v856
  %v867 = vpack.c.bf16 %v859, %v858
  %v868 = vld [vmem:[%s4 + $0x80] sm:$0xf]
  %v869 = vld [vmem:[%s4 + $0x84] sm:$0xf]
  %v870 = vld [vmem:[%s4 + $0x88] sm:$0xf]
  %v871 = vld [vmem:[%s4 + $0x8c] sm:$0xf]
  %v872 = vld [vmem:[%s4 + $0x90] sm:$0xf]
  %v873 = vld [vmem:[%s4 + $0x94] sm:$0xf]
  %v874 = vld [vmem:[%s4 + $0x98] sm:$0xf]
  %v875 = vld [vmem:[%s4 + $0x9c] sm:$0xf]
  %v876 = vld [vmem:[%s4 + $0xa0] sm:$0xf]
  %v877 = vld [vmem:[%s4 + $0xa4] sm:$0xf]
  %v878 = vld [vmem:[%s4 + $0xa8] sm:$0xf]
  %v879 = vld [vmem:[%s4 + $0xac] sm:$0xf]
  %v880 = vld [vmem:[%s4 + $0xb0] sm:$0xf]
  %v881 = vld [vmem:[%s4 + $0xb4] sm:$0xf]
  %v882 = vld [vmem:[%s4 + $0xb8] sm:$0xf]
  %v883 = vld [vmem:[%s4 + $0xbc] sm:$0xf]
  %v900 = vunpack.c.l.b16 %v868
  %v901 = vunpack.c.l.b16 %v869
  %v902 = vunpack.c.l.b16 %v870
  %v903 = vunpack.c.l.b16 %v871
  %v904 = vunpack.c.l.b16 %v872
  %v905 = vunpack.c.l.b16 %v873
  %v906 = vunpack.c.l.b16 %v874
  %v907 = vunpack.c.l.b16 %v875
  %v908 = vunpack.c.l.b16 %v876
  %v909 = vunpack.c.l.b16 %v877
  %v910 = vunpack.c.l.b16 %v878
  %v911 = vunpack.c.l.b16 %v879
  %v912 = vunpack.c.l.b16 %v880
  %v913 = vunpack.c.l.b16 %v881
  %v914 = vunpack.c.l.b16 %v882
  %v915 = vunpack.c.l.b16 %v883
  %v916 = vpack.c.b16 %v901, %v900
  %v917 = vpack.c.b16 %v903, %v902
  %v918 = vpack.c.b16 %v905, %v904
  %v919 = vpack.c.b16 %v907, %v906
  %v920 = vpack.c.b16 %v909, %v908
  %v921 = vpack.c.b16 %v911, %v910
  %v922 = vpack.c.b16 %v913, %v912
  %v923 = vpack.c.b16 %v915, %v914
  %932 = vmatprep.subr.bf16.mxu0 0
  %933 = vmatpush1.bf16.msra.mxu0 %v860
  %934 = vmatprep.subr.bf16.mxu0 0
  %935 = vmatpush1.bf16.msra.mxu0 %v861
  %936 = vmatprep.subr.bf16.mxu0 0
  %937 = vmatpush1.bf16.msra.mxu0 %v862
  %938 = vmatprep.subr.bf16.mxu0 0
  %939 = vmatpush1.bf16.msra.mxu0 %v863
  %940 = vmatprep.subr.bf16.mxu0 0
  %941 = vmatpush1.bf16.msra.mxu0 %v864
  %942 = vmatprep.subr.bf16.mxu0 0
  %943 = vmatpush1.bf16.msra.mxu0 %v865
  %944 = vmatprep.subr.bf16.mxu0 0
  %945 = vmatpush1.bf16.msra.mxu0 %v866
  %946 = vmatprep.subr.bf16.mxu0 0
  %947 = vmatpush1.bf16.msra.mxu0 %v867
  %948 = vmatprep.subr.bf16.mxu0 0
  %949 = vmatpush1.bf16.msra.mxu0 0
  %950 = vmatprep.subr.bf16.mxu0 0
  %951 = vmatpush1.bf16.msra.mxu0 0
  %952 = vmatprep.subr.bf16.mxu0 0
  %953 = vmatpush1.bf16.msra.mxu0 0
  %954 = vmatprep.subr.bf16.mxu0 0
  %955 = vmatpush1.bf16.msra.mxu0 0
  %956 = vmatprep.subr.bf16.mxu0 0
  %957 = vmatpush1.bf16.msra.mxu0 0
  %958 = vmatprep.subr.bf16.mxu0 0
  %959 = vmatpush1.bf16.msra.mxu0 0
  %960 = vmatprep.subr.bf16.mxu0 0
  %961 = vmatpush1.bf16.msra.mxu0 0
  %962 = vmatprep.subr.bf16.mxu0 0
  %963 = vmatpush1.bf16.msra.mxu0 0
  %964 = vmatprep.mubr.bf16.mxu0 0
  %965 = vmatmul.mubr.bf16.gmra.mrb[0].mxu0 %v916
  %v966 = vpop.f32.mrb[0].mxu0
  %v967 = vadd.f32 0.0, %v966
  %v968 = vpop.f32.mrb[0].mxu0
  %v969 = vpop.f32.mrb[0].mxu0
  %v970 = vadd.f32 0.0, %v969
  %v971 = vpop.f32.mrb[0].mxu0
  %972 = vmatprep.mubr.bf16.mxu0 0
  %973 = vmatmul.mubr.bf16.gmra.mrb[0].mxu0 %v917
  %v974 = vpop.f32.mrb[0].mxu0
  %v975 = vadd.f32 0.0, %v974
  %v976 = vpop.f32.mrb[0].mxu0
  %v977 = vpop.f32.mrb[0].mxu0
  %v978 = vadd.f32 0.0, %v977
  %v979 = vpop.f32.mrb[0].mxu0
  %980 = vmatprep.mubr.bf16.mxu0 0
  %981 = vmatmul.mubr.bf16.gmra.mrb[0].mxu0 %v918
  %v982 = vpop.f32.mrb[0].mxu0
  %v983 = vadd.f32 0.0, %v982
  %v984 = vpop.f32.mrb[0].mxu0
  %v985 = vpop.f32.mrb[0].mxu0
  %v986 = vadd.f32 0.0, %v985
  %v987 = vpop.f32.mrb[0].mxu0
  %988 = vmatprep.mubr.bf16.mxu0 0
  %989 = vmatmul.mubr.bf16.gmra.mrb[0].mxu0 %v919
  %v990 = vpop.f32.mrb[0].mxu0
  %v991 = vadd.f32 0.0, %v990
  %v992 = vpop.f32.mrb[0].mxu0
  %v993 = vpop.f32.mrb[0].mxu0
  %v994 = vadd.f32 0.0, %v993
  %v995 = vpop.f32.mrb[0].mxu0
  %996 = vmatprep.mubr.bf16.mxu0 0
  %997 = vmatmul.mubr.bf16.gmra.mrb[0].mxu0 %v920
  %v998 = vpop.f32.mrb[0].mxu0
  %v999 = vadd.f32 0.0, %v998
  %v1000 = vpop.f32.mrb[0].mxu0
  %v1001 = vpop.f32.mrb[0].mxu0
  %v1002 = vadd.f32 0.0, %v1001
  %v1003 = vpop.f32.mrb[0].mxu0
  %1004 = vmatprep.mubr.bf16.mxu0 0
  %1005 = vmatmul.mubr.bf16.gmra.mrb[0].mxu0 %v921
  %v1006 = vpop.f32.mrb[0].mxu0
  %v1007 = vadd.f32 0.0, %v1006
  %v1008 = vpop.f32.mrb[0].mxu0
  %v1009 = vpop.f32.mrb[0].mxu0
  %v1010 = vadd.f32 0.0, %v1009
  %v1011 = vpop.f32.mrb[0].mxu0
  %1012 = vmatprep.mubr.bf16.mxu0 0
  %1013 = vmatmul.mubr.bf16.gmra.mrb[0].mxu0 %v922
  %v1014 = vpop.f32.mrb[0].mxu0
  %v1015 = vadd.f32 0.0, %v1014
  %v1016 = vpop.f32.mrb[0].mxu0
  %v1017 = vpop.f32.mrb[0].mxu0
  %v1018 = vadd.f32 0.0, %v1017
  %v1019 = vpop.f32.mrb[0].mxu0
  %1020 = vmatprep.mubr.bf16.mxu0 0
  %1021 = vmatmul.mubr.bf16.gmra.mrb[0].mxu0 %v923
  %v1022 = vpop.f32.mrb[0].mxu0
  %v1023 = vadd.f32 0.0, %v1022
  %v1024 = vpop.f32.mrb[0].mxu0
  %v1025 = vpop.f32.mrb[0].mxu0
  %v1026 = vadd.f32 0.0, %v1025
  %v1027 = vpop.f32.mrb[0].mxu0
  %1028 = vdwg.mxu0
  %v1029 = vld [vmem:[%s4 + $0xc0] sm:$0xf]
  %v1030 = vld [vmem:[%s4 + $0xc4] sm:$0xf]
  %v1031 = vld [vmem:[%s4 + $0xc8] sm:$0xf]
  %v1032 = vld [vmem:[%s4 + $0xcc] sm:$0xf]
  %v1033 = vld [vmem:[%s4 + $0xd0] sm:$0xf]
  %v1034 = vld [vmem:[%s4 + $0xd4] sm:$0xf]
  %v1035 = vld [vmem:[%s4 + $0xd8] sm:$0xf]
  %v1036 = vld [vmem:[%s4 + $0xdc] sm:$0xf]
  %v1037 = vld [vmem:[%s4 + $0xe0] sm:$0xf]
  %v1038 = vld [vmem:[%s4 + $0xe4] sm:$0xf]
  %v1039 = vld [vmem:[%s4 + $0xe8] sm:$0xf]
  %v1040 = vld [vmem:[%s4 + $0xec] sm:$0xf]
  %v1041 = vld [vmem:[%s4 + $0xf0] sm:$0xf]
  %v1042 = vld [vmem:[%s4 + $0xf4] sm:$0xf]
  %v1043 = vld [vmem:[%s4 + $0xf8] sm:$0xf]
  %v1044 = vld [vmem:[%s4 + $0xfc] sm:$0xf]
  %v1061 = vunpack.c.l.b16 %v1029
  %v1062 = vunpack.c.l.b16 %v1030
  %v1063 = vunpack.c.l.b16 %v1031
  %v1064 = vunpack.c.l.b16 %v1032
  %v1065 = vunpack.c.l.b16 %v1033
  %v1066 = vunpack.c.l.b16 %v1034
  %v1067 = vunpack.c.l.b16 %v1035
  %v1068 = vunpack.c.l.b16 %v1036
  %v1069 = vunpack.c.l.b16 %v1037
  %v1070 = vunpack.c.l.b16 %v1038
  %v1071 = vunpack.c.l.b16 %v1039
  %v1072 = vunpack.c.l.b16 %v1040
  %v1073 = vunpack.c.l.b16 %v1041
  %v1074 = vunpack.c.l.b16 %v1042
  %v1075 = vunpack.c.l.b16 %v1043
  %v1076 = vunpack.c.l.b16 %v1044
  %v1077 = vpack.c.b16 %v1062, %v1061
  %v1078 = vpack.c.b16 %v1064, %v1063
  %v1079 = vpack.c.b16 %v1066, %v1065
  %v1080 = vpack.c.b16 %v1068, %v1067
  %v1081 = vpack.c.b16 %v1070, %v1069
  %v1082 = vpack.c.b16 %v1072, %v1071
  %v1083 = vpack.c.b16 %v1074, %v1073
  %v1084 = vpack.c.b16 %v1076, %v1075
  %1093 = vmatprep.subr.bf16.mxu0 0
  %1094 = vmatpush1.bf16.msra.mxu0 %v860
  %1095 = vmatprep.subr.bf16.mxu0 0
  %1096 = vmatpush1.bf16.msra.mxu0 %v861
  %1097 = vmatprep.subr.bf16.mxu0 0
  %1098 = vmatpush1.bf16.msra.mxu0 %v862
  %1099 = vmatprep.subr.bf16.mxu0 0
  %1100 = vmatpush1.bf16.msra.mxu0 %v863
  %1101 = vmatprep.subr.bf16.mxu0 0
  %1102 = vmatpush1.bf16.msra.mxu0 %v864
  %1103 = vmatprep.subr.bf16.mxu0 0
  %1104 = vmatpush1.bf16.msra.mxu0 %v865
  %1105 = vmatprep.subr.bf16.mxu0 0
  %1106 = vmatpush1.bf16.msra.mxu0 %v866
  %1107 = vmatprep.subr.bf16.mxu0 0
  %1108 = vmatpush1.bf16.msra.mxu0 %v867
  %1109 = vmatprep.subr.bf16.mxu0 0
  %1110 = vmatpush1.bf16.msra.mxu0 0
  %1111 = vmatprep.subr.bf16.mxu0 0
  %1112 = vmatpush1.bf16.msra.mxu0 0
  %1113 = vmatprep.subr.bf16.mxu0 0
  %1114 = vmatpush1.bf16.msra.mxu0 0
  %1115 = vmatprep.subr.bf16.mxu0 0
  %1116 = vmatpush1.bf16.msra.mxu0 0
  %1117 = vmatprep.subr.bf16.mxu0 0
  %1118 = vmatpush1.bf16.msra.mxu0 0
  %1119 = vmatprep.subr.bf16.mxu0 0
  %1120 = vmatpush1.bf16.msra.mxu0 0
  %1121 = vmatprep.subr.bf16.mxu0 0
  %1122 = vmatpush1.bf16.msra.mxu0 0
  %1123 = vmatprep.subr.bf16.mxu0 0
  %1124 = vmatpush1.bf16.msra.mxu0 0
  %1125 = vmatprep.mubr.bf16.mxu0 0
  %1126 = vmatmul.mubr.bf16.gmra.mrb[0].mxu0 %v1077
  %v1127 = vpop.f32.mrb[0].mxu0
  %v1128 = vadd.f32 0.0, %v1127
  %v1129 = vpop.f32.mrb[0].mxu0
  %v1130 = vpop.f32.mrb[0].mxu0
  %v1131 = vadd.f32 0.0, %v1130
  %v1132 = vpop.f32.mrb[0].mxu0
  %1133 = vmatprep.mubr.bf16.mxu0 0
  %1134 = vmatmul.mubr.bf16.gmra.mrb[0].mxu0 %v1078
  %v1135 = vpop.f32.mrb[0].mxu0
  %v1136 = vadd.f32 0.0, %v1135
  %v1137 = vpop.f32.mrb[0].mxu0
  %v1138 = vpop.f32.mrb[0].mxu0
  %v1139 = vadd.f32 0.0, %v1138
  %v1140 = vpop.f32.mrb[0].mxu0
  %1141 = vmatprep.mubr.bf16.mxu0 0
  %1142 = vmatmul.mubr.bf16.gmra.mrb[0].mxu0 %v1079
  %v1143 = vpop.f32.mrb[0].mxu0
  %v1144 = vadd.f32 0.0, %v1143
  %v1145 = vpop.f32.mrb[0].mxu0
  %v1146 = vpop.f32.mrb[0].mxu0
  %v1147 = vadd.f32 0.0, %v1146
  %v1148 = vpop.f32.mrb[0].mxu0
  %1149 = vmatprep.mubr.bf16.mxu0 0
  %1150 = vmatmul.mubr.bf16.gmra.mrb[0].mxu0 %v1080
  %v1151 = vpop.f32.mrb[0].mxu0
  %v1152 = vadd.f32 0.0, %v1151
  %v1153 = vpop.f32.mrb[0].mxu0
  %v1154 = vpop.f32.mrb[0].mxu0
  %v1155 = vadd.f32 0.0, %v1154
  %v1156 = vpop.f32.mrb[0].mxu0
  %1157 = vmatprep.mubr.bf16.mxu0 0
  %1158 = vmatmul.mubr.bf16.gmra.mrb[0].mxu0 %v1081
  %v1159 = vpop.f32.mrb[0].mxu0
  %v1160 = vadd.f32 0.0, %v1159
  %v1161 = vpop.f32.mrb[0].mxu0
  %v1162 = vpop.f32.mrb[0].mxu0
  %v1163 = vadd.f32 0.0, %v1162
  %v1164 = vpop.f32.mrb[0].mxu0
  %1165 = vmatprep.mubr.bf16.mxu0 0
  %1166 = vmatmul.mubr.bf16.gmra.mrb[0].mxu0 %v1082
  %v1167 = vpop.f32.mrb[0].mxu0
  %v1168 = vadd.f32 0.0, %v1167
  %v1169 = vpop.f32.mrb[0].mxu0
  %v1170 = vpop.f32.mrb[0].mxu0
  %v1171 = vadd.f32 0.0, %v1170
  %v1172 = vpop.f32.mrb[0].mxu0
  %1173 = vmatprep.mubr.bf16.mxu0 0
  %1174 = vmatmul.mubr.bf16.gmra.mrb[0].mxu0 %v1083
  %v1175 = vpop.f32.mrb[0].mxu0
  %v1176 = vadd.f32 0.0, %v1175
  %v1177 = vpop.f32.mrb[0].mxu0
  %v1178 = vpop.f32.mrb[0].mxu0
  %v1179 = vadd.f32 0.0, %v1178
  %v1180 = vpop.f32.mrb[0].mxu0
  %1181 = vmatprep.mubr.bf16.mxu0 0
  %1182 = vmatmul.mubr.bf16.gmra.mrb[0].mxu0 %v1084
  %v1183 = vpop.f32.mrb[0].mxu0
  %v1184 = vadd.f32 0.0, %v1183
  %v1185 = vpop.f32.mrb[0].mxu0
  %v1186 = vpop.f32.mrb[0].mxu0
  %v1187 = vadd.f32 0.0, %v1186
  %v1188 = vpop.f32.mrb[0].mxu0
  %1189 = vdwg.mxu0
  %v1190 = vmax.f32 %v967, %v1128
  %v1191 = vmax.f32 %v970, %v1131
  %v1192 = vmax.f32 %v975, %v1136
  %v1193 = vmax.f32 %v978, %v1139
  %v1194 = vmax.f32 %v983, %v1144
  %v1195 = vmax.f32 %v986, %v1147
  %v1196 = vmax.f32 %v991, %v1152
  %v1197 = vmax.f32 %v994, %v1155
  %v1198 = vmax.f32 %v999, %v1160
  %v1199 = vmax.f32 %v1002, %v1163
  %v1200 = vmax.f32 %v1007, %v1168
  %v1201 = vmax.f32 %v1010, %v1171
  %v1202 = vmax.f32 %v1015, %v1176
  %v1203 = vmax.f32 %v1018, %v1179
  %v1204 = vmax.f32 %v1023, %v1184
  %v1205 = vmax.f32 %v1026, %v1187
  %v1206 = vpack.c.bf16 %v1191, %v1190
  %v1207 = vpack.c.bf16 %v1193, %v1192
  %v1208 = vpack.c.bf16 %v1195, %v1194
  %v1209 = vpack.c.bf16 %v1197, %v1196
  %v1210 = vpack.c.bf16 %v1199, %v1198
  %v1211 = vpack.c.bf16 %v1201, %v1200
  %v1212 = vpack.c.bf16 %v1203, %v1202
  %v1213 = vpack.c.bf16 %v1205, %v1204
  %v1214 = vld [vmem:[%s4 + $0x100] sm:$0xf]
  %v1215 = vld [vmem:[%s4 + $0x104] sm:$0xf]
  %v1216 = vld [vmem:[%s4 + $0x108] sm:$0xf]
  %v1217 = vld [vmem:[%s4 + $0x10c] sm:$0xf]
  %v1218 = vld [vmem:[%s4 + $0x110] sm:$0xf]
  %v1219 = vld [vmem:[%s4 + $0x114] sm:$0xf]
  %v1220 = vld [vmem:[%s4 + $0x118] sm:$0xf]
  %v1221 = vld [vmem:[%s4 + $0x11c] sm:$0xf]
  %v1222 = vld [vmem:[%s4 + $0x120] sm:$0xf]
  %v1223 = vld [vmem:[%s4 + $0x124] sm:$0xf]
  %v1224 = vld [vmem:[%s4 + $0x128] sm:$0xf]
  %v1225 = vld [vmem:[%s4 + $0x12c] sm:$0xf]
  %v1226 = vld [vmem:[%s4 + $0x130] sm:$0xf]
  %v1227 = vld [vmem:[%s4 + $0x134] sm:$0xf]
  %v1228 = vld [vmem:[%s4 + $0x138] sm:$0xf]
  %v1229 = vld [vmem:[%s4 + $0x13c] sm:$0xf]
  %v1246 = vunpack.c.l.b16 %v1214
  %v1247 = vunpack.c.l.b16 %v1215
  %v1248 = vunpack.c.l.b16 %v1216
  %v1249 = vunpack.c.l.b16 %v1217
  %v1250 = vunpack.c.l.b16 %v1218
  %v1251 = vunpack.c.l.b16 %v1219
  %v1252 = vunpack.c.l.b16 %v1220
  %v1253 = vunpack.c.l.b16 %v1221
  %v1254 = vunpack.c.l.b16 %v1222
  %v1255 = vunpack.c.l.b16 %v1223
  %v1256 = vunpack.c.l.b16 %v1224
  %v1257 = vunpack.c.l.b16 %v1225
  %v1258 = vunpack.c.l.b16 %v1226
  %v1259 = vunpack.c.l.b16 %v1227
  %v1260 = vunpack.c.l.b16 %v1228
  %v1261 = vunpack.c.l.b16 %v1229
  %v1262 = vpack.c.b16 %v1247, %v1246
  %v1263 = vpack.c.b16 %v1249, %v1248
  %v1264 = vpack.c.b16 %v1251, %v1250
  %v1265 = vpack.c.b16 %v1253, %v1252
  %v1266 = vpack.c.b16 %v1255, %v1254
  %v1267 = vpack.c.b16 %v1257, %v1256
  %v1268 = vpack.c.b16 %v1259, %v1258
  %v1269 = vpack.c.b16 %v1261, %v1260
  %1278 = vmatprep.subr.bf16.mxu0 0
  %1279 = vmatpush1.bf16.msra.mxu0 %v1206
  %1280 = vmatprep.subr.bf16.mxu0 0
  %1281 = vmatpush1.bf16.msra.mxu0 %v1207
  %1282 = vmatprep.subr.bf16.mxu0 0
  %1283 = vmatpush1.bf16.msra.mxu0 %v1208
  %1284 = vmatprep.subr.bf16.mxu0 0
  %1285 = vmatpush1.bf16.msra.mxu0 %v1209
  %1286 = vmatprep.subr.bf16.mxu0 0
  %1287 = vmatpush1.bf16.msra.mxu0 %v1210
  %1288 = vmatprep.subr.bf16.mxu0 0
  %1289 = vmatpush1.bf16.msra.mxu0 %v1211
  %1290 = vmatprep.subr.bf16.mxu0 0
  %1291 = vmatpush1.bf16.msra.mxu0 %v1212
  %1292 = vmatprep.subr.bf16.mxu0 0
  %1293 = vmatpush1.bf16.msra.mxu0 %v1213
  %1294 = vmatprep.subr.bf16.mxu0 0
  %1295 = vmatpush1.bf16.msra.mxu0 0
  %1296 = vmatprep.subr.bf16.mxu0 0
  %1297 = vmatpush1.bf16.msra.mxu0 0
  %1298 = vmatprep.subr.bf16.mxu0 0
  %1299 = vmatpush1.bf16.msra.mxu0 0
  %1300 = vmatprep.subr.bf16.mxu0 0
  %1301 = vmatpush1.bf16.msra.mxu0 0
  %1302 = vmatprep.subr.bf16.mxu0 0
  %1303 = vmatpush1.bf16.msra.mxu0 0
  %1304 = vmatprep.subr.bf16.mxu0 0
  %1305 = vmatpush1.bf16.msra.mxu0 0
  %1306 = vmatprep.subr.bf16.mxu0 0
  %1307 = vmatpush1.bf16.msra.mxu0 0
  %1308 = vmatprep.subr.bf16.mxu0 0
  %1309 = vmatpush1.bf16.msra.mxu0 0
  %1310 = vmatprep.mubr.bf16.mxu0 0
  %1311 = vmatmul.mubr.bf16.gmra.mrb[0].mxu0 %v1262
  %v1312 = vpop.f32.mrb[0].mxu0
  %v1313 = vadd.f32 0.0, %v1312
  %v1314 = vpop.f32.mrb[0].mxu0
  %v1315 = vpop.f32.mrb[0].mxu0
  %v1316 = vadd.f32 0.0, %v1315
  %v1317 = vpop.f32.mrb[0].mxu0
  %1318 = vmatprep.mubr.bf16.mxu0 0
  %1319 = vmatmul.mubr.bf16.gmra.mrb[0].mxu0 %v1263
  %v1320 = vpop.f32.mrb[0].mxu0
  %v1321 = vadd.f32 0.0, %v1320
  %v1322 = vpop.f32.mrb[0].mxu0
  %v1323 = vpop.f32.mrb[0].mxu0
  %v1324 = vadd.f32 0.0, %v1323
  %v1325 = vpop.f32.mrb[0].mxu0
  %1326 = vmatprep.mubr.bf16.mxu0 0
  %1327 = vmatmul.mubr.bf16.gmra.mrb[0].mxu0 %v1264
  %v1328 = vpop.f32.mrb[0].mxu0
  %v1329 = vadd.f32 0.0, %v1328
  %v1330 = vpop.f32.mrb[0].mxu0
  %v1331 = vpop.f32.mrb[0].mxu0
  %v1332 = vadd.f32 0.0, %v1331
  %v1333 = vpop.f32.mrb[0].mxu0
  %1334 = vmatprep.mubr.bf16.mxu0 0
  %1335 = vmatmul.mubr.bf16.gmra.mrb[0].mxu0 %v1265
  %v1336 = vpop.f32.mrb[0].mxu0
  %v1337 = vadd.f32 0.0, %v1336
  %v1338 = vpop.f32.mrb[0].mxu0
  %v1339 = vpop.f32.mrb[0].mxu0
  %v1340 = vadd.f32 0.0, %v1339
  %v1341 = vpop.f32.mrb[0].mxu0
  %1342 = vmatprep.mubr.bf16.mxu0 0
  %1343 = vmatmul.mubr.bf16.gmra.mrb[0].mxu0 %v1266
  %v1344 = vpop.f32.mrb[0].mxu0
  %v1345 = vadd.f32 0.0, %v1344
  %v1346 = vpop.f32.mrb[0].mxu0
  %v1347 = vpop.f32.mrb[0].mxu0
  %v1348 = vadd.f32 0.0, %v1347
  %v1349 = vpop.f32.mrb[0].mxu0
  %1350 = vmatprep.mubr.bf16.mxu0 0
  %1351 = vmatmul.mubr.bf16.gmra.mrb[0].mxu0 %v1267
  %v1352 = vpop.f32.mrb[0].mxu0
  %v1353 = vadd.f32 0.0, %v1352
  %v1354 = vpop.f32.mrb[0].mxu0
  %v1355 = vpop.f32.mrb[0].mxu0
  %v1356 = vadd.f32 0.0, %v1355
  %v1357 = vpop.f32.mrb[0].mxu0
  %1358 = vmatprep.mubr.bf16.mxu0 0
  %1359 = vmatmul.mubr.bf16.gmra.mrb[0].mxu0 %v1268
  %v1360 = vpop.f32.mrb[0].mxu0
  %v1361 = vadd.f32 0.0, %v1360
  %v1362 = vpop.f32.mrb[0].mxu0
  %v1363 = vpop.f32.mrb[0].mxu0
  %v1364 = vadd.f32 0.0, %v1363
  %v1365 = vpop.f32.mrb[0].mxu0
  %1366 = vmatprep.mubr.bf16.mxu0 0
  %1367 = vmatmul.mubr.bf16.gmra.mrb[0].mxu0 %v1269
  %v1368 = vpop.f32.mrb[0].mxu0
  %v1369 = vadd.f32 0.0, %v1368
  %v1370 = vpop.f32.mrb[0].mxu0
  %v1371 = vpop.f32.mrb[0].mxu0
  %v1372 = vadd.f32 0.0, %v1371
  %v1373 = vpop.f32.mrb[0].mxu0
  %1374 = vdwg.mxu0
  %v1375 = vpack.c.bf16 %v1316, %v1313
  %v1376 = vpack.c.bf16 %v1324, %v1321
  %v1377 = vpack.c.bf16 %v1332, %v1329
  %v1378 = vpack.c.bf16 %v1340, %v1337
  %v1379 = vpack.c.bf16 %v1348, %v1345
  %v1380 = vpack.c.bf16 %v1356, %v1353
  %v1381 = vpack.c.bf16 %v1364, %v1361
  %v1382 = vpack.c.bf16 %v1372, %v1369
  %v1383 = vld [vmem:[%s4 + $0x140] sm:$0xf]
  %v1384 = vld [vmem:[%s4 + $0x144] sm:$0xf]
  %v1385 = vld [vmem:[%s4 + $0x148] sm:$0xf]
  %v1386 = vld [vmem:[%s4 + $0x14c] sm:$0xf]
  %v1387 = vld [vmem:[%s4 + $0x150] sm:$0xf]
  %v1388 = vld [vmem:[%s4 + $0x154] sm:$0xf]
  %v1389 = vld [vmem:[%s4 + $0x158] sm:$0xf]
  %v1390 = vld [vmem:[%s4 + $0x15c] sm:$0xf]
  %v1391 = vld [vmem:[%s4 + $0x160] sm:$0xf]
  %v1392 = vld [vmem:[%s4 + $0x164] sm:$0xf]
  %v1393 = vld [vmem:[%s4 + $0x168] sm:$0xf]
  %v1394 = vld [vmem:[%s4 + $0x16c] sm:$0xf]
  %v1395 = vld [vmem:[%s4 + $0x170] sm:$0xf]
  %v1396 = vld [vmem:[%s4 + $0x174] sm:$0xf]
  %v1397 = vld [vmem:[%s4 + $0x178] sm:$0xf]
  %v1398 = vld [vmem:[%s4 + $0x17c] sm:$0xf]
  %v1415 = vunpack.c.l.b16 %v1383
  %v1416 = vunpack.c.l.b16 %v1384
  %v1417 = vunpack.c.l.b16 %v1385
  %v1418 = vunpack.c.l.b16 %v1386
  %v1419 = vunpack.c.l.b16 %v1387
  %v1420 = vunpack.c.l.b16 %v1388
  %v1421 = vunpack.c.l.b16 %v1389
  %v1422 = vunpack.c.l.b16 %v1390
  %v1423 = vunpack.c.l.b16 %v1391
  %v1424 = vunpack.c.l.b16 %v1392
  %v1425 = vunpack.c.l.b16 %v1393
  %v1426 = vunpack.c.l.b16 %v1394
  %v1427 = vunpack.c.l.b16 %v1395
  %v1428 = vunpack.c.l.b16 %v1396
  %v1429 = vunpack.c.l.b16 %v1397
  %v1430 = vunpack.c.l.b16 %v1398
  %v1431 = vpack.c.b16 %v1416, %v1415
  %v1432 = vpack.c.b16 %v1418, %v1417
  %v1433 = vpack.c.b16 %v1420, %v1419
  %v1434 = vpack.c.b16 %v1422, %v1421
  %v1435 = vpack.c.b16 %v1424, %v1423
  %v1436 = vpack.c.b16 %v1426, %v1425
  %v1437 = vpack.c.b16 %v1428, %v1427
  %v1438 = vpack.c.b16 %v1430, %v1429
  %1447 = vmatprep.subr.bf16.mxu0 0
  %1448 = vmatpush1.bf16.msra.mxu0 %v1206
  %1449 = vmatprep.subr.bf16.mxu0 0
  %1450 = vmatpush1.bf16.msra.mxu0 %v1207
  %1451 = vmatprep.subr.bf16.mxu0 0
  %1452 = vmatpush1.bf16.msra.mxu0 %v1208
  %1453 = vmatprep.subr.bf16.mxu0 0
  %1454 = vmatpush1.bf16.msra.mxu0 %v1209
  %1455 = vmatprep.subr.bf16.mxu0 0
  %1456 = vmatpush1.bf16.msra.mxu0 %v1210
  %1457 = vmatprep.subr.bf16.mxu0 0
  %1458 = vmatpush1.bf16.msra.mxu0 %v1211
  %1459 = vmatprep.subr.bf16.mxu0 0
  %1460 = vmatpush1.bf16.msra.mxu0 %v1212
  %1461 = vmatprep.subr.bf16.mxu0 0
  %1462 = vmatpush1.bf16.msra.mxu0 %v1213
  %1463 = vmatprep.subr.bf16.mxu0 0
  %1464 = vmatpush1.bf16.msra.mxu0 0
  %1465 = vmatprep.subr.bf16.mxu0 0
  %1466 = vmatpush1.bf16.msra.mxu0 0
  %1467 = vmatprep.subr.bf16.mxu0 0
  %1468 = vmatpush1.bf16.msra.mxu0 0
  %1469 = vmatprep.subr.bf16.mxu0 0
  %1470 = vmatpush1.bf16.msra.mxu0 0
  %1471 = vmatprep.subr.bf16.mxu0 0
  %1472 = vmatpush1.bf16.msra.mxu0 0
  %1473 = vmatprep.subr.bf16.mxu0 0
  %1474 = vmatpush1.bf16.msra.mxu0 0
  %1475 = vmatprep.subr.bf16.mxu0 0
  %1476 = vmatpush1.bf16.msra.mxu0 0
  %1477 = vmatprep.subr.bf16.mxu0 0
  %1478 = vmatpush1.bf16.msra.mxu0 0
  %1479 = vmatprep.mubr.bf16.mxu0 0
  %1480 = vmatmul.mubr.bf16.gmra.mrb[0].mxu0 %v1431
  %v1481 = vpop.f32.mrb[0].mxu0
  %v1482 = vadd.f32 0.0, %v1481
  %v1483 = vpop.f32.mrb[0].mxu0
  %v1484 = vpop.f32.mrb[0].mxu0
  %v1485 = vadd.f32 0.0, %v1484
  %v1486 = vpop.f32.mrb[0].mxu0
  %1487 = vmatprep.mubr.bf16.mxu0 0
  %1488 = vmatmul.mubr.bf16.gmra.mrb[0].mxu0 %v1432
  %v1489 = vpop.f32.mrb[0].mxu0
  %v1490 = vadd.f32 0.0, %v1489
  %v1491 = vpop.f32.mrb[0].mxu0
  %v1492 = vpop.f32.mrb[0].mxu0
  %v1493 = vadd.f32 0.0, %v1492
  %v1494 = vpop.f32.mrb[0].mxu0
  %1495 = vmatprep.mubr.bf16.mxu0 0
  %1496 = vmatmul.mubr.bf16.gmra.mrb[0].mxu0 %v1433
  %v1497 = vpop.f32.mrb[0].mxu0
  %v1498 = vadd.f32 0.0, %v1497
  %v1499 = vpop.f32.mrb[0].mxu0
  %v1500 = vpop.f32.mrb[0].mxu0
  %v1501 = vadd.f32 0.0, %v1500
  %v1502 = vpop.f32.mrb[0].mxu0
  %1503 = vmatprep.mubr.bf16.mxu0 0
  %1504 = vmatmul.mubr.bf16.gmra.mrb[0].mxu0 %v1434
  %v1505 = vpop.f32.mrb[0].mxu0
  %v1506 = vadd.f32 0.0, %v1505
  %v1507 = vpop.f32.mrb[0].mxu0
  %v1508 = vpop.f32.mrb[0].mxu0
  %v1509 = vadd.f32 0.0, %v1508
  %v1510 = vpop.f32.mrb[0].mxu0
  %1511 = vmatprep.mubr.bf16.mxu0 0
  %1512 = vmatmul.mubr.bf16.gmra.mrb[0].mxu0 %v1435
  %v1513 = vpop.f32.mrb[0].mxu0
  %v1514 = vadd.f32 0.0, %v1513
  %v1515 = vpop.f32.mrb[0].mxu0
  %v1516 = vpop.f32.mrb[0].mxu0
  %v1517 = vadd.f32 0.0, %v1516
  %v1518 = vpop.f32.mrb[0].mxu0
  %1519 = vmatprep.mubr.bf16.mxu0 0
  %1520 = vmatmul.mubr.bf16.gmra.mrb[0].mxu0 %v1436
  %v1521 = vpop.f32.mrb[0].mxu0
  %v1522 = vadd.f32 0.0, %v1521
  %v1523 = vpop.f32.mrb[0].mxu0
  %v1524 = vpop.f32.mrb[0].mxu0
  %v1525 = vadd.f32 0.0, %v1524
  %v1526 = vpop.f32.mrb[0].mxu0
  %1527 = vmatprep.mubr.bf16.mxu0 0
  %1528 = vmatmul.mubr.bf16.gmra.mrb[0].mxu0 %v1437
  %v1529 = vpop.f32.mrb[0].mxu0
  %v1530 = vadd.f32 0.0, %v1529
  %v1531 = vpop.f32.mrb[0].mxu0
  %v1532 = vpop.f32.mrb[0].mxu0
  %v1533 = vadd.f32 0.0, %v1532
  %v1534 = vpop.f32.mrb[0].mxu0
  %1535 = vmatprep.mubr.bf16.mxu0 0
  %1536 = vmatmul.mubr.bf16.gmra.mrb[0].mxu0 %v1438
  %v1537 = vpop.f32.mrb[0].mxu0
  %v1538 = vadd.f32 0.0, %v1537
  %v1539 = vpop.f32.mrb[0].mxu0
  %v1540 = vpop.f32.mrb[0].mxu0
  %v1541 = vadd.f32 0.0, %v1540
  %v1542 = vpop.f32.mrb[0].mxu0
  %1543 = vdwg.mxu0
  %v1544 = vpack.c.bf16 %v1485, %v1482
  %v1545 = vpack.c.bf16 %v1493, %v1490
  %v1546 = vpack.c.bf16 %v1501, %v1498
  %v1547 = vpack.c.bf16 %v1509, %v1506
  %v1548 = vpack.c.bf16 %v1517, %v1514
  %v1549 = vpack.c.bf16 %v1525, %v1522
  %v1550 = vpack.c.bf16 %v1533, %v1530
  %v1551 = vpack.c.bf16 %v1541, %v1538
  %v1552 = vld [vmem:[%s2 + $0x30] sm:$0xf]
  %v1553 = vld [vmem:[%s2 + $0x38] sm:$0xf]
  %v1554 = vld [vmem:[%s2 + $0x40] sm:$0xf]
  %v1555 = vld [vmem:[%s2 + $0x48] sm:$0xf]
  %v1556 = vld [vmem:[%s2 + $0x50] sm:$0xf]
  %v1557 = vld [vmem:[%s2 + $0x58] sm:$0xf]
  %v1558 = vld [vmem:[%s2 + $0x60] sm:$0xf]
  %v1559 = vld [vmem:[%s2 + $0x68] sm:$0xf]
  %v1560 = vld [vmem:[%s2 + $0x70] sm:$0xf]
  %v1561 = vld [vmem:[%s2 + $0x78] sm:$0xf]
  %v1562 = vld [vmem:[%s2 + $0x80] sm:$0xf]
  %v1563 = vld [vmem:[%s2 + $0x88] sm:$0xf]
  %v1564 = vld [vmem:[%s2 + $0x90] sm:$0xf]
  %v1565 = vld [vmem:[%s2 + $0x98] sm:$0xf]
  %v1566 = vld [vmem:[%s2 + $0xa0] sm:$0xf]
  %v1567 = vld [vmem:[%s2 + $0xa8] sm:$0xf]
  %v1568 = vld [vmem:[%s2 + $0xb0] sm:$0xf]
  %v1569 = vld [vmem:[%s2 + $0xb8] sm:$0xf]
  %v1570 = vld [vmem:[%s2 + $0xc0] sm:$0xf]
  %v1571 = vld [vmem:[%s2 + $0xc8] sm:$0xf]
  %v1572 = vld [vmem:[%s2 + $0xd0] sm:$0xf]
  %v1573 = vld [vmem:[%s2 + $0xd8] sm:$0xf]
  %v1574 = vld [vmem:[%s2 + $0xe0] sm:$0xf]
  %v1575 = vld [vmem:[%s2 + $0xe8] sm:$0xf]
  %v1576 = vld [vmem:[%s2 + $0xf0] sm:$0xf]
  %v1577 = vld [vmem:[%s2 + $0xf8] sm:$0xf]
  %v1578 = vld [vmem:[%s2 + $0x100] sm:$0xf]
  %v1579 = vld [vmem:[%s2 + $0x108] sm:$0xf]
  %v1580 = vld [vmem:[%s2 + $0x110] sm:$0xf]
  %v1581 = vld [vmem:[%s2 + $0x118] sm:$0xf]
  %v1582 = vld [vmem:[%s2 + $0x120] sm:$0xf]
  %v1583 = vld [vmem:[%s2 + $0x128] sm:$0xf]
  %v1600 = vunpack.c.l.b16 %v1568
  %v1601 = vunpack.c.l.b16 %v1569
  %v1602 = vunpack.c.l.b16 %v1570
  %v1603 = vunpack.c.l.b16 %v1571
  %v1604 = vunpack.c.l.b16 %v1572
  %v1605 = vunpack.c.l.b16 %v1573
  %v1606 = vunpack.c.l.b16 %v1574
  %v1607 = vunpack.c.l.b16 %v1575
  %v1608 = vunpack.c.l.b16 %v1576
  %v1609 = vunpack.c.l.b16 %v1577
  %v1610 = vunpack.c.l.b16 %v1578
  %v1611 = vunpack.c.l.b16 %v1579
  %v1612 = vunpack.c.l.b16 %v1580
  %v1613 = vunpack.c.l.b16 %v1581
  %v1614 = vunpack.c.l.b16 %v1582
  %v1615 = vunpack.c.l.b16 %v1583
  %v1616 = vpack.c.b16 %v1601, %v1600
  %v1617 = vpack.c.b16 %v1603, %v1602
  %v1618 = vpack.c.b16 %v1605, %v1604
  %v1619 = vpack.c.b16 %v1607, %v1606
  %v1620 = vpack.c.b16 %v1609, %v1608
  %v1621 = vpack.c.b16 %v1611, %v1610
  %v1622 = vpack.c.b16 %v1613, %v1612
  %v1623 = vpack.c.b16 %v1615, %v1614
  %1632 = vmatprep.subr.bf16.mxu0 0
  %1633 = vmatpush1.bf16.msra.mxu0 %v1616
  %1634 = vmatprep.subr.bf16.mxu0 0
  %1635 = vmatpush1.bf16.msra.mxu0 %v1617
  %1636 = vmatprep.subr.bf16.mxu0 0
  %1637 = vmatpush1.bf16.msra.mxu0 %v1618
  %1638 = vmatprep.subr.bf16.mxu0 0
  %1639 = vmatpush1.bf16.msra.mxu0 %v1619
  %1640 = vmatprep.subr.bf16.mxu0 0
  %1641 = vmatpush1.bf16.msra.mxu0 %v1620
  %1642 = vmatprep.subr.bf16.mxu0 0
  %1643 = vmatpush1.bf16.msra.mxu0 %v1621
  %1644 = vmatprep.subr.bf16.mxu0 0
  %1645 = vmatpush1.bf16.msra.mxu0 %v1622
  %1646 = vmatprep.subr.bf16.mxu0 0
  %1647 = vmatpush1.bf16.msra.mxu0 %v1623
  %1648 = vmatprep.subr.bf16.mxu0 0
  %1649 = vmatpush1.bf16.msra.mxu0 0
  %1650 = vmatprep.subr.bf16.mxu0 0
  %1651 = vmatpush1.bf16.msra.mxu0 0
  %1652 = vmatprep.subr.bf16.mxu0 0
  %1653 = vmatpush1.bf16.msra.mxu0 0
  %1654 = vmatprep.subr.bf16.mxu0 0
  %1655 = vmatpush1.bf16.msra.mxu0 0
  %1656 = vmatprep.subr.bf16.mxu0 0
  %1657 = vmatpush1.bf16.msra.mxu0 0
  %1658 = vmatprep.subr.bf16.mxu0 0
  %1659 = vmatpush1.bf16.msra.mxu0 0
  %1660 = vmatprep.subr.bf16.mxu0 0
  %1661 = vmatpush1.bf16.msra.mxu0 0
  %1662 = vmatprep.subr.bf16.mxu0 0
  %1663 = vmatpush1.bf16.msra.mxu0 0
  %1664 = vmatprep.mubr.bf16.mxu0 0
  %1665 = vmatmul.mubr.bf16.gmra.mrb[0].mxu0 %v1206
  %v1666 = vpop.f32.mrb[0].mxu0
  %v1667 = vadd.f32 0.0, %v1666
  %v1668 = vpop.f32.mrb[0].mxu0
  %v1669 = vpop.f32.mrb[0].mxu0
  %v1670 = vadd.f32 0.0, %v1669
  %v1671 = vpop.f32.mrb[0].mxu0
  %1672 = vmatprep.mubr.bf16.mxu0 0
  %1673 = vmatmul.mubr.bf16.gmra.mrb[0].mxu0 %v1207
  %v1674 = vpop.f32.mrb[0].mxu0
  %v1675 = vadd.f32 0.0, %v1674
  %v1676 = vpop.f32.mrb[0].mxu0
  %v1677 = vpop.f32.mrb[0].mxu0
  %v1678 = vadd.f32 0.0, %v1677
  %v1679 = vpop.f32.mrb[0].mxu0
  %1680 = vmatprep.mubr.bf16.mxu0 0
  %1681 = vmatmul.mubr.bf16.gmra.mrb[0].mxu0 %v1208
  %v1682 = vpop.f32.mrb[0].mxu0
  %v1683 = vadd.f32 0.0, %v1682
  %v1684 = vpop.f32.mrb[0].mxu0
  %v1685 = vpop.f32.mrb[0].mxu0
  %v1686 = vadd.f32 0.0, %v1685
  %v1687 = vpop.f32.mrb[0].mxu0
  %1688 = vmatprep.mubr.bf16.mxu0 0
  %1689 = vmatmul.mubr.bf16.gmra.mrb[0].mxu0 %v1209
  %v1690 = vpop.f32.mrb[0].mxu0
  %v1691 = vadd.f32 0.0, %v1690
  %v1692 = vpop.f32.mrb[0].mxu0
  %v1693 = vpop.f32.mrb[0].mxu0
  %v1694 = vadd.f32 0.0, %v1693
  %v1695 = vpop.f32.mrb[0].mxu0
  %1696 = vmatprep.mubr.bf16.mxu0 0
  %1697 = vmatmul.mubr.bf16.gmra.mrb[0].mxu0 %v1210
  %v1698 = vpop.f32.mrb[0].mxu0
  %v1699 = vadd.f32 0.0, %v1698
  %v1700 = vpop.f32.mrb[0].mxu0
  %v1701 = vpop.f32.mrb[0].mxu0
  %v1702 = vadd.f32 0.0, %v1701
  %v1703 = vpop.f32.mrb[0].mxu0
  %1704 = vmatprep.mubr.bf16.mxu0 0
  %1705 = vmatmul.mubr.bf16.gmra.mrb[0].mxu0 %v1211
  %v1706 = vpop.f32.mrb[0].mxu0
  %v1707 = vadd.f32 0.0, %v1706
  %v1708 = vpop.f32.mrb[0].mxu0
  %v1709 = vpop.f32.mrb[0].mxu0
  %v1710 = vadd.f32 0.0, %v1709
  %v1711 = vpop.f32.mrb[0].mxu0
  %1712 = vmatprep.mubr.bf16.mxu0 0
  %1713 = vmatmul.mubr.bf16.gmra.mrb[0].mxu0 %v1212
  %v1714 = vpop.f32.mrb[0].mxu0
  %v1715 = vadd.f32 0.0, %v1714
  %v1716 = vpop.f32.mrb[0].mxu0
  %v1717 = vpop.f32.mrb[0].mxu0
  %v1718 = vadd.f32 0.0, %v1717
  %v1719 = vpop.f32.mrb[0].mxu0
  %1720 = vmatprep.mubr.bf16.mxu0 0
  %1721 = vmatmul.mubr.bf16.gmra.mrb[0].mxu0 %v1213
  %v1722 = vpop.f32.mrb[0].mxu0
  %v1723 = vadd.f32 0.0, %v1722
  %v1724 = vpop.f32.mrb[0].mxu0
  %v1725 = vpop.f32.mrb[0].mxu0
  %v1726 = vadd.f32 0.0, %v1725
  %v1727 = vpop.f32.mrb[0].mxu0
  %1728 = vdwg.mxu0
  %v1745 = vunpack.c.l.b16 %v1552
  %v1746 = vunpack.c.l.b16 %v1553
  %v1747 = vunpack.c.l.b16 %v1554
  %v1748 = vunpack.c.l.b16 %v1555
  %v1749 = vunpack.c.l.b16 %v1556
  %v1750 = vunpack.c.l.b16 %v1557
  %v1751 = vunpack.c.l.b16 %v1558
  %v1752 = vunpack.c.l.b16 %v1559
  %v1753 = vunpack.c.l.b16 %v1560
  %v1754 = vunpack.c.l.b16 %v1561
  %v1755 = vunpack.c.l.b16 %v1562
  %v1756 = vunpack.c.l.b16 %v1563
  %v1757 = vunpack.c.l.b16 %v1564
  %v1758 = vunpack.c.l.b16 %v1565
  %v1759 = vunpack.c.l.b16 %v1566
  %v1760 = vunpack.c.l.b16 %v1567
  %v1761 = vpack.c.b16 %v1746, %v1745
  %v1762 = vpack.c.b16 %v1748, %v1747
  %v1763 = vpack.c.b16 %v1750, %v1749
  %v1764 = vpack.c.b16 %v1752, %v1751
  %v1765 = vpack.c.b16 %v1754, %v1753
  %v1766 = vpack.c.b16 %v1756, %v1755
  %v1767 = vpack.c.b16 %v1758, %v1757
  %v1768 = vpack.c.b16 %v1760, %v1759
  %1777 = vmatprep.subr.bf16.mxu0 0
  %1778 = vmatpush1.bf16.msra.mxu0 %v1761
  %1779 = vmatprep.subr.bf16.mxu0 0
  %1780 = vmatpush1.bf16.msra.mxu0 %v1762
  %1781 = vmatprep.subr.bf16.mxu0 0
  %1782 = vmatpush1.bf16.msra.mxu0 %v1763
  %1783 = vmatprep.subr.bf16.mxu0 0
  %1784 = vmatpush1.bf16.msra.mxu0 %v1764
  %1785 = vmatprep.subr.bf16.mxu0 0
  %1786 = vmatpush1.bf16.msra.mxu0 %v1765
  %1787 = vmatprep.subr.bf16.mxu0 0
  %1788 = vmatpush1.bf16.msra.mxu0 %v1766
  %1789 = vmatprep.subr.bf16.mxu0 0
  %1790 = vmatpush1.bf16.msra.mxu0 %v1767
  %1791 = vmatprep.subr.bf16.mxu0 0
  %1792 = vmatpush1.bf16.msra.mxu0 %v1768
  %1793 = vmatprep.subr.bf16.mxu0 0
  %1794 = vmatpush1.bf16.msra.mxu0 0
  %1795 = vmatprep.subr.bf16.mxu0 0
  %1796 = vmatpush1.bf16.msra.mxu0 0
  %1797 = vmatprep.subr.bf16.mxu0 0
  %1798 = vmatpush1.bf16.msra.mxu0 0
  %1799 = vmatprep.subr.bf16.mxu0 0
  %1800 = vmatpush1.bf16.msra.mxu0 0
  %1801 = vmatprep.subr.bf16.mxu0 0
  %1802 = vmatpush1.bf16.msra.mxu0 0
  %1803 = vmatprep.subr.bf16.mxu0 0
  %1804 = vmatpush1.bf16.msra.mxu0 0
  %1805 = vmatprep.subr.bf16.mxu0 0
  %1806 = vmatpush1.bf16.msra.mxu0 0
  %1807 = vmatprep.subr.bf16.mxu0 0
  %1808 = vmatpush1.bf16.msra.mxu0 0
  %1809 = vmatprep.mubr.bf16.mxu0 0
  %1810 = vmatmul.mubr.bf16.gmra.mrb[0].mxu0 %v1375
  %v1811 = vpop.f32.mrb[0].mxu0
  %v1812 = vadd.f32 %v1667, %v1811
  %v1813 = vpop.f32.mrb[0].mxu0
  %v1814 = vpop.f32.mrb[0].mxu0
  %v1815 = vadd.f32 %v1670, %v1814
  %v1816 = vpop.f32.mrb[0].mxu0
  %1817 = vmatprep.mubr.bf16.mxu0 0
  %1818 = vmatmul.mubr.bf16.gmra.mrb[0].mxu0 %v1376
  %v1819 = vpop.f32.mrb[0].mxu0
  %v1820 = vadd.f32 %v1675, %v1819
  %v1821 = vpop.f32.mrb[0].mxu0
  %v1822 = vpop.f32.mrb[0].mxu0
  %v1823 = vadd.f32 %v1678, %v1822
  %v1824 = vpop.f32.mrb[0].mxu0
  %1825 = vmatprep.mubr.bf16.mxu0 0
  %1826 = vmatmul.mubr.bf16.gmra.mrb[0].mxu0 %v1377
  %v1827 = vpop.f32.mrb[0].mxu0
  %v1828 = vadd.f32 %v1683, %v1827
  %v1829 = vpop.f32.mrb[0].mxu0
  %v1830 = vpop.f32.mrb[0].mxu0
  %v1831 = vadd.f32 %v1686, %v1830
  %v1832 = vpop.f32.mrb[0].mxu0
  %1833 = vmatprep.mubr.bf16.mxu0 0
  %1834 = vmatmul.mubr.bf16.gmra.mrb[0].mxu0 %v1378
  %v1835 = vpop.f32.mrb[0].mxu0
  %v1836 = vadd.f32 %v1691, %v1835
  %v1837 = vpop.f32.mrb[0].mxu0
  %v1838 = vpop.f32.mrb[0].mxu0
  %v1839 = vadd.f32 %v1694, %v1838
  %v1840 = vpop.f32.mrb[0].mxu0
  %1841 = vmatprep.mubr.bf16.mxu0 0
  %1842 = vmatmul.mubr.bf16.gmra.mrb[0].mxu0 %v1379
  %v1843 = vpop.f32.mrb[0].mxu0
  %v1844 = vadd.f32 %v1699, %v1843
  %v1845 = vpop.f32.mrb[0].mxu0
  %v1846 = vpop.f32.mrb[0].mxu0
  %v1847 = vadd.f32 %v1702, %v1846
  %v1848 = vpop.f32.mrb[0].mxu0
  %1849 = vmatprep.mubr.bf16.mxu0 0
  %1850 = vmatmul.mubr.bf16.gmra.mrb[0].mxu0 %v1380
  %v1851 = vpop.f32.mrb[0].mxu0
  %v1852 = vadd.f32 %v1707, %v1851
  %v1853 = vpop.f32.mrb[0].mxu0
  %v1854 = vpop.f32.mrb[0].mxu0
  %v1855 = vadd.f32 %v1710, %v1854
  %v1856 = vpop.f32.mrb[0].mxu0
  %1857 = vmatprep.mubr.bf16.mxu0 0
  %1858 = vmatmul.mubr.bf16.gmra.mrb[0].mxu0 %v1381
  %v1859 = vpop.f32.mrb[0].mxu0
  %v1860 = vadd.f32 %v1715, %v1859
  %v1861 = vpop.f32.mrb[0].mxu0
  %v1862 = vpop.f32.mrb[0].mxu0
  %v1863 = vadd.f32 %v1718, %v1862
  %v1864 = vpop.f32.mrb[0].mxu0
  %1865 = vmatprep.mubr.bf16.mxu0 0
  %1866 = vmatmul.mubr.bf16.gmra.mrb[0].mxu0 %v1382
  %v1867 = vpop.f32.mrb[0].mxu0
  %v1868 = vadd.f32 %v1723, %v1867
  %v1869 = vpop.f32.mrb[0].mxu0
  %v1870 = vpop.f32.mrb[0].mxu0
  %v1871 = vadd.f32 %v1726, %v1870
  %v1872 = vpop.f32.mrb[0].mxu0
  %1873 = vdwg.mxu0
  %v1874 = vld [vmem:[%s2 + $0x130] sm:$0xf]
  %v1875 = vld [vmem:[%s2 + $0x138] sm:$0xf]
  %v1876 = vld [vmem:[%s2 + $0x140] sm:$0xf]
  %v1877 = vld [vmem:[%s2 + $0x148] sm:$0xf]
  %v1878 = vld [vmem:[%s2 + $0x150] sm:$0xf]
  %v1879 = vld [vmem:[%s2 + $0x158] sm:$0xf]
  %v1880 = vld [vmem:[%s2 + $0x160] sm:$0xf]
  %v1881 = vld [vmem:[%s2 + $0x168] sm:$0xf]
  %v1882 = vld [vmem:[%s2 + $0x170] sm:$0xf]
  %v1883 = vld [vmem:[%s2 + $0x178] sm:$0xf]
  %v1884 = vld [vmem:[%s2 + $0x180] sm:$0xf]
  %v1885 = vld [vmem:[%s2 + $0x188] sm:$0xf]
  %v1886 = vld [vmem:[%s2 + $0x190] sm:$0xf]
  %v1887 = vld [vmem:[%s2 + $0x198] sm:$0xf]
  %v1888 = vld [vmem:[%s2 + $0x1a0] sm:$0xf]
  %v1889 = vld [vmem:[%s2 + $0x1a8] sm:$0xf]
  %v1906 = vunpack.c.l.b16 %v1874
  %v1907 = vunpack.c.l.b16 %v1875
  %v1908 = vunpack.c.l.b16 %v1876
  %v1909 = vunpack.c.l.b16 %v1877
  %v1910 = vunpack.c.l.b16 %v1878
  %v1911 = vunpack.c.l.b16 %v1879
  %v1912 = vunpack.c.l.b16 %v1880
  %v1913 = vunpack.c.l.b16 %v1881
  %v1914 = vunpack.c.l.b16 %v1882
  %v1915 = vunpack.c.l.b16 %v1883
  %v1916 = vunpack.c.l.b16 %v1884
  %v1917 = vunpack.c.l.b16 %v1885
  %v1918 = vunpack.c.l.b16 %v1886
  %v1919 = vunpack.c.l.b16 %v1887
  %v1920 = vunpack.c.l.b16 %v1888
  %v1921 = vunpack.c.l.b16 %v1889
  %v1922 = vpack.c.b16 %v1907, %v1906
  %v1923 = vpack.c.b16 %v1909, %v1908
  %v1924 = vpack.c.b16 %v1911, %v1910
  %v1925 = vpack.c.b16 %v1913, %v1912
  %v1926 = vpack.c.b16 %v1915, %v1914
  %v1927 = vpack.c.b16 %v1917, %v1916
  %v1928 = vpack.c.b16 %v1919, %v1918
  %v1929 = vpack.c.b16 %v1921, %v1920
  %1938 = vmatprep.subr.bf16.mxu0 0
  %1939 = vmatpush1.bf16.msra.mxu0 %v1922
  %1940 = vmatprep.subr.bf16.mxu0 0
  %1941 = vmatpush1.bf16.msra.mxu0 %v1923
  %1942 = vmatprep.subr.bf16.mxu0 0
  %1943 = vmatpush1.bf16.msra.mxu0 %v1924
  %1944 = vmatprep.subr.bf16.mxu0 0
  %1945 = vmatpush1.bf16.msra.mxu0 %v1925
  %1946 = vmatprep.subr.bf16.mxu0 0
  %1947 = vmatpush1.bf16.msra.mxu0 %v1926
  %1948 = vmatprep.subr.bf16.mxu0 0
  %1949 = vmatpush1.bf16.msra.mxu0 %v1927
  %1950 = vmatprep.subr.bf16.mxu0 0
  %1951 = vmatpush1.bf16.msra.mxu0 %v1928
  %1952 = vmatprep.subr.bf16.mxu0 0
  %1953 = vmatpush1.bf16.msra.mxu0 %v1929
  %1954 = vmatprep.subr.bf16.mxu0 0
  %1955 = vmatpush1.bf16.msra.mxu0 0
  %1956 = vmatprep.subr.bf16.mxu0 0
  %1957 = vmatpush1.bf16.msra.mxu0 0
  %1958 = vmatprep.subr.bf16.mxu0 0
  %1959 = vmatpush1.bf16.msra.mxu0 0
  %1960 = vmatprep.subr.bf16.mxu0 0
  %1961 = vmatpush1.bf16.msra.mxu0 0
  %1962 = vmatprep.subr.bf16.mxu0 0
  %1963 = vmatpush1.bf16.msra.mxu0 0
  %1964 = vmatprep.subr.bf16.mxu0 0
  %1965 = vmatpush1.bf16.msra.mxu0 0
  %1966 = vmatprep.subr.bf16.mxu0 0
  %1967 = vmatpush1.bf16.msra.mxu0 0
  %1968 = vmatprep.subr.bf16.mxu0 0
  %1969 = vmatpush1.bf16.msra.mxu0 0
  %1970 = vmatprep.mubr.bf16.mxu0 0
  %1971 = vmatmul.mubr.bf16.gmra.mrb[0].mxu0 %v1544
  %v1972 = vpop.f32.mrb[0].mxu0
  %v1973 = vadd.f32 0.0, %v1972
  %v1974 = vpop.f32.mrb[0].mxu0
  %v1975 = vpop.f32.mrb[0].mxu0
  %v1976 = vadd.f32 0.0, %v1975
  %v1977 = vpop.f32.mrb[0].mxu0
  %1978 = vmatprep.mubr.bf16.mxu0 0
  %1979 = vmatmul.mubr.bf16.gmra.mrb[0].mxu0 %v1545
  %v1980 = vpop.f32.mrb[0].mxu0
  %v1981 = vadd.f32 0.0, %v1980
  %v1982 = vpop.f32.mrb[0].mxu0
  %v1983 = vpop.f32.mrb[0].mxu0
  %v1984 = vadd.f32 0.0, %v1983
  %v1985 = vpop.f32.mrb[0].mxu0
  %1986 = vmatprep.mubr.bf16.mxu0 0
  %1987 = vmatmul.mubr.bf16.gmra.mrb[0].mxu0 %v1546
  %v1988 = vpop.f32.mrb[0].mxu0
  %v1989 = vadd.f32 0.0, %v1988
  %v1990 = vpop.f32.mrb[0].mxu0
  %v1991 = vpop.f32.mrb[0].mxu0
  %v1992 = vadd.f32 0.0, %v1991
  %v1993 = vpop.f32.mrb[0].mxu0
  %1994 = vmatprep.mubr.bf16.mxu0 0
  %1995 = vmatmul.mubr.bf16.gmra.mrb[0].mxu0 %v1547
  %v1996 = vpop.f32.mrb[0].mxu0
  %v1997 = vadd.f32 0.0, %v1996
  %v1998 = vpop.f32.mrb[0].mxu0
  %v1999 = vpop.f32.mrb[0].mxu0
  %v2000 = vadd.f32 0.0, %v1999
  %v2001 = vpop.f32.mrb[0].mxu0
  %2002 = vmatprep.mubr.bf16.mxu0 0
  %2003 = vmatmul.mubr.bf16.gmra.mrb[0].mxu0 %v1548
  %v2004 = vpop.f32.mrb[0].mxu0
  %v2005 = vadd.f32 0.0, %v2004
  %v2006 = vpop.f32.mrb[0].mxu0
  %v2007 = vpop.f32.mrb[0].mxu0
  %v2008 = vadd.f32 0.0, %v2007
  %v2009 = vpop.f32.mrb[0].mxu0
  %2010 = vmatprep.mubr.bf16.mxu0 0
  %2011 = vmatmul.mubr.bf16.gmra.mrb[0].mxu0 %v1549
  %v2012 = vpop.f32.mrb[0].mxu0
  %v2013 = vadd.f32 0.0, %v2012
  %v2014 = vpop.f32.mrb[0].mxu0
  %v2015 = vpop.f32.mrb[0].mxu0
  %v2016 = vadd.f32 0.0, %v2015
  %v2017 = vpop.f32.mrb[0].mxu0
  %2018 = vmatprep.mubr.bf16.mxu0 0
  %2019 = vmatmul.mubr.bf16.gmra.mrb[0].mxu0 %v1550
  %v2020 = vpop.f32.mrb[0].mxu0
  %v2021 = vadd.f32 0.0, %v2020
  %v2022 = vpop.f32.mrb[0].mxu0
  %v2023 = vpop.f32.mrb[0].mxu0
  %v2024 = vadd.f32 0.0, %v2023
  %v2025 = vpop.f32.mrb[0].mxu0
  %2026 = vmatprep.mubr.bf16.mxu0 0
  %2027 = vmatmul.mubr.bf16.gmra.mrb[0].mxu0 %v1551
  %v2028 = vpop.f32.mrb[0].mxu0
  %v2029 = vadd.f32 0.0, %v2028
  %v2030 = vpop.f32.mrb[0].mxu0
  %v2031 = vpop.f32.mrb[0].mxu0
  %v2032 = vadd.f32 0.0, %v2031
  %v2033 = vpop.f32.mrb[0].mxu0
  %2034 = vdwg.mxu0
  %v2035 = vadd.f32 %v1812, %v1973
  %v2036 = vadd.f32 %v1815, %v1976
  %v2037 = vadd.f32 %v1820, %v1981
  %v2038 = vadd.f32 %v1823, %v1984
  %v2039 = vadd.f32 %v1828, %v1989
  %v2040 = vadd.f32 %v1831, %v1992
  %v2041 = vadd.f32 %v1836, %v1997
  %v2042 = vadd.f32 %v1839, %v2000
  %v2043 = vadd.f32 %v1844, %v2005
  %v2044 = vadd.f32 %v1847, %v2008
  %v2045 = vadd.f32 %v1852, %v2013
  %v2046 = vadd.f32 %v1855, %v2016
  %v2047 = vadd.f32 %v1860, %v2021
  %v2048 = vadd.f32 %v1863, %v2024
  %v2049 = vadd.f32 %v1868, %v2029
  %v2050 = vadd.f32 %v1871, %v2032
  %v2051 = vld [vmem:[%s3 + $0x1] ss:$0 sm:$0xff]
  %v2052 = vadd.f32 %v2035, %v2051
  %v2053 = vadd.f32 %v2036, %v2051
  %v2054 = vadd.f32 %v2037, %v2051
  %v2055 = vadd.f32 %v2038, %v2051
  %v2056 = vadd.f32 %v2039, %v2051
  %v2057 = vadd.f32 %v2040, %v2051
  %v2058 = vadd.f32 %v2041, %v2051
  %v2059 = vadd.f32 %v2042, %v2051
  %v2060 = vadd.f32 %v2043, %v2051
  %v2061 = vadd.f32 %v2044, %v2051
  %v2062 = vadd.f32 %v2045, %v2051
  %v2063 = vadd.f32 %v2046, %v2051
  %v2064 = vadd.f32 %v2047, %v2051
  %v2065 = vadd.f32 %v2048, %v2051
  %v2066 = vadd.f32 %v2049, %v2051
  %v2067 = vadd.f32 %v2050, %v2051
  %v2068 = vmax.f32 %v2052, 0.0
  %v2069 = vmax.f32 %v2053, 0.0
  %v2070 = vmax.f32 %v2054, 0.0
  %v2071 = vmax.f32 %v2055, 0.0
  %v2072 = vmax.f32 %v2056, 0.0
  %v2073 = vmax.f32 %v2057, 0.0
  %v2074 = vmax.f32 %v2058, 0.0
  %v2075 = vmax.f32 %v2059, 0.0
  %v2076 = vmax.f32 %v2060, 0.0
  %v2077 = vmax.f32 %v2061, 0.0
  %v2078 = vmax.f32 %v2062, 0.0
  %v2079 = vmax.f32 %v2063, 0.0
  %v2080 = vmax.f32 %v2064, 0.0
  %v2081 = vmax.f32 %v2065, 0.0
  %v2082 = vmax.f32 %v2066, 0.0
  %v2083 = vmax.f32 %v2067, 0.0
  %v2084 = vpack.c.bf16 %v2069, %v2068
  %v2085 = vpack.c.bf16 %v2071, %v2070
  %v2086 = vpack.c.bf16 %v2073, %v2072
  %v2087 = vpack.c.bf16 %v2075, %v2074
  %v2088 = vpack.c.bf16 %v2077, %v2076
  %v2089 = vpack.c.bf16 %v2079, %v2078
  %v2090 = vpack.c.bf16 %v2081, %v2080
  %v2091 = vpack.c.bf16 %v2083, %v2082
  %v2092 = vld [vmem:[%s4 + $0x180] sm:$0xf]
  %v2093 = vld [vmem:[%s4 + $0x184] sm:$0xf]
  %v2094 = vld [vmem:[%s4 + $0x188] sm:$0xf]
  %v2095 = vld [vmem:[%s4 + $0x18c] sm:$0xf]
  %v2096 = vld [vmem:[%s4 + $0x190] sm:$0xf]
  %v2097 = vld [vmem:[%s4 + $0x194] sm:$0xf]
  %v2098 = vld [vmem:[%s4 + $0x198] sm:$0xf]
  %v2099 = vld [vmem:[%s4 + $0x19c] sm:$0xf]
  %v2100 = vld [vmem:[%s4 + $0x1a0] sm:$0xf]
  %v2101 = vld [vmem:[%s4 + $0x1a4] sm:$0xf]
  %v2102 = vld [vmem:[%s4 + $0x1a8] sm:$0xf]
  %v2103 = vld [vmem:[%s4 + $0x1ac] sm:$0xf]
  %v2104 = vld [vmem:[%s4 + $0x1b0] sm:$0xf]
  %v2105 = vld [vmem:[%s4 + $0x1b4] sm:$0xf]
  %v2106 = vld [vmem:[%s4 + $0x1b8] sm:$0xf]
  %v2107 = vld [vmem:[%s4 + $0x1bc] sm:$0xf]
  %v2124 = vunpack.c.l.b16 %v2092
  %v2125 = vunpack.c.l.b16 %v2093
  %v2126 = vunpack.c.l.b16 %v2094
  %v2127 = vunpack.c.l.b16 %v2095
  %v2128 = vunpack.c.l.b16 %v2096
  %v2129 = vunpack.c.l.b16 %v2097
  %v2130 = vunpack.c.l.b16 %v2098
  %v2131 = vunpack.c.l.b16 %v2099
  %v2132 = vunpack.c.l.b16 %v2100
  %v2133 = vunpack.c.l.b16 %v2101
  %v2134 = vunpack.c.l.b16 %v2102
  %v2135 = vunpack.c.l.b16 %v2103
  %v2136 = vunpack.c.l.b16 %v2104
  %v2137 = vunpack.c.l.b16 %v2105
  %v2138 = vunpack.c.l.b16 %v2106
  %v2139 = vunpack.c.l.b16 %v2107
  %v2140 = vpack.c.b16 %v2125, %v2124
  %v2141 = vpack.c.b16 %v2127, %v2126
  %v2142 = vpack.c.b16 %v2129, %v2128
  %v2143 = vpack.c.b16 %v2131, %v2130
  %v2144 = vpack.c.b16 %v2133, %v2132
  %v2145 = vpack.c.b16 %v2135, %v2134
  %v2146 = vpack.c.b16 %v2137, %v2136
  %v2147 = vpack.c.b16 %v2139, %v2138
  %2156 = vmatprep.subr.bf16.mxu0 0
  %2157 = vmatpush1.bf16.msra.mxu0 %v2084
  %2158 = vmatprep.subr.bf16.mxu0 0
  %2159 = vmatpush1.bf16.msra.mxu0 %v2085
  %2160 = vmatprep.subr.bf16.mxu0 0
  %2161 = vmatpush1.bf16.msra.mxu0 %v2086
  %2162 = vmatprep.subr.bf16.mxu0 0
  %2163 = vmatpush1.bf16.msra.mxu0 %v2087
  %2164 = vmatprep.subr.bf16.mxu0 0
  %2165 = vmatpush1.bf16.msra.mxu0 %v2088
  %2166 = vmatprep.subr.bf16.mxu0 0
  %2167 = vmatpush1.bf16.msra.mxu0 %v2089
  %2168 = vmatprep.subr.bf16.mxu0 0
  %2169 = vmatpush1.bf16.msra.mxu0 %v2090
  %2170 = vmatprep.subr.bf16.mxu0 0
  %2171 = vmatpush1.bf16.msra.mxu0 %v2091
  %2172 = vmatprep.subr.bf16.mxu0 0
  %2173 = vmatpush1.bf16.msra.mxu0 0
  %2174 = vmatprep.subr.bf16.mxu0 0
  %2175 = vmatpush1.bf16.msra.mxu0 0
  %2176 = vmatprep.subr.bf16.mxu0 0
  %2177 = vmatpush1.bf16.msra.mxu0 0
  %2178 = vmatprep.subr.bf16.mxu0 0
  %2179 = vmatpush1.bf16.msra.mxu0 0
  %2180 = vmatprep.subr.bf16.mxu0 0
  %2181 = vmatpush1.bf16.msra.mxu0 0
  %2182 = vmatprep.subr.bf16.mxu0 0
  %2183 = vmatpush1.bf16.msra.mxu0 0
  %2184 = vmatprep.subr.bf16.mxu0 0
  %2185 = vmatpush1.bf16.msra.mxu0 0
  %2186 = vmatprep.subr.bf16.mxu0 0
  %2187 = vmatpush1.bf16.msra.mxu0 0
  %2188 = vmatprep.mubr.bf16.mxu0 0
  %2189 = vmatmul.mubr.bf16.gmra.mrb[0].mxu0 %v2140
  %v2190 = vpop.f32.mrb[0].mxu0
  %v2191 = vadd.f32 0.0, %v2190
  %v2192 = vpop.f32.mrb[0].mxu0
  %v2193 = vpop.f32.mrb[0].mxu0
  %v2194 = vadd.f32 0.0, %v2193
  %v2195 = vpop.f32.mrb[0].mxu0
  %2196 = vmatprep.mubr.bf16.mxu0 0
  %2197 = vmatmul.mubr.bf16.gmra.mrb[0].mxu0 %v2141
  %v2198 = vpop.f32.mrb[0].mxu0
  %v2199 = vadd.f32 0.0, %v2198
  %v2200 = vpop.f32.mrb[0].mxu0
  %v2201 = vpop.f32.mrb[0].mxu0
  %v2202 = vadd.f32 0.0, %v2201
  %v2203 = vpop.f32.mrb[0].mxu0
  %2204 = vmatprep.mubr.bf16.mxu0 0
  %2205 = vmatmul.mubr.bf16.gmra.mrb[0].mxu0 %v2142
  %v2206 = vpop.f32.mrb[0].mxu0
  %v2207 = vadd.f32 0.0, %v2206
  %v2208 = vpop.f32.mrb[0].mxu0
  %v2209 = vpop.f32.mrb[0].mxu0
  %v2210 = vadd.f32 0.0, %v2209
  %v2211 = vpop.f32.mrb[0].mxu0
  %2212 = vmatprep.mubr.bf16.mxu0 0
  %2213 = vmatmul.mubr.bf16.gmra.mrb[0].mxu0 %v2143
  %v2214 = vpop.f32.mrb[0].mxu0
  %v2215 = vadd.f32 0.0, %v2214
  %v2216 = vpop.f32.mrb[0].mxu0
  %v2217 = vpop.f32.mrb[0].mxu0
  %v2218 = vadd.f32 0.0, %v2217
  %v2219 = vpop.f32.mrb[0].mxu0
  %2220 = vmatprep.mubr.bf16.mxu0 0
  %2221 = vmatmul.mubr.bf16.gmra.mrb[0].mxu0 %v2144
  %v2222 = vpop.f32.mrb[0].mxu0
  %v2223 = vadd.f32 0.0, %v2222
  %v2224 = vpop.f32.mrb[0].mxu0
  %v2225 = vpop.f32.mrb[0].mxu0
  %v2226 = vadd.f32 0.0, %v2225
  %v2227 = vpop.f32.mrb[0].mxu0
  %2228 = vmatprep.mubr.bf16.mxu0 0
  %2229 = vmatmul.mubr.bf16.gmra.mrb[0].mxu0 %v2145
  %v2230 = vpop.f32.mrb[0].mxu0
  %v2231 = vadd.f32 0.0, %v2230
  %v2232 = vpop.f32.mrb[0].mxu0
  %v2233 = vpop.f32.mrb[0].mxu0
  %v2234 = vadd.f32 0.0, %v2233
  %v2235 = vpop.f32.mrb[0].mxu0
  %2236 = vmatprep.mubr.bf16.mxu0 0
  %2237 = vmatmul.mubr.bf16.gmra.mrb[0].mxu0 %v2146
  %v2238 = vpop.f32.mrb[0].mxu0
  %v2239 = vadd.f32 0.0, %v2238
  %v2240 = vpop.f32.mrb[0].mxu0
  %v2241 = vpop.f32.mrb[0].mxu0
  %v2242 = vadd.f32 0.0, %v2241
  %v2243 = vpop.f32.mrb[0].mxu0
  %2244 = vmatprep.mubr.bf16.mxu0 0
  %2245 = vmatmul.mubr.bf16.gmra.mrb[0].mxu0 %v2147
  %v2246 = vpop.f32.mrb[0].mxu0
  %v2247 = vadd.f32 0.0, %v2246
  %v2248 = vpop.f32.mrb[0].mxu0
  %v2249 = vpop.f32.mrb[0].mxu0
  %v2250 = vadd.f32 0.0, %v2249
  %v2251 = vpop.f32.mrb[0].mxu0
  %2252 = vdwg.mxu0
  %v2253 = vld [vmem:[%s4 + $0x1c0] sm:$0xf]
  %v2254 = vld [vmem:[%s4 + $0x1c4] sm:$0xf]
  %v2255 = vld [vmem:[%s4 + $0x1c8] sm:$0xf]
  %v2256 = vld [vmem:[%s4 + $0x1cc] sm:$0xf]
  %v2257 = vld [vmem:[%s4 + $0x1d0] sm:$0xf]
  %v2258 = vld [vmem:[%s4 + $0x1d4] sm:$0xf]
  %v2259 = vld [vmem:[%s4 + $0x1d8] sm:$0xf]
  %v2260 = vld [vmem:[%s4 + $0x1dc] sm:$0xf]
  %v2261 = vld [vmem:[%s4 + $0x1e0] sm:$0xf]
  %v2262 = vld [vmem:[%s4 + $0x1e4] sm:$0xf]
  %v2263 = vld [vmem:[%s4 + $0x1e8] sm:$0xf]
  %v2264 = vld [vmem:[%s4 + $0x1ec] sm:$0xf]
  %v2265 = vld [vmem:[%s4 + $0x1f0] sm:$0xf]
  %v2266 = vld [vmem:[%s4 + $0x1f4] sm:$0xf]
  %v2267 = vld [vmem:[%s4 + $0x1f8] sm:$0xf]
  %v2268 = vld [vmem:[%s4 + $0x1fc] sm:$0xf]
  %v2285 = vunpack.c.l.b16 %v2253
  %v2286 = vunpack.c.l.b16 %v2254
  %v2287 = vunpack.c.l.b16 %v2255
  %v2288 = vunpack.c.l.b16 %v2256
  %v2289 = vunpack.c.l.b16 %v2257
  %v2290 = vunpack.c.l.b16 %v2258
  %v2291 = vunpack.c.l.b16 %v2259
  %v2292 = vunpack.c.l.b16 %v2260
  %v2293 = vunpack.c.l.b16 %v2261
  %v2294 = vunpack.c.l.b16 %v2262
  %v2295 = vunpack.c.l.b16 %v2263
  %v2296 = vunpack.c.l.b16 %v2264
  %v2297 = vunpack.c.l.b16 %v2265
  %v2298 = vunpack.c.l.b16 %v2266
  %v2299 = vunpack.c.l.b16 %v2267
  %v2300 = vunpack.c.l.b16 %v2268
  %v2301 = vpack.c.b16 %v2286, %v2285
  %v2302 = vpack.c.b16 %v2288, %v2287
  %v2303 = vpack.c.b16 %v2290, %v2289
  %v2304 = vpack.c.b16 %v2292, %v2291
  %v2305 = vpack.c.b16 %v2294, %v2293
  %v2306 = vpack.c.b16 %v2296, %v2295
  %v2307 = vpack.c.b16 %v2298, %v2297
  %v2308 = vpack.c.b16 %v2300, %v2299
  %2317 = vmatprep.subr.bf16.mxu0 0
  %2318 = vmatpush1.bf16.msra.mxu0 %v2084
  %2319 = vmatprep.subr.bf16.mxu0 0
  %2320 = vmatpush1.bf16.msra.mxu0 %v2085
  %2321 = vmatprep.subr.bf16.mxu0 0
  %2322 = vmatpush1.bf16.msra.mxu0 %v2086
  %2323 = vmatprep.subr.bf16.mxu0 0
  %2324 = vmatpush1.bf16.msra.mxu0 %v2087
  %2325 = vmatprep.subr.bf16.mxu0 0
  %2326 = vmatpush1.bf16.msra.mxu0 %v2088
  %2327 = vmatprep.subr.bf16.mxu0 0
  %2328 = vmatpush1.bf16.msra.mxu0 %v2089
  %2329 = vmatprep.subr.bf16.mxu0 0
  %2330 = vmatpush1.bf16.msra.mxu0 %v2090
  %2331 = vmatprep.subr.bf16.mxu0 0
  %2332 = vmatpush1.bf16.msra.mxu0 %v2091
  %2333 = vmatprep.subr.bf16.mxu0 0
  %2334 = vmatpush1.bf16.msra.mxu0 0
  %2335 = vmatprep.subr.bf16.mxu0 0
  %2336 = vmatpush1.bf16.msra.mxu0 0
  %2337 = vmatprep.subr.bf16.mxu0 0
  %2338 = vmatpush1.bf16.msra.mxu0 0
  %2339 = vmatprep.subr.bf16.mxu0 0
  %2340 = vmatpush1.bf16.msra.mxu0 0
  %2341 = vmatprep.subr.bf16.mxu0 0
  %2342 = vmatpush1.bf16.msra.mxu0 0
  %2343 = vmatprep.subr.bf16.mxu0 0
  %2344 = vmatpush1.bf16.msra.mxu0 0
  %2345 = vmatprep.subr.bf16.mxu0 0
  %2346 = vmatpush1.bf16.msra.mxu0 0
  %2347 = vmatprep.subr.bf16.mxu0 0
  %2348 = vmatpush1.bf16.msra.mxu0 0
  %2349 = vmatprep.mubr.bf16.mxu0 0
  %2350 = vmatmul.mubr.bf16.gmra.mrb[0].mxu0 %v2301
  %v2351 = vpop.f32.mrb[0].mxu0
  %v2352 = vadd.f32 0.0, %v2351
  %v2353 = vpop.f32.mrb[0].mxu0
  %v2354 = vpop.f32.mrb[0].mxu0
  %v2355 = vadd.f32 0.0, %v2354
  %v2356 = vpop.f32.mrb[0].mxu0
  %2357 = vmatprep.mubr.bf16.mxu0 0
  %2358 = vmatmul.mubr.bf16.gmra.mrb[0].mxu0 %v2302
  %v2359 = vpop.f32.mrb[0].mxu0
  %v2360 = vadd.f32 0.0, %v2359
  %v2361 = vpop.f32.mrb[0].mxu0
  %v2362 = vpop.f32.mrb[0].mxu0
  %v2363 = vadd.f32 0.0, %v2362
  %v2364 = vpop.f32.mrb[0].mxu0
  %2365 = vmatprep.mubr.bf16.mxu0 0
  %2366 = vmatmul.mubr.bf16.gmra.mrb[0].mxu0 %v2303
  %v2367 = vpop.f32.mrb[0].mxu0
  %v2368 = vadd.f32 0.0, %v2367
  %v2369 = vpop.f32.mrb[0].mxu0
  %v2370 = vpop.f32.mrb[0].mxu0
  %v2371 = vadd.f32 0.0, %v2370
  %v2372 = vpop.f32.mrb[0].mxu0
  %2373 = vmatprep.mubr.bf16.mxu0 0
  %2374 = vmatmul.mubr.bf16.gmra.mrb[0].mxu0 %v2304
  %v2375 = vpop.f32.mrb[0].mxu0
  %v2376 = vadd.f32 0.0, %v2375
  %v2377 = vpop.f32.mrb[0].mxu0
  %v2378 = vpop.f32.mrb[0].mxu0
  %v2379 = vadd.f32 0.0, %v2378
  %v2380 = vpop.f32.mrb[0].mxu0
  %2381 = vmatprep.mubr.bf16.mxu0 0
  %2382 = vmatmul.mubr.bf16.gmra.mrb[0].mxu0 %v2305
  %v2383 = vpop.f32.mrb[0].mxu0
  %v2384 = vadd.f32 0.0, %v2383
  %v2385 = vpop.f32.mrb[0].mxu0
  %v2386 = vpop.f32.mrb[0].mxu0
  %v2387 = vadd.f32 0.0, %v2386
  %v2388 = vpop.f32.mrb[0].mxu0
  %2389 = vmatprep.mubr.bf16.mxu0 0
  %2390 = vmatmul.mubr.bf16.gmra.mrb[0].mxu0 %v2306
  %v2391 = vpop.f32.mrb[0].mxu0
  %v2392 = vadd.f32 0.0, %v2391
  %v2393 = vpop.f32.mrb[0].mxu0
  %v2394 = vpop.f32.mrb[0].mxu0
  %v2395 = vadd.f32 0.0, %v2394
  %v2396 = vpop.f32.mrb[0].mxu0
  %2397 = vmatprep.mubr.bf16.mxu0 0
  %2398 = vmatmul.mubr.bf16.gmra.mrb[0].mxu0 %v2307
  %v2399 = vpop.f32.mrb[0].mxu0
  %v2400 = vadd.f32 0.0, %v2399
  %v2401 = vpop.f32.mrb[0].mxu0
  %v2402 = vpop.f32.mrb[0].mxu0
  %v2403 = vadd.f32 0.0, %v2402
  %v2404 = vpop.f32.mrb[0].mxu0
  %2405 = vmatprep.mubr.bf16.mxu0 0
  %2406 = vmatmul.mubr.bf16.gmra.mrb[0].mxu0 %v2308
  %v2407 = vpop.f32.mrb[0].mxu0
  %v2408 = vadd.f32 0.0, %v2407
  %v2409 = vpop.f32.mrb[0].mxu0
  %v2410 = vpop.f32.mrb[0].mxu0
  %v2411 = vadd.f32 0.0, %v2410
  %v2412 = vpop.f32.mrb[0].mxu0
  %2413 = vdwg.mxu0
  %v2414 = vmax.f32 %v2191, %v2352
  %v2415 = vmax.f32 %v2194, %v2355
  %v2416 = vmax.f32 %v2199, %v2360
  %v2417 = vmax.f32 %v2202, %v2363
  %v2418 = vmax.f32 %v2207, %v2368
  %v2419 = vmax.f32 %v2210, %v2371
  %v2420 = vmax.f32 %v2215, %v2376
  %v2421 = vmax.f32 %v2218, %v2379
  %v2422 = vmax.f32 %v2223, %v2384
  %v2423 = vmax.f32 %v2226, %v2387
  %v2424 = vmax.f32 %v2231, %v2392
  %v2425 = vmax.f32 %v2234, %v2395
  %v2426 = vmax.f32 %v2239, %v2400
  %v2427 = vmax.f32 %v2242, %v2403
  %v2428 = vmax.f32 %v2247, %v2408
  %v2429 = vmax.f32 %v2250, %v2411
  %v2430 = vpack.c.bf16 %v2415, %v2414
  %v2431 = vpack.c.bf16 %v2417, %v2416
  %v2432 = vpack.c.bf16 %v2419, %v2418
  %v2433 = vpack.c.bf16 %v2421, %v2420
  %v2434 = vpack.c.bf16 %v2423, %v2422
  %v2435 = vpack.c.bf16 %v2425, %v2424
  %v2436 = vpack.c.bf16 %v2427, %v2426
  %v2437 = vpack.c.bf16 %v2429, %v2428
  %v2438 = vld [vmem:[%s4 + $0x200] sm:$0xf]
  %v2439 = vld [vmem:[%s4 + $0x204] sm:$0xf]
  %v2440 = vld [vmem:[%s4 + $0x208] sm:$0xf]
  %v2441 = vld [vmem:[%s4 + $0x20c] sm:$0xf]
  %v2442 = vld [vmem:[%s4 + $0x210] sm:$0xf]
  %v2443 = vld [vmem:[%s4 + $0x214] sm:$0xf]
  %v2444 = vld [vmem:[%s4 + $0x218] sm:$0xf]
  %v2445 = vld [vmem:[%s4 + $0x21c] sm:$0xf]
  %v2446 = vld [vmem:[%s4 + $0x220] sm:$0xf]
  %v2447 = vld [vmem:[%s4 + $0x224] sm:$0xf]
  %v2448 = vld [vmem:[%s4 + $0x228] sm:$0xf]
  %v2449 = vld [vmem:[%s4 + $0x22c] sm:$0xf]
  %v2450 = vld [vmem:[%s4 + $0x230] sm:$0xf]
  %v2451 = vld [vmem:[%s4 + $0x234] sm:$0xf]
  %v2452 = vld [vmem:[%s4 + $0x238] sm:$0xf]
  %v2453 = vld [vmem:[%s4 + $0x23c] sm:$0xf]
  %v2470 = vunpack.c.l.b16 %v2438
  %v2471 = vunpack.c.l.b16 %v2439
  %v2472 = vunpack.c.l.b16 %v2440
  %v2473 = vunpack.c.l.b16 %v2441
  %v2474 = vunpack.c.l.b16 %v2442
  %v2475 = vunpack.c.l.b16 %v2443
  %v2476 = vunpack.c.l.b16 %v2444
  %v2477 = vunpack.c.l.b16 %v2445
  %v2478 = vunpack.c.l.b16 %v2446
  %v2479 = vunpack.c.l.b16 %v2447
  %v2480 = vunpack.c.l.b16 %v2448
  %v2481 = vunpack.c.l.b16 %v2449
  %v2482 = vunpack.c.l.b16 %v2450
  %v2483 = vunpack.c.l.b16 %v2451
  %v2484 = vunpack.c.l.b16 %v2452
  %v2485 = vunpack.c.l.b16 %v2453
  %v2486 = vpack.c.b16 %v2471, %v2470
  %v2487 = vpack.c.b16 %v2473, %v2472
  %v2488 = vpack.c.b16 %v2475, %v2474
  %v2489 = vpack.c.b16 %v2477, %v2476
  %v2490 = vpack.c.b16 %v2479, %v2478
  %v2491 = vpack.c.b16 %v2481, %v2480
  %v2492 = vpack.c.b16 %v2483, %v2482
  %v2493 = vpack.c.b16 %v2485, %v2484
  %2502 = vmatprep.subr.bf16.mxu0 0
  %2503 = vmatpush1.bf16.msra.mxu0 %v2430
  %2504 = vmatprep.subr.bf16.mxu0 0
  %2505 = vmatpush1.bf16.msra.mxu0 %v2431
  %2506 = vmatprep.subr.bf16.mxu0 0
  %2507 = vmatpush1.bf16.msra.mxu0 %v2432
  %2508 = vmatprep.subr.bf16.mxu0 0
  %2509 = vmatpush1.bf16.msra.mxu0 %v2433
  %2510 = vmatprep.subr.bf16.mxu0 0
  %2511 = vmatpush1.bf16.msra.mxu0 %v2434
  %2512 = vmatprep.subr.bf16.mxu0 0
  %2513 = vmatpush1.bf16.msra.mxu0 %v2435
  %2514 = vmatprep.subr.bf16.mxu0 0
  %2515 = vmatpush1.bf16.msra.mxu0 %v2436
  %2516 = vmatprep.subr.bf16.mxu0 0
  %2517 = vmatpush1.bf16.msra.mxu0 %v2437
  %2518 = vmatprep.subr.bf16.mxu0 0
  %2519 = vmatpush1.bf16.msra.mxu0 0
  %2520 = vmatprep.subr.bf16.mxu0 0
  %2521 = vmatpush1.bf16.msra.mxu0 0
  %2522 = vmatprep.subr.bf16.mxu0 0
  %2523 = vmatpush1.bf16.msra.mxu0 0
  %2524 = vmatprep.subr.bf16.mxu0 0
  %2525 = vmatpush1.bf16.msra.mxu0 0
  %2526 = vmatprep.subr.bf16.mxu0 0
  %2527 = vmatpush1.bf16.msra.mxu0 0
  %2528 = vmatprep.subr.bf16.mxu0 0
  %2529 = vmatpush1.bf16.msra.mxu0 0
  %2530 = vmatprep.subr.bf16.mxu0 0
  %2531 = vmatpush1.bf16.msra.mxu0 0
  %2532 = vmatprep.subr.bf16.mxu0 0
  %2533 = vmatpush1.bf16.msra.mxu0 0
  %2534 = vmatprep.mubr.bf16.mxu0 0
  %2535 = vmatmul.mubr.bf16.gmra.mrb[0].mxu0 %v2486
  %v2536 = vpop.f32.mrb[0].mxu0
  %v2537 = vadd.f32 0.0, %v2536
  %v2538 = vpop.f32.mrb[0].mxu0
  %v2539 = vpop.f32.mrb[0].mxu0
  %v2540 = vadd.f32 0.0, %v2539
  %v2541 = vpop.f32.mrb[0].mxu0
  %2542 = vmatprep.mubr.bf16.mxu0 0
  %2543 = vmatmul.mubr.bf16.gmra.mrb[0].mxu0 %v2487
  %v2544 = vpop.f32.mrb[0].mxu0
  %v2545 = vadd.f32 0.0, %v2544
  %v2546 = vpop.f32.mrb[0].mxu0
  %v2547 = vpop.f32.mrb[0].mxu0
  %v2548 = vadd.f32 0.0, %v2547
  %v2549 = vpop.f32.mrb[0].mxu0
  %2550 = vmatprep.mubr.bf16.mxu0 0
  %2551 = vmatmul.mubr.bf16.gmra.mrb[0].mxu0 %v2488
  %v2552 = vpop.f32.mrb[0].mxu0
  %v2553 = vadd.f32 0.0, %v2552
  %v2554 = vpop.f32.mrb[0].mxu0
  %v2555 = vpop.f32.mrb[0].mxu0
  %v2556 = vadd.f32 0.0, %v2555
  %v2557 = vpop.f32.mrb[0].mxu0
  %2558 = vmatprep.mubr.bf16.mxu0 0
  %2559 = vmatmul.mubr.bf16.gmra.mrb[0].mxu0 %v2489
  %v2560 = vpop.f32.mrb[0].mxu0
  %v2561 = vadd.f32 0.0, %v2560
  %v2562 = vpop.f32.mrb[0].mxu0
  %v2563 = vpop.f32.mrb[0].mxu0
  %v2564 = vadd.f32 0.0, %v2563
  %v2565 = vpop.f32.mrb[0].mxu0
  %2566 = vmatprep.mubr.bf16.mxu0 0
  %2567 = vmatmul.mubr.bf16.gmra.mrb[0].mxu0 %v2490
  %v2568 = vpop.f32.mrb[0].mxu0
  %v2569 = vadd.f32 0.0, %v2568
  %v2570 = vpop.f32.mrb[0].mxu0
  %v2571 = vpop.f32.mrb[0].mxu0
  %v2572 = vadd.f32 0.0, %v2571
  %v2573 = vpop.f32.mrb[0].mxu0
  %2574 = vmatprep.mubr.bf16.mxu0 0
  %2575 = vmatmul.mubr.bf16.gmra.mrb[0].mxu0 %v2491
  %v2576 = vpop.f32.mrb[0].mxu0
  %v2577 = vadd.f32 0.0, %v2576
  %v2578 = vpop.f32.mrb[0].mxu0
  %v2579 = vpop.f32.mrb[0].mxu0
  %v2580 = vadd.f32 0.0, %v2579
  %v2581 = vpop.f32.mrb[0].mxu0
  %2582 = vmatprep.mubr.bf16.mxu0 0
  %2583 = vmatmul.mubr.bf16.gmra.mrb[0].mxu0 %v2492
  %v2584 = vpop.f32.mrb[0].mxu0
  %v2585 = vadd.f32 0.0, %v2584
  %v2586 = vpop.f32.mrb[0].mxu0
  %v2587 = vpop.f32.mrb[0].mxu0
  %v2588 = vadd.f32 0.0, %v2587
  %v2589 = vpop.f32.mrb[0].mxu0
  %2590 = vmatprep.mubr.bf16.mxu0 0
  %2591 = vmatmul.mubr.bf16.gmra.mrb[0].mxu0 %v2493
  %v2592 = vpop.f32.mrb[0].mxu0
  %v2593 = vadd.f32 0.0, %v2592
  %v2594 = vpop.f32.mrb[0].mxu0
  %v2595 = vpop.f32.mrb[0].mxu0
  %v2596 = vadd.f32 0.0, %v2595
  %v2597 = vpop.f32.mrb[0].mxu0
  %2598 = vdwg.mxu0
  %v2599 = vpack.c.bf16 %v2540, %v2537
  %v2600 = vpack.c.bf16 %v2548, %v2545
  %v2601 = vpack.c.bf16 %v2556, %v2553
  %v2602 = vpack.c.bf16 %v2564, %v2561
  %v2603 = vpack.c.bf16 %v2572, %v2569
  %v2604 = vpack.c.bf16 %v2580, %v2577
  %v2605 = vpack.c.bf16 %v2588, %v2585
  %v2606 = vpack.c.bf16 %v2596, %v2593
  %v2607 = vld [vmem:[%s4 + $0x240] sm:$0xf]
  %v2608 = vld [vmem:[%s4 + $0x244] sm:$0xf]
  %v2609 = vld [vmem:[%s4 + $0x248] sm:$0xf]
  %v2610 = vld [vmem:[%s4 + $0x24c] sm:$0xf]
  %v2611 = vld [vmem:[%s4 + $0x250] sm:$0xf]
  %v2612 = vld [vmem:[%s4 + $0x254] sm:$0xf]
  %v2613 = vld [vmem:[%s4 + $0x258] sm:$0xf]
  %v2614 = vld [vmem:[%s4 + $0x25c] sm:$0xf]
  %v2615 = vld [vmem:[%s4 + $0x260] sm:$0xf]
  %v2616 = vld [vmem:[%s4 + $0x264] sm:$0xf]
  %v2617 = vld [vmem:[%s4 + $0x268] sm:$0xf]
  %v2618 = vld [vmem:[%s4 + $0x26c] sm:$0xf]
  %v2619 = vld [vmem:[%s4 + $0x270] sm:$0xf]
  %v2620 = vld [vmem:[%s4 + $0x274] sm:$0xf]
  %v2621 = vld [vmem:[%s4 + $0x278] sm:$0xf]
  %v2622 = vld [vmem:[%s4 + $0x27c] sm:$0xf]
  %v2639 = vunpack.c.l.b16 %v2607
  %v2640 = vunpack.c.l.b16 %v2608
  %v2641 = vunpack.c.l.b16 %v2609
  %v2642 = vunpack.c.l.b16 %v2610
  %v2643 = vunpack.c.l.b16 %v2611
  %v2644 = vunpack.c.l.b16 %v2612
  %v2645 = vunpack.c.l.b16 %v2613
  %v2646 = vunpack.c.l.b16 %v2614
  %v2647 = vunpack.c.l.b16 %v2615
  %v2648 = vunpack.c.l.b16 %v2616
  %v2649 = vunpack.c.l.b16 %v2617
  %v2650 = vunpack.c.l.b16 %v2618
  %v2651 = vunpack.c.l.b16 %v2619
  %v2652 = vunpack.c.l.b16 %v2620
  %v2653 = vunpack.c.l.b16 %v2621
  %v2654 = vunpack.c.l.b16 %v2622
  %v2655 = vpack.c.b16 %v2640, %v2639
  %v2656 = vpack.c.b16 %v2642, %v2641
  %v2657 = vpack.c.b16 %v2644, %v2643
  %v2658 = vpack.c.b16 %v2646, %v2645
  %v2659 = vpack.c.b16 %v2648, %v2647
  %v2660 = vpack.c.b16 %v2650, %v2649
  %v2661 = vpack.c.b16 %v2652, %v2651
  %v2662 = vpack.c.b16 %v2654, %v2653
  %2671 = vmatprep.subr.bf16.mxu0 0
  %2672 = vmatpush1.bf16.msra.mxu0 %v2430
  %2673 = vmatprep.subr.bf16.mxu0 0
  %2674 = vmatpush1.bf16.msra.mxu0 %v2431
  %2675 = vmatprep.subr.bf16.mxu0 0
  %2676 = vmatpush1.bf16.msra.mxu0 %v2432
  %2677 = vmatprep.subr.bf16.mxu0 0
  %2678 = vmatpush1.bf16.msra.mxu0 %v2433
  %2679 = vmatprep.subr.bf16.mxu0 0
  %2680 = vmatpush1.bf16.msra.mxu0 %v2434
  %2681 = vmatprep.subr.bf16.mxu0 0
  %2682 = vmatpush1.bf16.msra.mxu0 %v2435
  %2683 = vmatprep.subr.bf16.mxu0 0
  %2684 = vmatpush1.bf16.msra.mxu0 %v2436
  %2685 = vmatprep.subr.bf16.mxu0 0
  %2686 = vmatpush1.bf16.msra.mxu0 %v2437
  %2687 = vmatprep.subr.bf16.mxu0 0
  %2688 = vmatpush1.bf16.msra.mxu0 0
  %2689 = vmatprep.subr.bf16.mxu0 0
  %2690 = vmatpush1.bf16.msra.mxu0 0
  %2691 = vmatprep.subr.bf16.mxu0 0
  %2692 = vmatpush1.bf16.msra.mxu0 0
  %2693 = vmatprep.subr.bf16.mxu0 0
  %2694 = vmatpush1.bf16.msra.mxu0 0
  %2695 = vmatprep.subr.bf16.mxu0 0
  %2696 = vmatpush1.bf16.msra.mxu0 0
  %2697 = vmatprep.subr.bf16.mxu0 0
  %2698 = vmatpush1.bf16.msra.mxu0 0
  %2699 = vmatprep.subr.bf16.mxu0 0
  %2700 = vmatpush1.bf16.msra.mxu0 0
  %2701 = vmatprep.subr.bf16.mxu0 0
  %2702 = vmatpush1.bf16.msra.mxu0 0
  %2703 = vmatprep.mubr.bf16.mxu0 0
  %2704 = vmatmul.mubr.bf16.gmra.mrb[0].mxu0 %v2655
  %v2705 = vpop.f32.mrb[0].mxu0
  %v2706 = vadd.f32 0.0, %v2705
  %v2707 = vpop.f32.mrb[0].mxu0
  %v2708 = vpop.f32.mrb[0].mxu0
  %v2709 = vadd.f32 0.0, %v2708
  %v2710 = vpop.f32.mrb[0].mxu0
  %2711 = vmatprep.mubr.bf16.mxu0 0
  %2712 = vmatmul.mubr.bf16.gmra.mrb[0].mxu0 %v2656
  %v2713 = vpop.f32.mrb[0].mxu0
  %v2714 = vadd.f32 0.0, %v2713
  %v2715 = vpop.f32.mrb[0].mxu0
  %v2716 = vpop.f32.mrb[0].mxu0
  %v2717 = vadd.f32 0.0, %v2716
  %v2718 = vpop.f32.mrb[0].mxu0
  %2719 = vmatprep.mubr.bf16.mxu0 0
  %2720 = vmatmul.mubr.bf16.gmra.mrb[0].mxu0 %v2657
  %v2721 = vpop.f32.mrb[0].mxu0
  %v2722 = vadd.f32 0.0, %v2721
  %v2723 = vpop.f32.mrb[0].mxu0
  %v2724 = vpop.f32.mrb[0].mxu0
  %v2725 = vadd.f32 0.0, %v2724
  %v2726 = vpop.f32.mrb[0].mxu0
  %2727 = vmatprep.mubr.bf16.mxu0 0
  %2728 = vmatmul.mubr.bf16.gmra.mrb[0].mxu0 %v2658
  %v2729 = vpop.f32.mrb[0].mxu0
  %v2730 = vadd.f32 0.0, %v2729
  %v2731 = vpop.f32.mrb[0].mxu0
  %v2732 = vpop.f32.mrb[0].mxu0
  %v2733 = vadd.f32 0.0, %v2732
  %v2734 = vpop.f32.mrb[0].mxu0
  %2735 = vmatprep.mubr.bf16.mxu0 0
  %2736 = vmatmul.mubr.bf16.gmra.mrb[0].mxu0 %v2659
  %v2737 = vpop.f32.mrb[0].mxu0
  %v2738 = vadd.f32 0.0, %v2737
  %v2739 = vpop.f32.mrb[0].mxu0
  %v2740 = vpop.f32.mrb[0].mxu0
  %v2741 = vadd.f32 0.0, %v2740
  %v2742 = vpop.f32.mrb[0].mxu0
  %2743 = vmatprep.mubr.bf16.mxu0 0
  %2744 = vmatmul.mubr.bf16.gmra.mrb[0].mxu0 %v2660
  %v2745 = vpop.f32.mrb[0].mxu0
  %v2746 = vadd.f32 0.0, %v2745
  %v2747 = vpop.f32.mrb[0].mxu0
  %v2748 = vpop.f32.mrb[0].mxu0
  %v2749 = vadd.f32 0.0, %v2748
  %v2750 = vpop.f32.mrb[0].mxu0
  %2751 = vmatprep.mubr.bf16.mxu0 0
  %2752 = vmatmul.mubr.bf16.gmra.mrb[0].mxu0 %v2661
  %v2753 = vpop.f32.mrb[0].mxu0
  %v2754 = vadd.f32 0.0, %v2753
  %v2755 = vpop.f32.mrb[0].mxu0
  %v2756 = vpop.f32.mrb[0].mxu0
  %v2757 = vadd.f32 0.0, %v2756
  %v2758 = vpop.f32.mrb[0].mxu0
  %2759 = vmatprep.mubr.bf16.mxu0 0
  %2760 = vmatmul.mubr.bf16.gmra.mrb[0].mxu0 %v2662
  %v2761 = vpop.f32.mrb[0].mxu0
  %v2762 = vadd.f32 0.0, %v2761
  %v2763 = vpop.f32.mrb[0].mxu0
  %v2764 = vpop.f32.mrb[0].mxu0
  %v2765 = vadd.f32 0.0, %v2764
  %v2766 = vpop.f32.mrb[0].mxu0
  %2767 = vdwg.mxu0
  %v2768 = vpack.c.bf16 %v2709, %v2706
  %v2769 = vpack.c.bf16 %v2717, %v2714
  %v2770 = vpack.c.bf16 %v2725, %v2722
  %v2771 = vpack.c.bf16 %v2733, %v2730
  %v2772 = vpack.c.bf16 %v2741, %v2738
  %v2773 = vpack.c.bf16 %v2749, %v2746
  %v2774 = vpack.c.bf16 %v2757, %v2754
  %v2775 = vpack.c.bf16 %v2765, %v2762
  %v2776 = vld [vmem:[%s2 + $0x1b0] sm:$0xff]
  %v2777 = vld [vmem:[%s2 + $0x1b8] sm:$0xff]
  %v2778 = vld [vmem:[%s2 + $0x1c0] sm:$0xff]
  %v2779 = vld [vmem:[%s2 + $0x1c8] sm:$0xff]
  %v2780 = vld [vmem:[%s2 + $0x1d0] sm:$0xff]
  %v2781 = vld [vmem:[%s2 + $0x1d8] sm:$0xff]
  %v2782 = vld [vmem:[%s2 + $0x1e0] sm:$0xff]
  %v2783 = vld [vmem:[%s2 + $0x1e8] sm:$0xff]
  %v2784 = vld [vmem:[%s2 + $0x1f0] sm:$0xff]
  %v2785 = vld [vmem:[%s2 + $0x1f8] sm:$0xff]
  %v2786 = vld [vmem:[%s2 + $0x200] sm:$0xff]
  %v2787 = vld [vmem:[%s2 + $0x208] sm:$0xff]
  %v2788 = vld [vmem:[%s2 + $0x210] sm:$0xff]
  %v2789 = vld [vmem:[%s2 + $0x218] sm:$0xff]
  %v2790 = vld [vmem:[%s2 + $0x220] sm:$0xff]
  %v2791 = vld [vmem:[%s2 + $0x228] sm:$0xff]
  %v2792 = vld [vmem:[%s2 + $0x230] sm:$0xff]
  %v2793 = vld [vmem:[%s2 + $0x238] sm:$0xff]
  %v2794 = vld [vmem:[%s2 + $0x240] sm:$0xff]
  %v2795 = vld [vmem:[%s2 + $0x248] sm:$0xff]
  %v2796 = vld [vmem:[%s2 + $0x250] sm:$0xff]
  %v2797 = vld [vmem:[%s2 + $0x258] sm:$0xff]
  %v2798 = vld [vmem:[%s2 + $0x260] sm:$0xff]
  %v2799 = vld [vmem:[%s2 + $0x268] sm:$0xff]
  %v2800 = vld [vmem:[%s2 + $0x270] sm:$0xff]
  %v2801 = vld [vmem:[%s2 + $0x278] sm:$0xff]
  %v2802 = vld [vmem:[%s2 + $0x280] sm:$0xff]
  %v2803 = vld [vmem:[%s2 + $0x288] sm:$0xff]
  %v2804 = vld [vmem:[%s2 + $0x290] sm:$0xff]
  %v2805 = vld [vmem:[%s2 + $0x298] sm:$0xff]
  %v2806 = vld [vmem:[%s2 + $0x2a0] sm:$0xff]
  %v2807 = vld [vmem:[%s2 + $0x2a8] sm:$0xff]
  %v2824 = vunpack.c.l.b16 %v2792
  %v2825 = vunpack.c.h.b16 %v2792
  %v2826 = vunpack.c.l.b16 %v2793
  %v2827 = vunpack.c.h.b16 %v2793
  %v2828 = vunpack.c.l.b16 %v2794
  %v2829 = vunpack.c.h.b16 %v2794
  %v2830 = vunpack.c.l.b16 %v2795
  %v2831 = vunpack.c.h.b16 %v2795
  %v2832 = vunpack.c.l.b16 %v2796
  %v2833 = vunpack.c.h.b16 %v2796
  %v2834 = vunpack.c.l.b16 %v2797
  %v2835 = vunpack.c.h.b16 %v2797
  %v2836 = vunpack.c.l.b16 %v2798
  %v2837 = vunpack.c.h.b16 %v2798
  %v2838 = vunpack.c.l.b16 %v2799
  %v2839 = vunpack.c.h.b16 %v2799
  %v2840 = vunpack.c.l.b16 %v2800
  %v2841 = vunpack.c.h.b16 %v2800
  %v2842 = vunpack.c.l.b16 %v2801
  %v2843 = vunpack.c.h.b16 %v2801
  %v2844 = vunpack.c.l.b16 %v2802
  %v2845 = vunpack.c.h.b16 %v2802
  %v2846 = vunpack.c.l.b16 %v2803
  %v2847 = vunpack.c.h.b16 %v2803
  %v2848 = vunpack.c.l.b16 %v2804
  %v2849 = vunpack.c.h.b16 %v2804
  %v2850 = vunpack.c.l.b16 %v2805
  %v2851 = vunpack.c.h.b16 %v2805
  %v2852 = vunpack.c.l.b16 %v2806
  %v2853 = vunpack.c.h.b16 %v2806
  %v2854 = vunpack.c.l.b16 %v2807
  %v2855 = vunpack.c.h.b16 %v2807
  %v2856 = vpack.c.b16 %v2826, %v2824
  %v2857 = vpack.c.b16 %v2827, %v2825
  %v2858 = vpack.c.b16 %v2830, %v2828
  %v2859 = vpack.c.b16 %v2831, %v2829
  %v2860 = vpack.c.b16 %v2834, %v2832
  %v2861 = vpack.c.b16 %v2835, %v2833
  %v2862 = vpack.c.b16 %v2838, %v2836
  %v2863 = vpack.c.b16 %v2839, %v2837
  %v2864 = vpack.c.b16 %v2842, %v2840
  %v2865 = vpack.c.b16 %v2843, %v2841
  %v2866 = vpack.c.b16 %v2846, %v2844
  %v2867 = vpack.c.b16 %v2847, %v2845
  %v2868 = vpack.c.b16 %v2850, %v2848
  %v2869 = vpack.c.b16 %v2851, %v2849
  %v2870 = vpack.c.b16 %v2854, %v2852
  %v2871 = vpack.c.b16 %v2855, %v2853
  %2888 = vmatprep.subr.bf16.mxu0 %v2857
  %2889 = vmatpush1.bf16.msra.mxu0 %v2856
  %2890 = vmatprep.subr.bf16.mxu0 %v2859
  %2891 = vmatpush1.bf16.msra.mxu0 %v2858
  %2892 = vmatprep.subr.bf16.mxu0 %v2861
  %2893 = vmatpush1.bf16.msra.mxu0 %v2860
  %2894 = vmatprep.subr.bf16.mxu0 %v2863
  %2895 = vmatpush1.bf16.msra.mxu0 %v2862
  %2896 = vmatprep.subr.bf16.mxu0 %v2865
  %2897 = vmatpush1.bf16.msra.mxu0 %v2864
  %2898 = vmatprep.subr.bf16.mxu0 %v2867
  %2899 = vmatpush1.bf16.msra.mxu0 %v2866
  %2900 = vmatprep.subr.bf16.mxu0 %v2869
  %2901 = vmatpush1.bf16.msra.mxu0 %v2868
  %2902 = vmatprep.subr.bf16.mxu0 %v2871
  %2903 = vmatpush1.bf16.msra.mxu0 %v2870
  %2904 = vmatprep.subr.bf16.mxu0 0
  %2905 = vmatpush1.bf16.msra.mxu0 0
  %2906 = vmatprep.subr.bf16.mxu0 0
  %2907 = vmatpush1.bf16.msra.mxu0 0
  %2908 = vmatprep.subr.bf16.mxu0 0
  %2909 = vmatpush1.bf16.msra.mxu0 0
  %2910 = vmatprep.subr.bf16.mxu0 0
  %2911 = vmatpush1.bf16.msra.mxu0 0
  %2912 = vmatprep.subr.bf16.mxu0 0
  %2913 = vmatpush1.bf16.msra.mxu0 0
  %2914 = vmatprep.subr.bf16.mxu0 0
  %2915 = vmatpush1.bf16.msra.mxu0 0
  %2916 = vmatprep.subr.bf16.mxu0 0
  %2917 = vmatpush1.bf16.msra.mxu0 0
  %2918 = vmatprep.subr.bf16.mxu0 0
  %2919 = vmatpush1.bf16.msra.mxu0 0
  %2920 = vmatprep.mubr.bf16.mxu0 0
  %2921 = vmatmul.mubr.bf16.gmra.mrb[0].mxu0 %v2430
  %v2922 = vpop.f32.mrb[0].mxu0
  %v2923 = vadd.f32 0.0, %v2922
  %v2924 = vpop.f32.mrb[0].mxu0
  %v2925 = vadd.f32 0.0, %v2924
  %v2926 = vpop.f32.mrb[0].mxu0
  %v2927 = vadd.f32 0.0, %v2926
  %v2928 = vpop.f32.mrb[0].mxu0
  %v2929 = vadd.f32 0.0, %v2928
  %2930 = vmatprep.mubr.bf16.mxu0 0
  %2931 = vmatmul.mubr.bf16.gmra.mrb[0].mxu0 %v2431
  %v2932 = vpop.f32.mrb[0].mxu0
  %v2933 = vadd.f32 0.0, %v2932
  %v2934 = vpop.f32.mrb[0].mxu0
  %v2935 = vadd.f32 0.0, %v2934
  %v2936 = vpop.f32.mrb[0].mxu0
  %v2937 = vadd.f32 0.0, %v2936
  %v2938 = vpop.f32.mrb[0].mxu0
  %v2939 = vadd.f32 0.0, %v2938
  %2940 = vmatprep.mubr.bf16.mxu0 0
  %2941 = vmatmul.mubr.bf16.gmra.mrb[0].mxu0 %v2432
  %v2942 = vpop.f32.mrb[0].mxu0
  %v2943 = vadd.f32 0.0, %v2942
  %v2944 = vpop.f32.mrb[0].mxu0
  %v2945 = vadd.f32 0.0, %v2944
  %v2946 = vpop.f32.mrb[0].mxu0
  %v2947 = vadd.f32 0.0, %v2946
  %v2948 = vpop.f32.mrb[0].mxu0
  %v2949 = vadd.f32 0.0, %v2948
  %2950 = vmatprep.mubr.bf16.mxu0 0
  %2951 = vmatmul.mubr.bf16.gmra.mrb[0].mxu0 %v2433
  %v2952 = vpop.f32.mrb[0].mxu0
  %v2953 = vadd.f32 0.0, %v2952
  %v2954 = vpop.f32.mrb[0].mxu0
  %v2955 = vadd.f32 0.0, %v2954
  %v2956 = vpop.f32.mrb[0].mxu0
  %v2957 = vadd.f32 0.0, %v2956
  %v2958 = vpop.f32.mrb[0].mxu0
  %v2959 = vadd.f32 0.0, %v2958
  %2960 = vmatprep.mubr.bf16.mxu0 0
  %2961 = vmatmul.mubr.bf16.gmra.mrb[0].mxu0 %v2434
  %v2962 = vpop.f32.mrb[0].mxu0
  %v2963 = vadd.f32 0.0, %v2962
  %v2964 = vpop.f32.mrb[0].mxu0
  %v2965 = vadd.f32 0.0, %v2964
  %v2966 = vpop.f32.mrb[0].mxu0
  %v2967 = vadd.f32 0.0, %v2966
  %v2968 = vpop.f32.mrb[0].mxu0
  %v2969 = vadd.f32 0.0, %v2968
  %2970 = vmatprep.mubr.bf16.mxu0 0
  %2971 = vmatmul.mubr.bf16.gmra.mrb[0].mxu0 %v2435
  %v2972 = vpop.f32.mrb[0].mxu0
  %v2973 = vadd.f32 0.0, %v2972
  %v2974 = vpop.f32.mrb[0].mxu0
  %v2975 = vadd.f32 0.0, %v2974
  %v2976 = vpop.f32.mrb[0].mxu0
  %v2977 = vadd.f32 0.0, %v2976
  %v2978 = vpop.f32.mrb[0].mxu0
  %v2979 = vadd.f32 0.0, %v2978
  %2980 = vmatprep.mubr.bf16.mxu0 0
  %2981 = vmatmul.mubr.bf16.gmra.mrb[0].mxu0 %v2436
  %v2982 = vpop.f32.mrb[0].mxu0
  %v2983 = vadd.f32 0.0, %v2982
  %v2984 = vpop.f32.mrb[0].mxu0
  %v2985 = vadd.f32 0.0, %v2984
  %v2986 = vpop.f32.mrb[0].mxu0
  %v2987 = vadd.f32 0.0, %v2986
  %v2988 = vpop.f32.mrb[0].mxu0
  %v2989 = vadd.f32 0.0, %v2988
  %2990 = vmatprep.mubr.bf16.mxu0 0
  %2991 = vmatmul.mubr.bf16.gmra.mrb[0].mxu0 %v2437
  %v2992 = vpop.f32.mrb[0].mxu0
  %v2993 = vadd.f32 0.0, %v2992
  %v2994 = vpop.f32.mrb[0].mxu0
  %v2995 = vadd.f32 0.0, %v2994
  %v2996 = vpop.f32.mrb[0].mxu0
  %v2997 = vadd.f32 0.0, %v2996
  %v2998 = vpop.f32.mrb[0].mxu0
  %v2999 = vadd.f32 0.0, %v2998
  %3000 = vdwg.mxu0
  %v3017 = vunpack.c.l.b16 %v2776
  %v3018 = vunpack.c.h.b16 %v2776
  %v3019 = vunpack.c.l.b16 %v2777
  %v3020 = vunpack.c.h.b16 %v2777
  %v3021 = vunpack.c.l.b16 %v2778
  %v3022 = vunpack.c.h.b16 %v2778
  %v3023 = vunpack.c.l.b16 %v2779
  %v3024 = vunpack.c.h.b16 %v2779
  %v3025 = vunpack.c.l.b16 %v2780
  %v3026 = vunpack.c.h.b16 %v2780
  %v3027 = vunpack.c.l.b16 %v2781
  %v3028 = vunpack.c.h.b16 %v2781
  %v3029 = vunpack.c.l.b16 %v2782
  %v3030 = vunpack.c.h.b16 %v2782
  %v3031 = vunpack.c.l.b16 %v2783
  %v3032 = vunpack.c.h.b16 %v2783
  %v3033 = vunpack.c.l.b16 %v2784
  %v3034 = vunpack.c.h.b16 %v2784
  %v3035 = vunpack.c.l.b16 %v2785
  %v3036 = vunpack.c.h.b16 %v2785
  %v3037 = vunpack.c.l.b16 %v2786
  %v3038 = vunpack.c.h.b16 %v2786
  %v3039 = vunpack.c.l.b16 %v2787
  %v3040 = vunpack.c.h.b16 %v2787
  %v3041 = vunpack.c.l.b16 %v2788
  %v3042 = vunpack.c.h.b16 %v2788
  %v3043 = vunpack.c.l.b16 %v2789
  %v3044 = vunpack.c.h.b16 %v2789
  %v3045 = vunpack.c.l.b16 %v2790
  %v3046 = vunpack.c.h.b16 %v2790
  %v3047 = vunpack.c.l.b16 %v2791
  %v3048 = vunpack.c.h.b16 %v2791
  %v3049 = vpack.c.b16 %v3019, %v3017
  %v3050 = vpack.c.b16 %v3020, %v3018
  %v3051 = vpack.c.b16 %v3023, %v3021
  %v3052 = vpack.c.b16 %v3024, %v3022
  %v3053 = vpack.c.b16 %v3027, %v3025
  %v3054 = vpack.c.b16 %v3028, %v3026
  %v3055 = vpack.c.b16 %v3031, %v3029
  %v3056 = vpack.c.b16 %v3032, %v3030
  %v3057 = vpack.c.b16 %v3035, %v3033
  %v3058 = vpack.c.b16 %v3036, %v3034
  %v3059 = vpack.c.b16 %v3039, %v3037
  %v3060 = vpack.c.b16 %v3040, %v3038
  %v3061 = vpack.c.b16 %v3043, %v3041
  %v3062 = vpack.c.b16 %v3044, %v3042
  %v3063 = vpack.c.b16 %v3047, %v3045
  %v3064 = vpack.c.b16 %v3048, %v3046
  %3081 = vmatprep.subr.bf16.mxu0 %v3050
  %3082 = vmatpush1.bf16.msra.mxu0 %v3049
  %3083 = vmatprep.subr.bf16.mxu0 %v3052
  %3084 = vmatpush1.bf16.msra.mxu0 %v3051
  %3085 = vmatprep.subr.bf16.mxu0 %v3054
  %3086 = vmatpush1.bf16.msra.mxu0 %v3053
  %3087 = vmatprep.subr.bf16.mxu0 %v3056
  %3088 = vmatpush1.bf16.msra.mxu0 %v3055
  %3089 = vmatprep.subr.bf16.mxu0 %v3058
  %3090 = vmatpush1.bf16.msra.mxu0 %v3057
  %3091 = vmatprep.subr.bf16.mxu0 %v3060
  %3092 = vmatpush1.bf16.msra.mxu0 %v3059
  %3093 = vmatprep.subr.bf16.mxu0 %v3062
  %3094 = vmatpush1.bf16.msra.mxu0 %v3061
  %3095 = vmatprep.subr.bf16.mxu0 %v3064
  %3096 = vmatpush1.bf16.msra.mxu0 %v3063
  %3097 = vmatprep.subr.bf16.mxu0 0
  %3098 = vmatpush1.bf16.msra.mxu0 0
  %3099 = vmatprep.subr.bf16.mxu0 0
  %3100 = vmatpush1.bf16.msra.mxu0 0
  %3101 = vmatprep.subr.bf16.mxu0 0
  %3102 = vmatpush1.bf16.msra.mxu0 0
  %3103 = vmatprep.subr.bf16.mxu0 0
  %3104 = vmatpush1.bf16.msra.mxu0 0
  %3105 = vmatprep.subr.bf16.mxu0 0
  %3106 = vmatpush1.bf16.msra.mxu0 0
  %3107 = vmatprep.subr.bf16.mxu0 0
  %3108 = vmatpush1.bf16.msra.mxu0 0
  %3109 = vmatprep.subr.bf16.mxu0 0
  %3110 = vmatpush1.bf16.msra.mxu0 0
  %3111 = vmatprep.subr.bf16.mxu0 0
  %3112 = vmatpush1.bf16.msra.mxu0 0
  %3113 = vmatprep.mubr.bf16.mxu0 0
  %3114 = vmatmul.mubr.bf16.gmra.mrb[0].mxu0 %v2599
  %v3115 = vpop.f32.mrb[0].mxu0
  %v3116 = vadd.f32 %v2923, %v3115
  %v3117 = vpop.f32.mrb[0].mxu0
  %v3118 = vadd.f32 %v2925, %v3117
  %v3119 = vpop.f32.mrb[0].mxu0
  %v3120 = vadd.f32 %v2927, %v3119
  %v3121 = vpop.f32.mrb[0].mxu0
  %v3122 = vadd.f32 %v2929, %v3121
  %3123 = vmatprep.mubr.bf16.mxu0 0
  %3124 = vmatmul.mubr.bf16.gmra.mrb[0].mxu0 %v2600
  %v3125 = vpop.f32.mrb[0].mxu0
  %v3126 = vadd.f32 %v2933, %v3125
  %v3127 = vpop.f32.mrb[0].mxu0
  %v3128 = vadd.f32 %v2935, %v3127
  %v3129 = vpop.f32.mrb[0].mxu0
  %v3130 = vadd.f32 %v2937, %v3129
  %v3131 = vpop.f32.mrb[0].mxu0
  %v3132 = vadd.f32 %v2939, %v3131
  %3133 = vmatprep.mubr.bf16.mxu0 0
  %3134 = vmatmul.mubr.bf16.gmra.mrb[0].mxu0 %v2601
  %v3135 = vpop.f32.mrb[0].mxu0
  %v3136 = vadd.f32 %v2943, %v3135
  %v3137 = vpop.f32.mrb[0].mxu0
  %v3138 = vadd.f32 %v2945, %v3137
  %v3139 = vpop.f32.mrb[0].mxu0
  %v3140 = vadd.f32 %v2947, %v3139
  %v3141 = vpop.f32.mrb[0].mxu0
  %v3142 = vadd.f32 %v2949, %v3141
  %3143 = vmatprep.mubr.bf16.mxu0 0
  %3144 = vmatmul.mubr.bf16.gmra.mrb[0].mxu0 %v2602
  %v3145 = vpop.f32.mrb[0].mxu0
  %v3146 = vadd.f32 %v2953, %v3145
  %v3147 = vpop.f32.mrb[0].mxu0
  %v3148 = vadd.f32 %v2955, %v3147
  %v3149 = vpop.f32.mrb[0].mxu0
  %v3150 = vadd.f32 %v2957, %v3149
  %v3151 = vpop.f32.mrb[0].mxu0
  %v3152 = vadd.f32 %v2959, %v3151
  %3153 = vmatprep.mubr.bf16.mxu0 0
  %3154 = vmatmul.mubr.bf16.gmra.mrb[0].mxu0 %v2603
  %v3155 = vpop.f32.mrb[0].mxu0
  %v3156 = vadd.f32 %v2963, %v3155
  %v3157 = vpop.f32.mrb[0].mxu0
  %v3158 = vadd.f32 %v2965, %v3157
  %v3159 = vpop.f32.mrb[0].mxu0
  %v3160 = vadd.f32 %v2967, %v3159
  %v3161 = vpop.f32.mrb[0].mxu0
  %v3162 = vadd.f32 %v2969, %v3161
  %3163 = vmatprep.mubr.bf16.mxu0 0
  %3164 = vmatmul.mubr.bf16.gmra.mrb[0].mxu0 %v2604
  %v3165 = vpop.f32.mrb[0].mxu0
  %v3166 = vadd.f32 %v2973, %v3165
  %v3167 = vpop.f32.mrb[0].mxu0
  %v3168 = vadd.f32 %v2975, %v3167
  %v3169 = vpop.f32.mrb[0].mxu0
  %v3170 = vadd.f32 %v2977, %v3169
  %v3171 = vpop.f32.mrb[0].mxu0
  %v3172 = vadd.f32 %v2979, %v3171
  %3173 = vmatprep.mubr.bf16.mxu0 0
  %3174 = vmatmul.mubr.bf16.gmra.mrb[0].mxu0 %v2605
  %v3175 = vpop.f32.mrb[0].mxu0
  %v3176 = vadd.f32 %v2983, %v3175
  %v3177 = vpop.f32.mrb[0].mxu0
  %v3178 = vadd.f32 %v2985, %v3177
  %v3179 = vpop.f32.mrb[0].mxu0
  %v3180 = vadd.f32 %v2987, %v3179
  %v3181 = vpop.f32.mrb[0].mxu0
  %v3182 = vadd.f32 %v2989, %v3181
  %3183 = vmatprep.mubr.bf16.mxu0 0
  %3184 = vmatmul.mubr.bf16.gmra.mrb[0].mxu0 %v2606
  %v3185 = vpop.f32.mrb[0].mxu0
  %v3186 = vadd.f32 %v2993, %v3185
  %v3187 = vpop.f32.mrb[0].mxu0
  %v3188 = vadd.f32 %v2995, %v3187
  %v3189 = vpop.f32.mrb[0].mxu0
  %v3190 = vadd.f32 %v2997, %v3189
  %v3191 = vpop.f32.mrb[0].mxu0
  %v3192 = vadd.f32 %v2999, %v3191
  %3193 = vdwg.mxu0
  %v3194 = vld [vmem:[%s2 + $0x2b0] sm:$0xff]
  %v3195 = vld [vmem:[%s2 + $0x2b8] sm:$0xff]
  %v3196 = vld [vmem:[%s2 + $0x2c0] sm:$0xff]
  %v3197 = vld [vmem:[%s2 + $0x2c8] sm:$0xff]
  %v3198 = vld [vmem:[%s2 + $0x2d0] sm:$0xff]
  %v3199 = vld [vmem:[%s2 + $0x2d8] sm:$0xff]
  %v3200 = vld [vmem:[%s2 + $0x2e0] sm:$0xff]
  %v3201 = vld [vmem:[%s2 + $0x2e8] sm:$0xff]
  %v3202 = vld [vmem:[%s2 + $0x2f0] sm:$0xff]
  %v3203 = vld [vmem:[%s2 + $0x2f8] sm:$0xff]
  %v3204 = vld [vmem:[%s2 + $0x300] sm:$0xff]
  %v3205 = vld [vmem:[%s2 + $0x308] sm:$0xff]
  %v3206 = vld [vmem:[%s2 + $0x310] sm:$0xff]
  %v3207 = vld [vmem:[%s2 + $0x318] sm:$0xff]
  %v3208 = vld [vmem:[%s2 + $0x320] sm:$0xff]
  %v3209 = vld [vmem:[%s2 + $0x328] sm:$0xff]
  %v3226 = vunpack.c.l.b16 %v3194
  %v3227 = vunpack.c.h.b16 %v3194
  %v3228 = vunpack.c.l.b16 %v3195
  %v3229 = vunpack.c.h.b16 %v3195
  %v3230 = vunpack.c.l.b16 %v3196
  %v3231 = vunpack.c.h.b16 %v3196
  %v3232 = vunpack.c.l.b16 %v3197
  %v3233 = vunpack.c.h.b16 %v3197
  %v3234 = vunpack.c.l.b16 %v3198
  %v3235 = vunpack.c.h.b16 %v3198
  %v3236 = vunpack.c.l.b16 %v3199
  %v3237 = vunpack.c.h.b16 %v3199
  %v3238 = vunpack.c.l.b16 %v3200
  %v3239 = vunpack.c.h.b16 %v3200
  %v3240 = vunpack.c.l.b16 %v3201
  %v3241 = vunpack.c.h.b16 %v3201
  %v3242 = vunpack.c.l.b16 %v3202
  %v3243 = vunpack.c.h.b16 %v3202
  %v3244 = vunpack.c.l.b16 %v3203
  %v3245 = vunpack.c.h.b16 %v3203
  %v3246 = vunpack.c.l.b16 %v3204
  %v3247 = vunpack.c.h.b16 %v3204
  %v3248 = vunpack.c.l.b16 %v3205
  %v3249 = vunpack.c.h.b16 %v3205
  %v3250 = vunpack.c.l.b16 %v3206
  %v3251 = vunpack.c.h.b16 %v3206
  %v3252 = vunpack.c.l.b16 %v3207
  %v3253 = vunpack.c.h.b16 %v3207
  %v3254 = vunpack.c.l.b16 %v3208
  %v3255 = vunpack.c.h.b16 %v3208
  %v3256 = vunpack.c.l.b16 %v3209
  %v3257 = vunpack.c.h.b16 %v3209
  %v3258 = vpack.c.b16 %v3228, %v3226
  %v3259 = vpack.c.b16 %v3229, %v3227
  %v3260 = vpack.c.b16 %v3232, %v3230
  %v3261 = vpack.c.b16 %v3233, %v3231
  %v3262 = vpack.c.b16 %v3236, %v3234
  %v3263 = vpack.c.b16 %v3237, %v3235
  %v3264 = vpack.c.b16 %v3240, %v3238
  %v3265 = vpack.c.b16 %v3241, %v3239
  %v3266 = vpack.c.b16 %v3244, %v3242
  %v3267 = vpack.c.b16 %v3245, %v3243
  %v3268 = vpack.c.b16 %v3248, %v3246
  %v3269 = vpack.c.b16 %v3249, %v3247
  %v3270 = vpack.c.b16 %v3252, %v3250
  %v3271 = vpack.c.b16 %v3253, %v3251
  %v3272 = vpack.c.b16 %v3256, %v3254
  %v3273 = vpack.c.b16 %v3257, %v3255
  %3290 = vmatprep.subr.bf16.mxu0 %v3259
  %3291 = vmatpush1.bf16.msra.mxu0 %v3258
  %3292 = vmatprep.subr.bf16.mxu0 %v3261
  %3293 = vmatpush1.bf16.msra.mxu0 %v3260
  %3294 = vmatprep.subr.bf16.mxu0 %v3263
  %3295 = vmatpush1.bf16.msra.mxu0 %v3262
  %3296 = vmatprep.subr.bf16.mxu0 %v3265
  %3297 = vmatpush1.bf16.msra.mxu0 %v3264
  %3298 = vmatprep.subr.bf16.mxu0 %v3267
  %3299 = vmatpush1.bf16.msra.mxu0 %v3266
  %3300 = vmatprep.subr.bf16.mxu0 %v3269
  %3301 = vmatpush1.bf16.msra.mxu0 %v3268
  %3302 = vmatprep.subr.bf16.mxu0 %v3271
  %3303 = vmatpush1.bf16.msra.mxu0 %v3270
  %3304 = vmatprep.subr.bf16.mxu0 %v3273
  %3305 = vmatpush1.bf16.msra.mxu0 %v3272
  %3306 = vmatprep.subr.bf16.mxu0 0
  %3307 = vmatpush1.bf16.msra.mxu0 0
  %3308 = vmatprep.subr.bf16.mxu0 0
  %3309 = vmatpush1.bf16.msra.mxu0 0
  %3310 = vmatprep.subr.bf16.mxu0 0
  %3311 = vmatpush1.bf16.msra.mxu0 0
  %3312 = vmatprep.subr.bf16.mxu0 0
  %3313 = vmatpush1.bf16.msra.mxu0 0
  %3314 = vmatprep.subr.bf16.mxu0 0
  %3315 = vmatpush1.bf16.msra.mxu0 0
  %3316 = vmatprep.subr.bf16.mxu0 0
  %3317 = vmatpush1.bf16.msra.mxu0 0
  %3318 = vmatprep.subr.bf16.mxu0 0
  %3319 = vmatpush1.bf16.msra.mxu0 0
  %3320 = vmatprep.subr.bf16.mxu0 0
  %3321 = vmatpush1.bf16.msra.mxu0 0
  %3322 = vmatprep.mubr.bf16.mxu0 0
  %3323 = vmatmul.mubr.bf16.gmra.mrb[0].mxu0 %v2768
  %v3324 = vpop.f32.mrb[0].mxu0
  %v3325 = vadd.f32 0.0, %v3324
  %v3326 = vpop.f32.mrb[0].mxu0
  %v3327 = vadd.f32 0.0, %v3326
  %v3328 = vpop.f32.mrb[0].mxu0
  %v3329 = vadd.f32 0.0, %v3328
  %v3330 = vpop.f32.mrb[0].mxu0
  %v3331 = vadd.f32 0.0, %v3330
  %3332 = vmatprep.mubr.bf16.mxu0 0
  %3333 = vmatmul.mubr.bf16.gmra.mrb[0].mxu0 %v2769
  %v3334 = vpop.f32.mrb[0].mxu0
  %v3335 = vadd.f32 0.0, %v3334
  %v3336 = vpop.f32.mrb[0].mxu0
  %v3337 = vadd.f32 0.0, %v3336
  %v3338 = vpop.f32.mrb[0].mxu0
  %v3339 = vadd.f32 0.0, %v3338
  %v3340 = vpop.f32.mrb[0].mxu0
  %v3341 = vadd.f32 0.0, %v3340
  %3342 = vmatprep.mubr.bf16.mxu0 0
  %3343 = vmatmul.mubr.bf16.gmra.mrb[0].mxu0 %v2770
  %v3344 = vpop.f32.mrb[0].mxu0
  %v3345 = vadd.f32 0.0, %v3344
  %v3346 = vpop.f32.mrb[0].mxu0
  %v3347 = vadd.f32 0.0, %v3346
  %v3348 = vpop.f32.mrb[0].mxu0
  %v3349 = vadd.f32 0.0, %v3348
  %v3350 = vpop.f32.mrb[0].mxu0
  %v3351 = vadd.f32 0.0, %v3350
  %3352 = vmatprep.mubr.bf16.mxu0 0
  %3353 = vmatmul.mubr.bf16.gmra.mrb[0].mxu0 %v2771
  %v3354 = vpop.f32.mrb[0].mxu0
  %v3355 = vadd.f32 0.0, %v3354
  %v3356 = vpop.f32.mrb[0].mxu0
  %v3357 = vadd.f32 0.0, %v3356
  %v3358 = vpop.f32.mrb[0].mxu0
  %v3359 = vadd.f32 0.0, %v3358
  %v3360 = vpop.f32.mrb[0].mxu0
  %v3361 = vadd.f32 0.0, %v3360
  %3362 = vmatprep.mubr.bf16.mxu0 0
  %3363 = vmatmul.mubr.bf16.gmra.mrb[0].mxu0 %v2772
  %v3364 = vpop.f32.mrb[0].mxu0
  %v3365 = vadd.f32 0.0, %v3364
  %v3366 = vpop.f32.mrb[0].mxu0
  %v3367 = vadd.f32 0.0, %v3366
  %v3368 = vpop.f32.mrb[0].mxu0
  %v3369 = vadd.f32 0.0, %v3368
  %v3370 = vpop.f32.mrb[0].mxu0
  %v3371 = vadd.f32 0.0, %v3370
  %3372 = vmatprep.mubr.bf16.mxu0 0
  %3373 = vmatmul.mubr.bf16.gmra.mrb[0].mxu0 %v2773
  %v3374 = vpop.f32.mrb[0].mxu0
  %v3375 = vadd.f32 0.0, %v3374
  %v3376 = vpop.f32.mrb[0].mxu0
  %v3377 = vadd.f32 0.0, %v3376
  %v3378 = vpop.f32.mrb[0].mxu0
  %v3379 = vadd.f32 0.0, %v3378
  %v3380 = vpop.f32.mrb[0].mxu0
  %v3381 = vadd.f32 0.0, %v3380
  %3382 = vmatprep.mubr.bf16.mxu0 0
  %3383 = vmatmul.mubr.bf16.gmra.mrb[0].mxu0 %v2774
  %v3384 = vpop.f32.mrb[0].mxu0
  %v3385 = vadd.f32 0.0, %v3384
  %v3386 = vpop.f32.mrb[0].mxu0
  %v3387 = vadd.f32 0.0, %v3386
  %v3388 = vpop.f32.mrb[0].mxu0
  %v3389 = vadd.f32 0.0, %v3388
  %v3390 = vpop.f32.mrb[0].mxu0
  %v3391 = vadd.f32 0.0, %v3390
  %3392 = vmatprep.mubr.bf16.mxu0 0
  %3393 = vmatmul.mubr.bf16.gmra.mrb[0].mxu0 %v2775
  %v3394 = vpop.f32.mrb[0].mxu0
  %v3395 = vadd.f32 0.0, %v3394
  %v3396 = vpop.f32.mrb[0].mxu0
  %v3397 = vadd.f32 0.0, %v3396
  %v3398 = vpop.f32.mrb[0].mxu0
  %v3399 = vadd.f32 0.0, %v3398
  %v3400 = vpop.f32.mrb[0].mxu0
  %v3401 = vadd.f32 0.0, %v3400
  %3402 = vdwg.mxu0
  %v3403 = vadd.f32 %v3116, %v3325
  %v3404 = vadd.f32 %v3118, %v3327
  %v3405 = vadd.f32 %v3120, %v3329
  %v3406 = vadd.f32 %v3122, %v3331
  %v3407 = vadd.f32 %v3126, %v3335
  %v3408 = vadd.f32 %v3128, %v3337
  %v3409 = vadd.f32 %v3130, %v3339
  %v3410 = vadd.f32 %v3132, %v3341
  %v3411 = vadd.f32 %v3136, %v3345
  %v3412 = vadd.f32 %v3138, %v3347
  %v3413 = vadd.f32 %v3140, %v3349
  %v3414 = vadd.f32 %v3142, %v3351
  %v3415 = vadd.f32 %v3146, %v3355
  %v3416 = vadd.f32 %v3148, %v3357
  %v3417 = vadd.f32 %v3150, %v3359
  %v3418 = vadd.f32 %v3152, %v3361
  %v3419 = vadd.f32 %v3156, %v3365
  %v3420 = vadd.f32 %v3158, %v3367
  %v3421 = vadd.f32 %v3160, %v3369
  %v3422 = vadd.f32 %v3162, %v3371
  %v3423 = vadd.f32 %v3166, %v3375
  %v3424 = vadd.f32 %v3168, %v3377
  %v3425 = vadd.f32 %v3170, %v3379
  %v3426 = vadd.f32 %v3172, %v3381
  %v3427 = vadd.f32 %v3176, %v3385
  %v3428 = vadd.f32 %v3178, %v3387
  %v3429 = vadd.f32 %v3180, %v3389
  %v3430 = vadd.f32 %v3182, %v3391
  %v3431 = vadd.f32 %v3186, %v3395
  %v3432 = vadd.f32 %v3188, %v3397
  %v3433 = vadd.f32 %v3190, %v3399
  %v3434 = vadd.f32 %v3192, %v3401
  %s3435 = scalar_lea.vmem %s3, 2
  %v3436 = vld [vmem:[%s3435] ss:$8 sm:$0x3]
  %v3438 = vlaneseq
  %v3439 = vshrl.u32 %v3438, 7
  %v3440 = vsub.s32 0, %v3439
  %v3441 = vrot.slane %v3436, %v3440
  %v3442 = vlaneseq
  %v3443 = vshrl.u32 %v3442, 7
  %v3444 = vsub.s32 1, %v3443
  %v3445 = vrot.slane %v3436, %v3444
  %v3448 = vadd.f32 %v3403, %v3441
  %v3449 = vadd.f32 %v3404, %v3445
  %v3450 = vadd.f32 %v3405, %v3441
  %v3451 = vadd.f32 %v3406, %v3445
  %v3452 = vadd.f32 %v3407, %v3441
  %v3453 = vadd.f32 %v3408, %v3445
  %v3454 = vadd.f32 %v3409, %v3441
  %v3455 = vadd.f32 %v3410, %v3445
  %v3456 = vadd.f32 %v3411, %v3441
  %v3457 = vadd.f32 %v3412, %v3445
  %v3458 = vadd.f32 %v3413, %v3441
  %v3459 = vadd.f32 %v3414, %v3445
  %v3460 = vadd.f32 %v3415, %v3441
  %v3461 = vadd.f32 %v3416, %v3445
  %v3462 = vadd.f32 %v3417, %v3441
  %v3463 = vadd.f32 %v3418, %v3445
  %v3464 = vadd.f32 %v3419, %v3441
  %v3465 = vadd.f32 %v3420, %v3445
  %v3466 = vadd.f32 %v3421, %v3441
  %v3467 = vadd.f32 %v3422, %v3445
  %v3468 = vadd.f32 %v3423, %v3441
  %v3469 = vadd.f32 %v3424, %v3445
  %v3470 = vadd.f32 %v3425, %v3441
  %v3471 = vadd.f32 %v3426, %v3445
  %v3472 = vadd.f32 %v3427, %v3441
  %v3473 = vadd.f32 %v3428, %v3445
  %v3474 = vadd.f32 %v3429, %v3441
  %v3475 = vadd.f32 %v3430, %v3445
  %v3476 = vadd.f32 %v3431, %v3441
  %v3477 = vadd.f32 %v3432, %v3445
  %v3478 = vadd.f32 %v3433, %v3441
  %v3479 = vadd.f32 %v3434, %v3445
  %v3480 = vmax.f32 %v3448, 0.0
  %v3481 = vmax.f32 %v3449, 0.0
  %v3482 = vmax.f32 %v3450, 0.0
  %v3483 = vmax.f32 %v3451, 0.0
  %v3484 = vmax.f32 %v3452, 0.0
  %v3485 = vmax.f32 %v3453, 0.0
  %v3486 = vmax.f32 %v3454, 0.0
  %v3487 = vmax.f32 %v3455, 0.0
  %v3488 = vmax.f32 %v3456, 0.0
  %v3489 = vmax.f32 %v3457, 0.0
  %v3490 = vmax.f32 %v3458, 0.0
  %v3491 = vmax.f32 %v3459, 0.0
  %v3492 = vmax.f32 %v3460, 0.0
  %v3493 = vmax.f32 %v3461, 0.0
  %v3494 = vmax.f32 %v3462, 0.0
  %v3495 = vmax.f32 %v3463, 0.0
  %v3496 = vmax.f32 %v3464, 0.0
  %v3497 = vmax.f32 %v3465, 0.0
  %v3498 = vmax.f32 %v3466, 0.0
  %v3499 = vmax.f32 %v3467, 0.0
  %v3500 = vmax.f32 %v3468, 0.0
  %v3501 = vmax.f32 %v3469, 0.0
  %v3502 = vmax.f32 %v3470, 0.0
  %v3503 = vmax.f32 %v3471, 0.0
  %v3504 = vmax.f32 %v3472, 0.0
  %v3505 = vmax.f32 %v3473, 0.0
  %v3506 = vmax.f32 %v3474, 0.0
  %v3507 = vmax.f32 %v3475, 0.0
  %v3508 = vmax.f32 %v3476, 0.0
  %v3509 = vmax.f32 %v3477, 0.0
  %v3510 = vmax.f32 %v3478, 0.0
  %v3511 = vmax.f32 %v3479, 0.0
  %v3512 = vld [vmem:[%s4 + $0x280] sm:$0xf]
  %v3513 = vld [vmem:[%s4 + $0x284] sm:$0xf]
  %v3514 = vpack.c.bf16 %v3482, %v3480
  %v3515 = vpack.c.bf16 %v3483, %v3481
  %v3516 = vpack.c.bf16 %v3486, %v3484
  %v3517 = vpack.c.bf16 %v3487, %v3485
  %v3518 = vpack.c.bf16 %v3490, %v3488
  %v3519 = vpack.c.bf16 %v3491, %v3489
  %v3520 = vpack.c.bf16 %v3494, %v3492
  %v3521 = vpack.c.bf16 %v3495, %v3493
  %v3522 = vpack.c.bf16 %v3498, %v3496
  %v3523 = vpack.c.bf16 %v3499, %v3497
  %v3524 = vpack.c.bf16 %v3502, %v3500
  %v3525 = vpack.c.bf16 %v3503, %v3501
  %v3526 = vpack.c.bf16 %v3506, %v3504
  %v3527 = vpack.c.bf16 %v3507, %v3505
  %v3528 = vpack.c.bf16 %v3510, %v3508
  %v3529 = vpack.c.bf16 %v3511, %v3509
  %v3532 = vunpack.c.l.b16 %v3512
  %v3533 = vunpack.c.l.b16 %v3513
  %v3534 = vpack.c.b16 %v3533, %v3532
  %3536 = vmatprep.subr.bf16.mxu0 %v3515
  %3537 = vmatpush1.bf16.msra.mxu0 %v3514
  %3538 = vmatprep.subr.bf16.mxu0 %v3517
  %3539 = vmatpush1.bf16.msra.mxu0 %v3516
  %3540 = vmatprep.subr.bf16.mxu0 %v3519
  %3541 = vmatpush1.bf16.msra.mxu0 %v3518
  %3542 = vmatprep.subr.bf16.mxu0 %v3521
  %3543 = vmatpush1.bf16.msra.mxu0 %v3520
  %3544 = vmatprep.subr.bf16.mxu0 %v3523
  %3545 = vmatpush1.bf16.msra.mxu0 %v3522
  %3546 = vmatprep.subr.bf16.mxu0 %v3525
  %3547 = vmatpush1.bf16.msra.mxu0 %v3524
  %3548 = vmatprep.subr.bf16.mxu0 %v3527
  %3549 = vmatpush1.bf16.msra.mxu0 %v3526
  %3550 = vmatprep.subr.bf16.mxu0 %v3529
  %3551 = vmatpush1.bf16.msra.mxu0 %v3528
  %3552 = vmatprep.subr.bf16.mxu0 0
  %3553 = vmatpush1.bf16.msra.mxu0 0
  %3554 = vmatprep.subr.bf16.mxu0 0
  %3555 = vmatpush1.bf16.msra.mxu0 0
  %3556 = vmatprep.subr.bf16.mxu0 0
  %3557 = vmatpush1.bf16.msra.mxu0 0
  %3558 = vmatprep.subr.bf16.mxu0 0
  %3559 = vmatpush1.bf16.msra.mxu0 0
  %3560 = vmatprep.subr.bf16.mxu0 0
  %3561 = vmatpush1.bf16.msra.mxu0 0
  %3562 = vmatprep.subr.bf16.mxu0 0
  %3563 = vmatpush1.bf16.msra.mxu0 0
  %3564 = vmatprep.subr.bf16.mxu0 0
  %3565 = vmatpush1.bf16.msra.mxu0 0
  %3566 = vmatprep.subr.bf16.mxu0 0
  %3567 = vmatpush1.bf16.msra.mxu0 0
  %3568 = vmatprep.mubr.bf16.mxu0 0
  %3569 = vmatmul.mubr.bf16.gmra.mrb[0].mxu0 %v3534
  %v3570 = vpop.f32.mrb[0].mxu0
  %v3571 = vadd.f32 0.0, %v3570
  %v3572 = vpop.f32.mrb[0].mxu0
  %v3573 = vadd.f32 0.0, %v3572
  %v3574 = vpop.f32.mrb[0].mxu0
  %v3575 = vadd.f32 0.0, %v3574
  %v3576 = vpop.f32.mrb[0].mxu0
  %v3577 = vadd.f32 0.0, %v3576
  %3578 = vdwg.mxu0
  %v3579 = vmul.f32 %v3571, 0.33333334
  %v3580 = vmul.f32 %v3573, 0.33333334
  %v3581 = vmul.f32 %v3575, 0.33333334
  %v3582 = vmul.f32 %v3577, 0.33333334
  %v3583 = vld [vmem:[%s1] sm:$0xf]
  %v3584 = vld [vmem:[%s1 + $0x4] sm:$0xf]
  %v3585 = vld [vmem:[%s2 + $0x330] sm:$0xf]
  %v3586 = vld [vmem:[%s2 + $0x338] sm:$0xf]
  %v3587 = vld [vmem:[%s3 + $0x3] ss:$0 sm:$0xff]
  %v3590 = vunpack.c.l.b16 %v3583
  %v3591 = vunpack.c.l.b16 %v3584
  %v3592 = vpack.c.b16 %v3591, %v3590
  %v3595 = vunpack.c.l.b16 %v3585
  %v3596 = vunpack.c.l.b16 %v3586
  %v3597 = vpack.c.b16 %v3596, %v3595
  %v3600 = vsel %vm433, %v3592, 0
  %3602 = vmatprep.subr.bf16.mxu0 0
  %3603 = vmatpush1.bf16.msra.mxu0 %v3597
  %3604 = vmatprep.subr.bf16.mxu0 0
  %3605 = vmatpush1.bf16.msra.mxu0 0
  %3606 = vmatprep.subr.bf16.mxu0 0
  %3607 = vmatpush1.bf16.msra.mxu0 0
  %3608 = vmatprep.subr.bf16.mxu0 0
  %3609 = vmatpush1.bf16.msra.mxu0 0
  %3610 = vmatprep.subr.bf16.mxu0 0
  %3611 = vmatpush1.bf16.msra.mxu0 0
  %3612 = vmatprep.subr.bf16.mxu0 0
  %3613 = vmatpush1.bf16.msra.mxu0 0
  %3614 = vmatprep.subr.bf16.mxu0 0
  %3615 = vmatpush1.bf16.msra.mxu0 0
  %3616 = vmatprep.subr.bf16.mxu0 0
  %3617 = vmatpush1.bf16.msra.mxu0 0
  %3618 = vmatprep.subr.bf16.mxu0 0
  %3619 = vmatpush1.bf16.msra.mxu0 0
  %3620 = vmatprep.subr.bf16.mxu0 0
  %3621 = vmatpush1.bf16.msra.mxu0 0
  %3622 = vmatprep.subr.bf16.mxu0 0
  %3623 = vmatpush1.bf16.msra.mxu0 0
  %3624 = vmatprep.subr.bf16.mxu0 0
  %3625 = vmatpush1.bf16.msra.mxu0 0
  %3626 = vmatprep.subr.bf16.mxu0 0
  %3627 = vmatpush1.bf16.msra.mxu0 0
  %3628 = vmatprep.subr.bf16.mxu0 0
  %3629 = vmatpush1.bf16.msra.mxu0 0
  %3630 = vmatprep.subr.bf16.mxu0 0
  %3631 = vmatpush1.bf16.msra.mxu0 0
  %3632 = vmatprep.subr.bf16.mxu0 0
  %3633 = vmatpush1.bf16.msra.mxu0 0
  %3634 = vmatprep.mubr.bf16.mxu0 0
  %3635 = vmatmul.mubr.bf16.gmra.mrb[0].mxu0 %v3600
  %v3636 = vpop.f32.mrb[0].mxu0
  %v3637 = vadd.f32 %v3587, %v3636
  %v3638 = vpop.f32.mrb[0].mxu0
  %v3639 = vpop.f32.mrb[0].mxu0
  %v3640 = vadd.f32 %v3587, %v3639
  %v3641 = vpop.f32.mrb[0].mxu0
  %3642 = vdwg.mxu0
  %v3643 = vmax.f32 %v3637, 0.0
  %v3644 = vmax.f32 %v3640, 0.0
  %v3645 = vpack.c.bf16 %v3644, %v3643
  %v3646 = vld [vmem:[%s2 + $0x340] sm:$0xf]
  %v3647 = vld [vmem:[%s2 + $0x348] sm:$0xf]
  %v3648 = vld [vmem:[%s2 + $0x350] sm:$0xf]
  %v3649 = vld [vmem:[%s2 + $0x358] sm:$0xf]
  %v3650 = vld [vmem:[%s2 + $0x360] sm:$0xf]
  %v3651 = vld [vmem:[%s2 + $0x368] sm:$0xf]
  %v3652 = vld [vmem:[%s2 + $0x370] sm:$0xf]
  %v3653 = vld [vmem:[%s2 + $0x378] sm:$0xf]
  %v3654 = vld [vmem:[%s2 + $0x380] sm:$0xf]
  %v3655 = vld [vmem:[%s2 + $0x388] sm:$0xf]
  %v3656 = vld [vmem:[%s2 + $0x390] sm:$0xf]
  %v3657 = vld [vmem:[%s2 + $0x398] sm:$0xf]
  %v3658 = vld [vmem:[%s2 + $0x3a0] sm:$0xf]
  %v3659 = vld [vmem:[%s2 + $0x3a8] sm:$0xf]
  %v3660 = vld [vmem:[%s2 + $0x3b0] sm:$0xf]
  %v3661 = vld [vmem:[%s2 + $0x3b8] sm:$0xf]
  %v3662 = vld [vmem:[%s3 + $0x4] ss:$0 sm:$0xff]
  %v3679 = vunpack.c.l.b16 %v3646
  %v3680 = vunpack.c.l.b16 %v3647
  %v3681 = vunpack.c.l.b16 %v3648
  %v3682 = vunpack.c.l.b16 %v3649
  %v3683 = vunpack.c.l.b16 %v3650
  %v3684 = vunpack.c.l.b16 %v3651
  %v3685 = vunpack.c.l.b16 %v3652
  %v3686 = vunpack.c.l.b16 %v3653
  %v3687 = vunpack.c.l.b16 %v3654
  %v3688 = vunpack.c.l.b16 %v3655
  %v3689 = vunpack.c.l.b16 %v3656
  %v3690 = vunpack.c.l.b16 %v3657
  %v3691 = vunpack.c.l.b16 %v3658
  %v3692 = vunpack.c.l.b16 %v3659
  %v3693 = vunpack.c.l.b16 %v3660
  %v3694 = vunpack.c.l.b16 %v3661
  %v3695 = vpack.c.b16 %v3680, %v3679
  %v3696 = vpack.c.b16 %v3682, %v3681
  %v3697 = vpack.c.b16 %v3684, %v3683
  %v3698 = vpack.c.b16 %v3686, %v3685
  %v3699 = vpack.c.b16 %v3688, %v3687
  %v3700 = vpack.c.b16 %v3690, %v3689
  %v3701 = vpack.c.b16 %v3692, %v3691
  %v3702 = vpack.c.b16 %v3694, %v3693
  %3711 = vmatprep.subr.bf16.mxu0 0
  %3712 = vmatpush1.bf16.msra.mxu0 %v3695
  %3713 = vmatprep.subr.bf16.mxu0 0
  %3714 = vmatpush1.bf16.msra.mxu0 %v3696
  %3715 = vmatprep.subr.bf16.mxu0 0
  %3716 = vmatpush1.bf16.msra.mxu0 %v3697
  %3717 = vmatprep.subr.bf16.mxu0 0
  %3718 = vmatpush1.bf16.msra.mxu0 %v3698
  %3719 = vmatprep.subr.bf16.mxu0 0
  %3720 = vmatpush1.bf16.msra.mxu0 %v3699
  %3721 = vmatprep.subr.bf16.mxu0 0
  %3722 = vmatpush1.bf16.msra.mxu0 %v3700
  %3723 = vmatprep.subr.bf16.mxu0 0
  %3724 = vmatpush1.bf16.msra.mxu0 %v3701
  %3725 = vmatprep.subr.bf16.mxu0 0
  %3726 = vmatpush1.bf16.msra.mxu0 %v3702
  %3727 = vmatprep.subr.bf16.mxu0 0
  %3728 = vmatpush1.bf16.msra.mxu0 0
  %3729 = vmatprep.subr.bf16.mxu0 0
  %3730 = vmatpush1.bf16.msra.mxu0 0
  %3731 = vmatprep.subr.bf16.mxu0 0
  %3732 = vmatpush1.bf16.msra.mxu0 0
  %3733 = vmatprep.subr.bf16.mxu0 0
  %3734 = vmatpush1.bf16.msra.mxu0 0
  %3735 = vmatprep.subr.bf16.mxu0 0
  %3736 = vmatpush1.bf16.msra.mxu0 0
  %3737 = vmatprep.subr.bf16.mxu0 0
  %3738 = vmatpush1.bf16.msra.mxu0 0
  %3739 = vmatprep.subr.bf16.mxu0 0
  %3740 = vmatpush1.bf16.msra.mxu0 0
  %3741 = vmatprep.subr.bf16.mxu0 0
  %3742 = vmatpush1.bf16.msra.mxu0 0
  %3743 = vmatprep.mubr.bf16.mxu0 0
  %3744 = vmatmul.mubr.bf16.gmra.mrb[0].mxu0 %v3645
  %v3745 = vpop.f32.mrb[0].mxu0
  %v3746 = vadd.f32 %v3662, %v3745
  %v3747 = vpop.f32.mrb[0].mxu0
  %v3748 = vpop.f32.mrb[0].mxu0
  %v3749 = vadd.f32 %v3662, %v3748
  %v3750 = vpop.f32.mrb[0].mxu0
  %3751 = vdwg.mxu0
  %v3752 = vmax.f32 %v3746, 0.0
  %v3753 = vmax.f32 %v3749, 0.0
  %v3754 = vpack.c.bf16 %v3581, %v3579
  %v3755 = vpack.c.bf16 %v3582, %v3580
  %v3756 = vld [vmem:[%s2 + $0x3c0] sm:$0xf]
  %v3757 = vld [vmem:[%s2 + $0x3c8] sm:$0xf]
  %v3758 = vld [vmem:[%s2 + $0x3d0] sm:$0xf]
  %v3759 = vld [vmem:[%s2 + $0x3d8] sm:$0xf]
  %v3760 = vld [vmem:[%s2 + $0x3e0] sm:$0xf]
  %v3761 = vld [vmem:[%s2 + $0x3e8] sm:$0xf]
  %v3762 = vld [vmem:[%s2 + $0x3f0] sm:$0xf]
  %v3763 = vld [vmem:[%s2 + $0x3f8] sm:$0xf]
  %v3764 = vld [vmem:[%s2 + $0x400] sm:$0xf]
  %v3765 = vld [vmem:[%s2 + $0x408] sm:$0xf]
  %v3766 = vld [vmem:[%s2 + $0x410] sm:$0xf]
  %v3767 = vld [vmem:[%s2 + $0x418] sm:$0xf]
  %v3768 = vld [vmem:[%s2 + $0x420] sm:$0xf]
  %v3769 = vld [vmem:[%s2 + $0x428] sm:$0xf]
  %v3770 = vld [vmem:[%s2 + $0x430] sm:$0xf]
  %v3771 = vld [vmem:[%s2 + $0x438] sm:$0xf]
  %v3772 = vld [vmem:[%s2 + $0x440] sm:$0xf]
  %v3773 = vld [vmem:[%s2 + $0x448] sm:$0xf]
  %v3774 = vld [vmem:[%s2 + $0x450] sm:$0xf]
  %v3775 = vld [vmem:[%s2 + $0x458] sm:$0xf]
  %v3776 = vld [vmem:[%s2 + $0x460] sm:$0xf]
  %v3777 = vld [vmem:[%s2 + $0x468] sm:$0xf]
  %v3778 = vld [vmem:[%s2 + $0x470] sm:$0xf]
  %v3779 = vld [vmem:[%s2 + $0x478] sm:$0xf]
  %v3780 = vld [vmem:[%s2 + $0x480] sm:$0xf]
  %v3781 = vld [vmem:[%s2 + $0x488] sm:$0xf]
  %v3782 = vld [vmem:[%s2 + $0x490] sm:$0xf]
  %v3783 = vld [vmem:[%s2 + $0x498] sm:$0xf]
  %v3784 = vld [vmem:[%s2 + $0x4a0] sm:$0xf]
  %v3785 = vld [vmem:[%s2 + $0x4a8] sm:$0xf]
  %v3786 = vld [vmem:[%s2 + $0x4b0] sm:$0xf]
  %v3787 = vld [vmem:[%s2 + $0x4b8] sm:$0xf]
  %v3788 = vpack.c.bf16 %v3753, %v3752
  %v3789 = vld [vmem:[%s2 + $0x4c0] sm:$0xf]
  %v3790 = vld [vmem:[%s2 + $0x4c8] sm:$0xf]
  %v3791 = vld [vmem:[%s2 + $0x4d0] sm:$0xf]
  %v3792 = vld [vmem:[%s2 + $0x4d8] sm:$0xf]
  %v3793 = vld [vmem:[%s2 + $0x4e0] sm:$0xf]
  %v3794 = vld [vmem:[%s2 + $0x4e8] sm:$0xf]
  %v3795 = vld [vmem:[%s2 + $0x4f0] sm:$0xf]
  %v3796 = vld [vmem:[%s2 + $0x4f8] sm:$0xf]
  %v3797 = vld [vmem:[%s2 + $0x500] sm:$0xf]
  %v3798 = vld [vmem:[%s2 + $0x508] sm:$0xf]
  %v3799 = vld [vmem:[%s2 + $0x510] sm:$0xf]
  %v3800 = vld [vmem:[%s2 + $0x518] sm:$0xf]
  %v3801 = vld [vmem:[%s2 + $0x520] sm:$0xf]
  %v3802 = vld [vmem:[%s2 + $0x528] sm:$0xf]
  %v3803 = vld [vmem:[%s2 + $0x530] sm:$0xf]
  %v3804 = vld [vmem:[%s2 + $0x538] sm:$0xf]
  %v3821 = vunpack.c.l.b16 %v3789
  %v3822 = vunpack.c.l.b16 %v3790
  %v3823 = vunpack.c.l.b16 %v3791
  %v3824 = vunpack.c.l.b16 %v3792
  %v3825 = vunpack.c.l.b16 %v3793
  %v3826 = vunpack.c.l.b16 %v3794
  %v3827 = vunpack.c.l.b16 %v3795
  %v3828 = vunpack.c.l.b16 %v3796
  %v3829 = vunpack.c.l.b16 %v3797
  %v3830 = vunpack.c.l.b16 %v3798
  %v3831 = vunpack.c.l.b16 %v3799
  %v3832 = vunpack.c.l.b16 %v3800
  %v3833 = vunpack.c.l.b16 %v3801
  %v3834 = vunpack.c.l.b16 %v3802
  %v3835 = vunpack.c.l.b16 %v3803
  %v3836 = vunpack.c.l.b16 %v3804
  %v3837 = vpack.c.b16 %v3822, %v3821
  %v3838 = vpack.c.b16 %v3824, %v3823
  %v3839 = vpack.c.b16 %v3826, %v3825
  %v3840 = vpack.c.b16 %v3828, %v3827
  %v3841 = vpack.c.b16 %v3830, %v3829
  %v3842 = vpack.c.b16 %v3832, %v3831
  %v3843 = vpack.c.b16 %v3834, %v3833
  %v3844 = vpack.c.b16 %v3836, %v3835
  %3853 = vmatprep.subr.bf16.mxu0 0
  %3854 = vmatpush1.bf16.msra.mxu0 %v3837
  %3855 = vmatprep.subr.bf16.mxu0 0
  %3856 = vmatpush1.bf16.msra.mxu0 %v3838
  %3857 = vmatprep.subr.bf16.mxu0 0
  %3858 = vmatpush1.bf16.msra.mxu0 %v3839
  %3859 = vmatprep.subr.bf16.mxu0 0
  %3860 = vmatpush1.bf16.msra.mxu0 %v3840
  %3861 = vmatprep.subr.bf16.mxu0 0
  %3862 = vmatpush1.bf16.msra.mxu0 %v3841
  %3863 = vmatprep.subr.bf16.mxu0 0
  %3864 = vmatpush1.bf16.msra.mxu0 %v3842
  %3865 = vmatprep.subr.bf16.mxu0 0
  %3866 = vmatpush1.bf16.msra.mxu0 %v3843
  %3867 = vmatprep.subr.bf16.mxu0 0
  %3868 = vmatpush1.bf16.msra.mxu0 %v3844
  %3869 = vmatprep.subr.bf16.mxu0 0
  %3870 = vmatpush1.bf16.msra.mxu0 0
  %3871 = vmatprep.subr.bf16.mxu0 0
  %3872 = vmatpush1.bf16.msra.mxu0 0
  %3873 = vmatprep.subr.bf16.mxu0 0
  %3874 = vmatpush1.bf16.msra.mxu0 0
  %3875 = vmatprep.subr.bf16.mxu0 0
  %3876 = vmatpush1.bf16.msra.mxu0 0
  %3877 = vmatprep.subr.bf16.mxu0 0
  %3878 = vmatpush1.bf16.msra.mxu0 0
  %3879 = vmatprep.subr.bf16.mxu0 0
  %3880 = vmatpush1.bf16.msra.mxu0 0
  %3881 = vmatprep.subr.bf16.mxu0 0
  %3882 = vmatpush1.bf16.msra.mxu0 0
  %3883 = vmatprep.subr.bf16.mxu0 0
  %3884 = vmatpush1.bf16.msra.mxu0 0
  %3885 = vmatprep.mubr.bf16.mxu0 0
  %3886 = vmatmul.mubr.bf16.gmra.mrb[0].mxu0 %v3788
  %v3887 = vpop.f32.mrb[0].mxu0
  %v3888 = vadd.f32 0.0, %v3887
  %v3889 = vpop.f32.mrb[0].mxu0
  %v3890 = vpop.f32.mrb[0].mxu0
  %v3891 = vadd.f32 0.0, %v3890
  %v3892 = vpop.f32.mrb[0].mxu0
  %3893 = vdwg.mxu0
  %v3926 = vunpack.c.l.b16 %v3756
  %v3927 = vunpack.c.l.b16 %v3757
  %v3928 = vunpack.c.l.b16 %v3758
  %v3929 = vunpack.c.l.b16 %v3759
  %v3930 = vunpack.c.l.b16 %v3760
  %v3931 = vunpack.c.l.b16 %v3761
  %v3932 = vunpack.c.l.b16 %v3762
  %v3933 = vunpack.c.l.b16 %v3763
  %v3934 = vunpack.c.l.b16 %v3764
  %v3935 = vunpack.c.l.b16 %v3765
  %v3936 = vunpack.c.l.b16 %v3766
  %v3937 = vunpack.c.l.b16 %v3767
  %v3938 = vunpack.c.l.b16 %v3768
  %v3939 = vunpack.c.l.b16 %v3769
  %v3940 = vunpack.c.l.b16 %v3770
  %v3941 = vunpack.c.l.b16 %v3771
  %v3942 = vunpack.c.l.b16 %v3772
  %v3943 = vunpack.c.l.b16 %v3773
  %v3944 = vunpack.c.l.b16 %v3774
  %v3945 = vunpack.c.l.b16 %v3775
  %v3946 = vunpack.c.l.b16 %v3776
  %v3947 = vunpack.c.l.b16 %v3777
  %v3948 = vunpack.c.l.b16 %v3778
  %v3949 = vunpack.c.l.b16 %v3779
  %v3950 = vunpack.c.l.b16 %v3780
  %v3951 = vunpack.c.l.b16 %v3781
  %v3952 = vunpack.c.l.b16 %v3782
  %v3953 = vunpack.c.l.b16 %v3783
  %v3954 = vunpack.c.l.b16 %v3784
  %v3955 = vunpack.c.l.b16 %v3785
  %v3956 = vunpack.c.l.b16 %v3786
  %v3957 = vunpack.c.l.b16 %v3787
  %v3958 = vpack.c.b16 %v3927, %v3926
  %v3959 = vpack.c.b16 %v3929, %v3928
  %v3960 = vpack.c.b16 %v3931, %v3930
  %v3961 = vpack.c.b16 %v3933, %v3932
  %v3962 = vpack.c.b16 %v3935, %v3934
  %v3963 = vpack.c.b16 %v3937, %v3936
  %v3964 = vpack.c.b16 %v3939, %v3938
  %v3965 = vpack.c.b16 %v3941, %v3940
  %v3966 = vpack.c.b16 %v3943, %v3942
  %v3967 = vpack.c.b16 %v3945, %v3944
  %v3968 = vpack.c.b16 %v3947, %v3946
  %v3969 = vpack.c.b16 %v3949, %v3948
  %v3970 = vpack.c.b16 %v3951, %v3950
  %v3971 = vpack.c.b16 %v3953, %v3952
  %v3972 = vpack.c.b16 %v3955, %v3954
  %v3973 = vpack.c.b16 %v3957, %v3956
  %3990 = vmatprep.subr.bf16.mxu0 0
  %3991 = vmatpush1.bf16.msra.mxu0 %v3958
  %3992 = vmatprep.subr.bf16.mxu0 0
  %3993 = vmatpush1.bf16.msra.mxu0 %v3959
  %3994 = vmatprep.subr.bf16.mxu0 0
  %3995 = vmatpush1.bf16.msra.mxu0 %v3960
  %3996 = vmatprep.subr.bf16.mxu0 0
  %3997 = vmatpush1.bf16.msra.mxu0 %v3961
  %3998 = vmatprep.subr.bf16.mxu0 0
  %3999 = vmatpush1.bf16.msra.mxu0 %v3962
  %4000 = vmatprep.subr.bf16.mxu0 0
  %4001 = vmatpush1.bf16.msra.mxu0 %v3963
  %4002 = vmatprep.subr.bf16.mxu0 0
  %4003 = vmatpush1.bf16.msra.mxu0 %v3964
  %4004 = vmatprep.subr.bf16.mxu0 0
  %4005 = vmatpush1.bf16.msra.mxu0 %v3965
  %4006 = vmatprep.subr.bf16.mxu0 0
  %4007 = vmatpush1.bf16.msra.mxu0 %v3966
  %4008 = vmatprep.subr.bf16.mxu0 0
  %4009 = vmatpush1.bf16.msra.mxu0 %v3967
  %4010 = vmatprep.subr.bf16.mxu0 0
  %4011 = vmatpush1.bf16.msra.mxu0 %v3968
  %4012 = vmatprep.subr.bf16.mxu0 0
  %4013 = vmatpush1.bf16.msra.mxu0 %v3969
  %4014 = vmatprep.subr.bf16.mxu0 0
  %4015 = vmatpush1.bf16.msra.mxu0 %v3970
  %4016 = vmatprep.subr.bf16.mxu0 0
  %4017 = vmatpush1.bf16.msra.mxu0 %v3971
  %4018 = vmatprep.subr.bf16.mxu0 0
  %4019 = vmatpush1.bf16.msra.mxu0 %v3972
  %4020 = vmatprep.subr.bf16.mxu0 0
  %4021 = vmatpush1.bf16.msra.mxu0 %v3973
  %4022 = vmatprep.mubr.bf16.mxu0 %v3755
  %4023 = vmatmul.mubr.bf16.gmra.mrb[0].mxu0 %v3754
  %v4024 = vpop.f32.mrb[0].mxu0
  %v4025 = vadd.f32 %v3888, %v4024
  %v4026 = vpop.f32.mrb[0].mxu0
  %v4027 = vpop.f32.mrb[0].mxu0
  %v4028 = vadd.f32 %v3891, %v4027
  %v4029 = vpop.f32.mrb[0].mxu0
  %4030 = vdwg.mxu0
  %v4031 = vld [vmem:[%s3 + $0x5] ss:$0 sm:$0xff]
  %v4032 = vadd.f32 %v4025, %v4031
  %v4033 = vadd.f32 %v4028, %v4031
  %v4034 = vmax.f32 %v4032, 0.0
  %v4035 = vmax.f32 %v4033, 0.0
  %v4036 = vpack.c.bf16 %v4035, %v4034
  %v4037 = vld [vmem:[%s2 + $0x540] sm:$0xf]
  %v4038 = vld [vmem:[%s2 + $0x548] sm:$0xf]
  %v4039 = vld [vmem:[%s2 + $0x550] sm:$0xf]
  %v4040 = vld [vmem:[%s2 + $0x558] sm:$0xf]
  %v4041 = vld [vmem:[%s2 + $0x560] sm:$0xf]
  %v4042 = vld [vmem:[%s2 + $0x568] sm:$0xf]
  %v4043 = vld [vmem:[%s2 + $0x570] sm:$0xf]
  %v4044 = vld [vmem:[%s2 + $0x578] sm:$0xf]
  %v4045 = vld [vmem:[%s2 + $0x580] sm:$0xf]
  %v4046 = vld [vmem:[%s2 + $0x588] sm:$0xf]
  %v4047 = vld [vmem:[%s2 + $0x590] sm:$0xf]
  %v4048 = vld [vmem:[%s2 + $0x598] sm:$0xf]
  %v4049 = vld [vmem:[%s2 + $0x5a0] sm:$0xf]
  %v4050 = vld [vmem:[%s2 + $0x5a8] sm:$0xf]
  %v4051 = vld [vmem:[%s2 + $0x5b0] sm:$0xf]
  %v4052 = vld [vmem:[%s2 + $0x5b8] sm:$0xf]
  %v4053 = vld [vmem:[%s3 + $0x6] ss:$0 sm:$0xff]
  %v4070 = vunpack.c.l.b16 %v4037
  %v4071 = vunpack.c.l.b16 %v4038
  %v4072 = vunpack.c.l.b16 %v4039
  %v4073 = vunpack.c.l.b16 %v4040
  %v4074 = vunpack.c.l.b16 %v4041
  %v4075 = vunpack.c.l.b16 %v4042
  %v4076 = vunpack.c.l.b16 %v4043
  %v4077 = vunpack.c.l.b16 %v4044
  %v4078 = vunpack.c.l.b16 %v4045
  %v4079 = vunpack.c.l.b16 %v4046
  %v4080 = vunpack.c.l.b16 %v4047
  %v4081 = vunpack.c.l.b16 %v4048
  %v4082 = vunpack.c.l.b16 %v4049
  %v4083 = vunpack.c.l.b16 %v4050
  %v4084 = vunpack.c.l.b16 %v4051
  %v4085 = vunpack.c.l.b16 %v4052
  %v4086 = vpack.c.b16 %v4071, %v4070
  %v4087 = vpack.c.b16 %v4073, %v4072
  %v4088 = vpack.c.b16 %v4075, %v4074
  %v4089 = vpack.c.b16 %v4077, %v4076
  %v4090 = vpack.c.b16 %v4079, %v4078
  %v4091 = vpack.c.b16 %v4081, %v4080
  %v4092 = vpack.c.b16 %v4083, %v4082
  %v4093 = vpack.c.b16 %v4085, %v4084
  %4102 = vmatprep.subr.bf16.mxu0 0
  %4103 = vmatpush1.bf16.msra.mxu0 %v4086
  %4104 = vmatprep.subr.bf16.mxu0 0
  %4105 = vmatpush1.bf16.msra.mxu0 %v4087
  %4106 = vmatprep.subr.bf16.mxu0 0
  %4107 = vmatpush1.bf16.msra.mxu0 %v4088
  %4108 = vmatprep.subr.bf16.mxu0 0
  %4109 = vmatpush1.bf16.msra.mxu0 %v4089
  %4110 = vmatprep.subr.bf16.mxu0 0
  %4111 = vmatpush1.bf16.msra.mxu0 %v4090
  %4112 = vmatprep.subr.bf16.mxu0 0
  %4113 = vmatpush1.bf16.msra.mxu0 %v4091
  %4114 = vmatprep.subr.bf16.mxu0 0
  %4115 = vmatpush1.bf16.msra.mxu0 %v4092
  %4116 = vmatprep.subr.bf16.mxu0 0
  %4117 = vmatpush1.bf16.msra.mxu0 %v4093
  %4118 = vmatprep.subr.bf16.mxu0 0
  %4119 = vmatpush1.bf16.msra.mxu0 0
  %4120 = vmatprep.subr.bf16.mxu0 0
  %4121 = vmatpush1.bf16.msra.mxu0 0
  %4122 = vmatprep.subr.bf16.mxu0 0
  %4123 = vmatpush1.bf16.msra.mxu0 0
  %4124 = vmatprep.subr.bf16.mxu0 0
  %4125 = vmatpush1.bf16.msra.mxu0 0
  %4126 = vmatprep.subr.bf16.mxu0 0
  %4127 = vmatpush1.bf16.msra.mxu0 0
  %4128 = vmatprep.subr.bf16.mxu0 0
  %4129 = vmatpush1.bf16.msra.mxu0 0
  %4130 = vmatprep.subr.bf16.mxu0 0
  %4131 = vmatpush1.bf16.msra.mxu0 0
  %4132 = vmatprep.subr.bf16.mxu0 0
  %4133 = vmatpush1.bf16.msra.mxu0 0
  %4134 = vmatprep.mubr.bf16.mxu0 0
  %4135 = vmatmul.mubr.bf16.gmra.mrb[0].mxu0 %v4036
  %v4136 = vpop.f32.mrb[0].mxu0
  %v4137 = vadd.f32 %v4053, %v4136
  %v4138 = vpop.f32.mrb[0].mxu0
  %v4139 = vpop.f32.mrb[0].mxu0
  %v4140 = vadd.f32 %v4053, %v4139
  %v4141 = vpop.f32.mrb[0].mxu0
  %4142 = vdwg.mxu0
  %v4143 = vmax.f32 %v4137, 0.0
  %v4144 = vmax.f32 %v4140, 0.0
  %v4145 = vpack.c.bf16 %v4144, %v4143
  %v4146 = vld [vmem:[%s2 + $0x5c0] sm:$0xf]
  %v4147 = vld [vmem:[%s2 + $0x5c8] sm:$0xf]
  %v4148 = vld [vmem:[%s2 + $0x5d0] sm:$0xf]
  %v4149 = vld [vmem:[%s2 + $0x5d8] sm:$0xf]
  %v4150 = vld [vmem:[%s2 + $0x5e0] sm:$0xf]
  %v4151 = vld [vmem:[%s2 + $0x5e8] sm:$0xf]
  %v4152 = vld [vmem:[%s2 + $0x5f0] sm:$0xf]
  %v4153 = vld [vmem:[%s2 + $0x5f8] sm:$0xf]
  %v4154 = vld [vmem:[%s2 + $0x600] sm:$0xf]
  %v4155 = vld [vmem:[%s2 + $0x608] sm:$0xf]
  %v4156 = vld [vmem:[%s2 + $0x610] sm:$0xf]
  %v4157 = vld [vmem:[%s2 + $0x618] sm:$0xf]
  %v4158 = vld [vmem:[%s2 + $0x620] sm:$0xf]
  %v4159 = vld [vmem:[%s2 + $0x628] sm:$0xf]
  %v4160 = vld [vmem:[%s2 + $0x630] sm:$0xf]
  %v4161 = vld [vmem:[%s2 + $0x638] sm:$0xf]
  %v4162 = vld [vmem:[%s3 + $0x7] ss:$0 sm:$0xff]
  %v4179 = vunpack.c.l.b16 %v4146
  %v4180 = vunpack.c.l.b16 %v4147
  %v4181 = vunpack.c.l.b16 %v4148
  %v4182 = vunpack.c.l.b16 %v4149
  %v4183 = vunpack.c.l.b16 %v4150
  %v4184 = vunpack.c.l.b16 %v4151
  %v4185 = vunpack.c.l.b16 %v4152
  %v4186 = vunpack.c.l.b16 %v4153
  %v4187 = vunpack.c.l.b16 %v4154
  %v4188 = vunpack.c.l.b16 %v4155
  %v4189 = vunpack.c.l.b16 %v4156
  %v4190 = vunpack.c.l.b16 %v4157
  %v4191 = vunpack.c.l.b16 %v4158
  %v4192 = vunpack.c.l.b16 %v4159
  %v4193 = vunpack.c.l.b16 %v4160
  %v4194 = vunpack.c.l.b16 %v4161
  %v4195 = vpack.c.b16 %v4180, %v4179
  %v4196 = vpack.c.b16 %v4182, %v4181
  %v4197 = vpack.c.b16 %v4184, %v4183
  %v4198 = vpack.c.b16 %v4186, %v4185
  %v4199 = vpack.c.b16 %v4188, %v4187
  %v4200 = vpack.c.b16 %v4190, %v4189
  %v4201 = vpack.c.b16 %v4192, %v4191
  %v4202 = vpack.c.b16 %v4194, %v4193
  %4211 = vmatprep.subr.bf16.mxu0 0
  %4212 = vmatpush1.bf16.msra.mxu0 %v4195
  %4213 = vmatprep.subr.bf16.mxu0 0
  %4214 = vmatpush1.bf16.msra.mxu0 %v4196
  %4215 = vmatprep.subr.bf16.mxu0 0
  %4216 = vmatpush1.bf16.msra.mxu0 %v4197
  %4217 = vmatprep.subr.bf16.mxu0 0
  %4218 = vmatpush1.bf16.msra.mxu0 %v4198
  %4219 = vmatprep.subr.bf16.mxu0 0
  %4220 = vmatpush1.bf16.msra.mxu0 %v4199
  %4221 = vmatprep.subr.bf16.mxu0 0
  %4222 = vmatpush1.bf16.msra.mxu0 %v4200
  %4223 = vmatprep.subr.bf16.mxu0 0
  %4224 = vmatpush1.bf16.msra.mxu0 %v4201
  %4225 = vmatprep.subr.bf16.mxu0 0
  %4226 = vmatpush1.bf16.msra.mxu0 %v4202
  %4227 = vmatprep.subr.bf16.mxu0 0
  %4228 = vmatpush1.bf16.msra.mxu0 0
  %4229 = vmatprep.subr.bf16.mxu0 0
  %4230 = vmatpush1.bf16.msra.mxu0 0
  %4231 = vmatprep.subr.bf16.mxu0 0
  %4232 = vmatpush1.bf16.msra.mxu0 0
  %4233 = vmatprep.subr.bf16.mxu0 0
  %4234 = vmatpush1.bf16.msra.mxu0 0
  %4235 = vmatprep.subr.bf16.mxu0 0
  %4236 = vmatpush1.bf16.msra.mxu0 0
  %4237 = vmatprep.subr.bf16.mxu0 0
  %4238 = vmatpush1.bf16.msra.mxu0 0
  %4239 = vmatprep.subr.bf16.mxu0 0
  %4240 = vmatpush1.bf16.msra.mxu0 0
  %4241 = vmatprep.subr.bf16.mxu0 0
  %4242 = vmatpush1.bf16.msra.mxu0 0
  %4243 = vmatprep.mubr.bf16.mxu0 0
  %4244 = vmatmul.mubr.bf16.gmra.mrb[0].mxu0 %v4145
  %v4245 = vpop.f32.mrb[0].mxu0
  %v4246 = vadd.f32 %v4162, %v4245
  %v4247 = vpop.f32.mrb[0].mxu0
  %v4248 = vpop.f32.mrb[0].mxu0
  %v4249 = vadd.f32 %v4162, %v4248
  %v4250 = vpop.f32.mrb[0].mxu0
  %4251 = vdwg.mxu0
  %v4252 = vxor.u32 %v4246, 2147483648
  %v4253 = vxor.u32 %v4249, 2147483648
  %v4254 = vmul.f32 %v4252, 1.442695
  %v4255 = vpow.pop %v4254
  %v4256 = vmul.f32 %v4253, 1.442695
  %v4257 = vpow.pop %v4256
  %v4258 = vadd.f32 %v4255, 1.0
  %v4259 = vadd.f32 %v4257, 1.0
  %v4260 = vrcp.pop %v4258
  %v4261 = vmul.f32 1.0, %v4260
  %v4262 = vrcp.pop %v4259
  %v4263 = vmul.f32 1.0, %v4262
  %4264 = vst [vmem:[%s5] sm:$0xff] %v4261
  %4265 = vst [vmem:[%s5 + $0x8] sm:$0xff] %v4263
  // Predicated region
  $region22: #{_lambda_.1} parent=0 // pred_check
    _
  $region23: #{_lambda_.1} parent=0 // pred_check_branch
    %4267 = sbr.rel (0) target = $region25
  $region24: #{_lambda_.1} parent=0 // pred_region
    _
  $region25: #{_lambda_.1} parent=0 // pred_fallthru
    _
  // Predicated region
  $region26: #{_lambda_.1} parent=0 // pred_check
    _
  $region27: #{_lambda_.1} parent=0 // pred_check_branch
    %4269 = sbr.rel (0) target = $region29
  $region28: #{_lambda_.1} parent=0 // pred_region
    _
  $region29: #{_lambda_.1} parent=0 // pred_fallthru
    _

</llo_original>
